<compile_context>
chip_gen: v6e
topology: v6e:2x2x1
jax: 0.10.0
libtpu: 0.0.40
codegen_flags: <defaults>
</compile_context>

<pallas_src>
import functools

import jax
import jax.numpy as jnp
from jax.experimental import pallas as pl
from jax.experimental.pallas import tpu as pltpu

LEAKY_SLOPE = 0.2
BN_EPS = 0.8
MAX_TILE_B = 64                 # images per grid step (review: B = 32-128)
VMEM_LIMIT = 32 * 1024 * 1024   # safe on every generation (v7x has 64 MiB physical)


def _block3_plan():
    """Static plan for block 3 (conv 128->256 on a 4x4 input -> 2x2 output, k3 s2 p1).

    For each of the 4 output positions (row-major over the 2x2 output) return the list of
    (packed_block_index t, input_spatial_index s in the 4x4 grid, ky, kx) of the valid
    (non-padding) taps.  Only 25 of the 64 (s, output) pairs are non-zero.
    """
    plan, t = [], 0
    for i in range(2):
        for j in range(2):
            taps = []
            for ky in range(3):
                for kx in range(3):
                    r, c = 2 * i + ky - 1, 2 * j + kx - 1
                    if 0 <= r < 4 and 0 <= c < 4:
                        taps.append((t, r * 4 + c, ky, kx))
                        t += 1
            plan.append(taps)
    return plan, t


_BLOCK3_PLAN, _B3_NNZ = _block3_plan()      # _B3_NNZ == 25


# ----------------------------- Pallas kernels ------------------------------

def _block1_kernel(p_ref, w_ref, b_ref, o_ref):
    """Block 1: Conv2d(Cin->64, k3 s2 p1) as an im2col GEMM + bias + LeakyReLU (no BN)."""
    y = jnp.dot(p_ref[...], w_ref[...], preferred_element_type=jnp.float32)
    y = y + b_ref[...]
    o_ref[...] = jnp.where(y > 0, y, LEAKY_SLOPE * y).astype(o_ref.dtype)


def _tail_kernel(p2_ref, w2_ref, b2_ref, s2_ref,
                 w3_ref, b3_ref, s3_ref,
                 w4_ref, b4_ref, s4_ref,
                 wh_ref, bh_ref, o_ref, *, tile_b):
    """Blocks 2-4 + Linear + Sigmoid for one tile of `tile_b` images.

    p2_ref rows are tap-major within the tile: row = s * tile_b + b, where s is the
    spatial position (4x4, row-major) of block-2's output and b the image index.
    BN scale is pre-folded into each block's weights/bias, so the epilogue is only
    bias-add, LeakyReLU(0.2) and the additive BN shift (all in f32).
    TODO(synk): Dropout2d(0.25) is the identity in eval mode; training-mode per-channel
    dropout is not implemented here.
    """
    B = tile_b

    # ---- block 2: Conv(64->128), 8x8 -> 4x4, as one (16B,576)@(576,128) GEMM ----
    y2 = jnp.dot(p2_ref[...], w2_ref[...], preferred_element_type=jnp.float32)
    y2 = y2 + b2_ref[...]
    a2 = jnp.where(y2 > 0, y2, LEAKY_SLOPE * y2) + s2_ref[...]          # (16B, 128) f32
    a2 = a2.astype(jnp.bfloat16)                                        # single hoisted cast

    # ---- blocks 3 + 4: sparse pre-scattered W3 (25 non-zero tap blocks), then the 2x2
    #      block-3 output feeds block 4 as 4 accumulated (B,256)@(256,512) GEMMs ----
    y4 = None
    for o, taps in enumerate(_BLOCK3_PLAN):
        y3 = None
        for (t, s, _, _) in taps:
            d = jnp.dot(a2[s * B:(s + 1) * B, :],
                        w3_ref[t * 128:(t + 1) * 128, :],
                        preferred_element_type=jnp.float32)             # (B, 256)
            y3 = d if y3 is None else y3 + d
        y3 = y3 + b3_ref[...]
        a3 = jnp.where(y3 > 0, y3, LEAKY_SLOPE * y3) + s3_ref[...]      # (B, 256) f32
        d4 = jnp.dot(a3.astype(jnp.bfloat16),
                     w4_ref[o * 256:(o + 1) * 256, :],
                     preferred_element_type=jnp.float32)                # (B, 512)
        y4 = d4 if y4 is None else y4 + d4
    y4 = y4 + b4_ref[...]
    a4 = jnp.where(y4 > 0, y4, LEAKY_SLOPE * y4) + s4_ref[...]          # (B, 512) f32

    # ---- head: Linear(512, 1) + stable sigmoid (f32 elementwise + lane reduction) ----
    z = jnp.sum(a4 * wh_ref[...], axis=1, keepdims=True) + bh_ref[...]  # (B, 1)
    m = jnp.maximum(z, 0.0)
    num = jnp.exp(z - m)
    p = num / (num + jnp.exp(-m))                                       # robust sigmoid
    # Lane-broadcast -> unmasked lane-dense store; the wrapper slices column 0.
    o_ref[...] = jnp.broadcast_to(p, (B, 128))


def _resident(shape):
    """Full-array block with constant index_map -> stays resident in VMEM across the grid."""
    return pl.BlockSpec(shape, lambda i: (0,) * len(shape))


# ------------------------------- JAX glue -----------------------------------

def _im2col_s2_p1(x_nhwc):
    """3x3 / stride-2 / pad-1 patches, tap order (ky, kx, cin).  -> (N, Ho*Wo, 9*C)."""
    n, h, w, c = x_nhwc.shape
    ho, wo = h // 2, w // 2
    xp = jnp.pad(x_nhwc, ((0, 0), (1, 1), (1, 1), (0, 0)))
    taps = [xp[:, ky:ky + 2 * ho:2, kx:kx + 2 * wo:2, :]
            for ky in range(3) for kx in range(3)]
    return jnp.stack(taps, axis=3).reshape(n, ho * wo, 9 * c)


def pack_params(params):
    """Fold eval-mode BN into the conv weights and pre-scatter blocks 3/4 for the kernels."""
    (w1, b1, _, _) = params["blocks"][0]
    (w2, b2, sc2, sh2) = params["blocks"][1]
    (w3, b3, sc3, sh3) = params["blocks"][2]
    (w4, b4, sc4, sh4) = params["blocks"][3]
    w_lin, b_lin = params["linear"]

    assert w1.shape[0] == 64 and w2.shape[0] == 128
    assert w3.shape[0] == 256 and w4.shape[0] == 512
    assert w_lin.shape == (512, 1)  # img_size == 16 -> 1x1 final spatial
    # Folding BN scale through LeakyReLU requires a strictly positive scale.
    for (_, _, scale, _) in params["blocks"]:
        assert bool(jnp.all(scale > 0)), "BN scale must be > 0 to fold through LeakyReLU"

    def taps(w):  # (Cout, Cin, 3, 3) -> (ky, kx, Cin, Cout)
        return jnp.transpose(w, (2, 3, 1, 0))

    cin1 = w1.shape[1]
    w1m = taps(w1).reshape(9 * cin1, 64)                                   # (9*Cin, 64)

    # Block 2: fold BN scale (LeakyReLU is positively homogeneous, scale > 0).
    w2m = taps(w2).reshape(9 * 64, 128) * sc2[None, :]                     # (576, 128)

    # Block 3: pack only the 25 non-zero (128,256) tap blocks of the scattered
    # flat-4x4x128 -> flat-2x2x256 weight, in _BLOCK3_PLAN order.
    w3t = taps(w3) * sc3[None, None, None, :]                              # (3,3,128,256)
    w3_blocks = []
    for taps_o in _BLOCK3_PLAN:
        for (_, _, ky, kx) in taps_o:
            w3_blocks.append(w3t[ky, kx])
    w3m = jnp.concatenate(w3_blocks, axis=0)                               # (25*128, 256)

    # Block 4: 2x2 input, single output pixel -> only taps (ky,kx) in {1,2}^2 are valid;
    # input position (r,c) uses tap (r+1, c+1).
    w4t = taps(w4) * sc4[None, None, None, :]                              # (3,3,256,512)
    w4m = jnp.concatenate([w4t[r + 1, c + 1] for r in range(2) for c in range(2)],
                          axis=0)                                          # (1024, 512)

    return {
        "W1": w1m.astype(jnp.bfloat16), "b1": b1.reshape(1, 64),
        "W2": w2m.astype(jnp.bfloat16),
        "b2": (b2 * sc2).reshape(1, 128), "sh2": sh2.reshape(1, 128),
        "W3": w3m.astype(jnp.bfloat16),
        "b3": (b3 * sc3).reshape(1, 256), "sh3": sh3.reshape(1, 256),
        "W4": w4m.astype(jnp.bfloat16),
        "b4": (b4 * sc4).reshape(1, 512), "sh4": sh4.reshape(1, 512),
        "wh": w_lin.reshape(1, 512).astype(jnp.float32), "bh": b_lin.reshape(1, 1),
    }


def dc_discriminator_forward(img_nchw, packed):
    """img_nchw: (N, C, 16, 16) float32 -> validity (N, 1)."""
    n, cin = img_nchw.shape[0], img_nchw.shape[1]
    assert img_nchw.shape[2] == 16 and img_nchw.shape[3] == 16, "kernel packed for img_size=16"

    tile_b = min(MAX_TILE_B, n)                     # images per grid step
    n_tiles = -(-n // tile_b)
    n_pad = n_tiles * tile_b

    x = jnp.transpose(img_nchw, (0, 2, 3, 1))       # NCHW -> NHWC
    if n_pad != n:
        x = jnp.pad(x, ((0, n_pad - n), (0, 0), (0, 0), (0, 0)))

    compiler_params = pltpu.CompilerParams(
        dimension_semantics=("parallel",), vmem_limit_bytes=VMEM_LIMIT)

    # ---- call 1: block 1 (im2col GEMM + bias + LeakyReLU), tile_b images per step ----
    p1 = _im2col_s2_p1(x).reshape(n_pad * 64, 9 * cin).astype(jnp.bfloat16)
    a1 = pl.pallas_call(
        _block1_kernel,
        out_shape=jax.ShapeDtypeStruct((n_pad * 64, 64), jnp.bfloat16),
        grid=(n_tiles,),
        in_specs=[
            pl.BlockSpec((tile_b * 64, 9 * cin), lambda i: (i, 0)),
            _resident((9 * cin, 64)),
            _resident((1, 64)),
        ],
        out_specs=pl.BlockSpec((tile_b * 64, 64), lambda i: (i, 0)),
        compiler_params=compiler_params,
    )(p1, packed["W1"], packed["b1"])

    # ---- tap-major im2col for block 2 (XLA glue): rows ordered (tile, s, b) ----
    p2 = _im2col_s2_p1(a1.reshape(n_pad, 8, 8, 64))                 # (n_pad, 16, 576) bf16
    p2 = (p2.reshape(n_tiles, tile_b, 16, 576)
            .transpose(0, 2, 1, 3)
            .reshape(n_tiles * 16 * tile_b, 576))

    # ---- call 2: blocks 2-4 + Linear + Sigmoid, one fused kernel, weights resident ----
    out = pl.pallas_call(
        functools.partial(_tail_kernel, tile_b=tile_b),
        out_shape=jax.ShapeDtypeStruct((n_pad, 128), jnp.float32),
        grid=(n_tiles,),
        in_specs=[
            pl.BlockSpec((16 * tile_b, 576), lambda i: (i, 0)),
            _resident((576, 128)), _resident((1, 128)), _resident((1, 128)),
            _resident((_B3_NNZ * 128, 256)), _resident((1, 256)), _resident((1, 256)),
            _resident((1024, 512)), _resident((1, 512)), _resident((1, 512)),
            _resident((1, 512)), _resident((1, 1)),
        ],
        out_specs=pl.BlockSpec((tile_b, 128), lambda i: (i, 0)),
        compiler_params=compiler_params,
    )(p2,
      packed["W2"], packed["b2"], packed["sh2"],
      packed["W3"], packed["b3"], packed["sh3"],
      packed["W4"], packed["b4"], packed["sh4"],
      packed["wh"], packed["bh"])
    return out[:n, 0:1]


# --------------------------- deterministic params ---------------------------

def init_params(key, channels=3, img_size=16, packing=1):
    plan = [
        (packing * channels, 64, False),
        (64, 128, True),
        (128, 256, True),
        (256, 512, True),
    ]
    blocks = []
    for idx, (cin, cout, has_bn) in enumerate(plan):
        kw, kb = jax.random.split(jax.random.fold_in(key, idx))
        w = 0.05 * jax.random.normal(kw, (cout, cin, 3, 3), dtype=jnp.float32)
        b = 0.01 * jax.random.normal(kb, (cout,), dtype=jnp.float32)
        if has_bn:
            # Fresh BatchNorm2d(eps=0.8) in eval mode: gamma=1, beta=0, mean=0, var=1.
            scale = jnp.ones((cout,), jnp.float32) / jnp.sqrt(1.0 + BN_EPS)
            shift = jnp.zeros((cout,), jnp.float32)
        else:
            scale = jnp.ones((cout,), jnp.float32)
            shift = jnp.zeros((cout,), jnp.float32)
        blocks.append((w, b, scale, shift))

    ds = img_size // (2 ** 4)
    feat_dim = 512 * ds * ds
    kw, kb = jax.random.split(jax.random.fold_in(key, 100))
    w_lin = 0.05 * jax.random.normal(kw, (feat_dim, 1), dtype=jnp.float32)
    b_lin = 0.01 * jax.random.normal(kb, (1,), dtype=jnp.float32)
    return {"blocks": blocks, "linear": (w_lin, b_lin)}


def _reference_forward(img_nchw, params):
    """Pure-JAX f32 reference of the PyTorch module (eval mode)."""
    x = jnp.transpose(img_nchw, (0, 2, 3, 1)).astype(jnp.float32)
    for (w, b, scale, shift) in params["blocks"]:
        n, h, wd, cin = x.shape
        cout = w.shape[0]
        p = _im2col_s2_p1(x).reshape(n * (h // 2) * (wd // 2), 9 * cin)
        wm = jnp.transpose(w, (2, 3, 1, 0)).reshape(9 * cin, cout)
        y = p @ wm + b
        y = jnp.where(y > 0, y, LEAKY_SLOPE * y)
        y = y * scale + shift
        x = y.reshape(n, h // 2, wd // 2, cout)
    feat = jnp.transpose(x, (0, 3, 1, 2)).reshape(x.shape[0], -1)
    w_lin, b_lin = params["linear"]
    z = feat @ w_lin + b_lin
    return 1.0 / (1.0 + jnp.exp(-z))


# ----------------------------------- main -----------------------------------

if __name__ == "__main__":
    key = jax.random.PRNGKey(0)
    k_img, k_par = jax.random.split(key)

    batch, channels, img_size = 2, 3, 16  # img_size=16 -> ds_size = 1
    img = jax.random.normal(k_img, (batch, channels, img_size, img_size), dtype=jnp.float32)
    params = init_params(k_par, channels=channels, img_size=img_size)
    packed = pack_params(params)

    forward = jax.jit(dc_discriminator_forward)
    validity = jax.block_until_ready(forward(img, packed))

    assert validity.shape == (batch, 1), validity.shape
    assert bool(jnp.all((validity >= 0.0) & (validity <= 1.0)))
    ref = _reference_forward(img, params)
    assert bool(jnp.allclose(validity, ref, atol=3e-2)), (validity, ref)
    print("KERNEL_OK")
</pallas_src>

<mosaic_0001>
module attributes {stable_mosaic.version = 11 : i64} {
  func.func @_block1_kernel(%arg0: i32, %arg1: memref<128x27xbf16, #tpu.memory_space<vmem>>, %arg2: memref<27x64xbf16, #tpu.memory_space<vmem>>, %arg3: memref<1x64xf32, #tpu.memory_space<vmem>>, %arg4: memref<128x64xbf16, #tpu.memory_space<vmem>>) attributes {dimension_semantics = [#tpu.dimension_semantics<parallel>], iteration_bounds = array<i64: 1>, scalar_prefetch = 0 : i64, scratch_operands = 0 : i64, tpu.core_type = #tpu.core_type<tc>, window_params = [{transform_indices = @transform_0, window_bounds = array<i64: 128, 27>}, {pipeline_mode = #tpu.pipeline_mode<synchronous>, transform_indices = @transform_1, window_bounds = array<i64: 27, 64>}, {pipeline_mode = #tpu.pipeline_mode<synchronous>, transform_indices = @transform_2, window_bounds = array<i64: 1, 64>}, {transform_indices = @transform_3, window_bounds = array<i64: 128, 64>}]} {
    %c0 = arith.constant 0 : index
    %c0_0 = arith.constant 0 : index
    %0 = vector.load %arg1[%c0, %c0_0] : memref<128x27xbf16, #tpu.memory_space<vmem>>, vector<128x27xbf16>
    %c0_1 = arith.constant 0 : index
    %c0_2 = arith.constant 0 : index
    %1 = vector.load %arg2[%c0_1, %c0_2] : memref<27x64xbf16, #tpu.memory_space<vmem>>, vector<27x64xbf16>
    %cst = arith.constant dense<0.000000e+00> : vector<128x64xf32>
    %2 = tpu.matmul %0, %1, %cst {dimension_numbers = #tpu.dot_dimension_numbers<[1], [0], [0], [1], [0, 0, 1, 1], [], []>} : vector<128x27xbf16>, vector<27x64xbf16>, vector<128x64xf32> -> vector<128x64xf32>
    %c0_3 = arith.constant 0 : index
    %c0_4 = arith.constant 0 : index
    %3 = vector.load %arg3[%c0_3, %c0_4] : memref<1x64xf32, #tpu.memory_space<vmem>>, vector<1x64xf32>
    %4 = vector.broadcast %3 : vector<1x64xf32> to vector<128x64xf32>
    %5 = arith.addf %2, %4 : vector<128x64xf32>
    %cst_5 = arith.constant 0.000000e+00 : f32
    %6 = vector.broadcast %cst_5 : f32 to vector<128x64xf32>
    %7 = arith.cmpf ogt, %5, %6 : vector<128x64xf32>
    %cst_6 = arith.constant 2.000000e-01 : f32
    %8 = vector.broadcast %cst_6 : f32 to vector<128x64xf32>
    %9 = arith.mulf %8, %5 : vector<128x64xf32>
    %10 = arith.select %7, %5, %9 : vector<128x64xi1>, vector<128x64xf32>
    %11 = arith.truncf %10 : vector<128x64xf32> to vector<128x64xbf16>
    %c0_7 = arith.constant 0 : index
    %c0_8 = arith.constant 0 : index
    %12 = vector.load %arg4[%c0_7, %c0_8] : memref<128x64xbf16, #tpu.memory_space<vmem>>, vector<128x64xbf16>
    tpu.vector_store %arg4[%c0_7, %c0_8], %11 {strides = array<i32>} : memref<128x64xbf16, #tpu.memory_space<vmem>>, vector<128x64xbf16>,
    return
  }
  func.func @transform_0(%arg0: i32) -> (i32, i32) {
    %c0_i32 = arith.constant 0 : i32
    %c0_i32_0 = arith.constant 0 : i32
    return %arg0, %c0_i32 : i32, i32
  }
  func.func @transform_1(%arg0: i32) -> (i32, i32) {
    %c0_i32 = arith.constant 0 : i32
    %c0_i32_0 = arith.constant 0 : i32
    %c0_i32_1 = arith.constant 0 : i32
    return %c0_i32, %c0_i32_0 : i32, i32
  }
  func.func @transform_2(%arg0: i32) -> (i32, i32) {
    %c0_i32 = arith.constant 0 : i32
    %c0_i32_0 = arith.constant 0 : i32
    %c0_i32_1 = arith.constant 0 : i32
    return %c0_i32, %c0_i32_0 : i32, i32
  }
  func.func @transform_3(%arg0: i32) -> (i32, i32) {
    %c0_i32 = arith.constant 0 : i32
    %c0_i32_0 = arith.constant 0 : i32
    return %arg0, %c0_i32 : i32, i32
  }
}

module attributes {stable_mosaic.version = 11 : i64} {
  func.func @_tail_kernel(%arg0: i32, %arg1: memref<32x576xbf16, #tpu.memory_space<vmem>>, %arg2: memref<576x128xbf16, #tpu.memory_space<vmem>>, %arg3: memref<1x128xf32, #tpu.memory_space<vmem>>, %arg4: memref<1x128xf32, #tpu.memory_space<vmem>>, %arg5: memref<3200x256xbf16, #tpu.memory_space<vmem>>, %arg6: memref<1x256xf32, #tpu.memory_space<vmem>>, %arg7: memref<1x256xf32, #tpu.memory_space<vmem>>, %arg8: memref<1024x512xbf16, #tpu.memory_space<vmem>>, %arg9: memref<1x512xf32, #tpu.memory_space<vmem>>, %arg10: memref<1x512xf32, #tpu.memory_space<vmem>>, %arg11: memref<1x512xf32, #tpu.memory_space<vmem>>, %arg12: memref<1x1xf32, #tpu.memory_space<vmem>>, %arg13: memref<2x128xf32, #tpu.memory_space<vmem>>) attributes {dimension_semantics = [#tpu.dimension_semantics<parallel>], iteration_bounds = array<i64: 1>, scalar_prefetch = 0 : i64, scratch_operands = 0 : i64, tpu.core_type = #tpu.core_type<tc>, window_params = [{transform_indices = @transform_0, window_bounds = array<i64: 32, 576>}, {pipeline_mode = #tpu.pipeline_mode<synchronous>, transform_indices = @transform_1, window_bounds = array<i64: 576, 128>}, {pipeline_mode = #tpu.pipeline_mode<synchronous>, transform_indices = @transform_2, window_bounds = array<i64: 1, 128>}, {pipeline_mode = #tpu.pipeline_mode<synchronous>, transform_indices = @transform_3, window_bounds = array<i64: 1, 128>}, {pipeline_mode = #tpu.pipeline_mode<synchronous>, transform_indices = @transform_4, window_bounds = array<i64: 3200, 256>}, {pipeline_mode = #tpu.pipeline_mode<synchronous>, transform_indices = @transform_5, window_bounds = array<i64: 1, 256>}, {pipeline_mode = #tpu.pipeline_mode<synchronous>, transform_indices = @transform_6, window_bounds = array<i64: 1, 256>}, {pipeline_mode = #tpu.pipeline_mode<synchronous>, transform_indices = @transform_7, window_bounds = array<i64: 1024, 512>}, {pipeline_mode = #tpu.pipeline_mode<synchronous>, transform_indices = @transform_8, window_bounds = array<i64: 1, 512>}, {pipeline_mode = #tpu.pipeline_mode<synchronous>, transform_indices = @transform_9, window_bounds = array<i64: 1, 512>}, {pipeline_mode = #tpu.pipeline_mode<synchronous>, transform_indices = @transform_10, window_bounds = array<i64: 1, 512>}, {pipeline_mode = #tpu.pipeline_mode<synchronous>, transform_indices = @transform_11, window_bounds = array<i64: 1, 1>}, {transform_indices = @transform_12, window_bounds = array<i64: 2, 128>}]} {
    %c0 = arith.constant 0 : index
    %c0_0 = arith.constant 0 : index
    %0 = vector.load %arg1[%c0, %c0_0] : memref<32x576xbf16, #tpu.memory_space<vmem>>, vector<32x576xbf16>
    %c0_1 = arith.constant 0 : index
    %c0_2 = arith.constant 0 : index
    %1 = vector.load %arg2[%c0_1, %c0_2] : memref<576x128xbf16, #tpu.memory_space<vmem>>, vector<576x128xbf16>
    %cst = arith.constant dense<0.000000e+00> : vector<32x128xf32>
    %2 = tpu.matmul %0, %1, %cst {dimension_numbers = #tpu.dot_dimension_numbers<[1], [0], [0], [1], [0, 0, 1, 1], [], []>} : vector<32x576xbf16>, vector<576x128xbf16>, vector<32x128xf32> -> vector<32x128xf32>
    %c0_3 = arith.constant 0 : index
    %c0_4 = arith.constant 0 : index
    %3 = vector.load %arg3[%c0_3, %c0_4] : memref<1x128xf32, #tpu.memory_space<vmem>>, vector<1x128xf32>
    %4 = vector.broadcast %3 : vector<1x128xf32> to vector<32x128xf32>
    %5 = arith.addf %2, %4 : vector<32x128xf32>
    %cst_5 = arith.constant 0.000000e+00 : f32
    %6 = vector.broadcast %cst_5 : f32 to vector<32x128xf32>
    %7 = arith.cmpf ogt, %5, %6 : vector<32x128xf32>
    %cst_6 = arith.constant 2.000000e-01 : f32
    %8 = vector.broadcast %cst_6 : f32 to vector<32x128xf32>
    %9 = arith.mulf %8, %5 : vector<32x128xf32>
    %10 = arith.select %7, %5, %9 : vector<32x128xi1>, vector<32x128xf32>
    %c0_7 = arith.constant 0 : index
    %c0_8 = arith.constant 0 : index
    %11 = vector.load %arg4[%c0_7, %c0_8] : memref<1x128xf32, #tpu.memory_space<vmem>>, vector<1x128xf32>
    %12 = vector.broadcast %11 : vector<1x128xf32> to vector<32x128xf32>
    %13 = arith.addf %10, %12 : vector<32x128xf32>
    %14 = arith.truncf %13 : vector<32x128xf32> to vector<32x128xbf16>
    %15 = vector.extract_strided_slice %14 {offsets = [0, 0], sizes = [2, 128], strides = [1, 1]} : vector<32x128xbf16> to vector<2x128xbf16>
    %c0_9 = arith.constant 0 : index
    %c0_10 = arith.constant 0 : index
    %16 = vector.load %arg5[%c0_9, %c0_10] : memref<3200x256xbf16, #tpu.memory_space<vmem>>, vector<128x256xbf16>
    %cst_11 = arith.constant dense<0.000000e+00> : vector<2x256xf32>
    %17 = tpu.matmul %15, %16, %cst_11 {dimension_numbers = #tpu.dot_dimension_numbers<[1], [0], [0], [1], [0, 0, 1, 1], [], []>} : vector<2x128xbf16>, vector<128x256xbf16>, vector<2x256xf32> -> vector<2x256xf32>
    %18 = vector.extract_strided_slice %14 {offsets = [2, 0], sizes = [2, 128], strides = [1, 1]} : vector<32x128xbf16> to vector<2x128xbf16>
    %c128 = arith.constant 128 : index
    %c0_12 = arith.constant 0 : index
    %19 = vector.load %arg5[%c128, %c0_12] : memref<3200x256xbf16, #tpu.memory_space<vmem>>, vector<128x256xbf16>
    %cst_13 = arith.constant dense<0.000000e+00> : vector<2x256xf32>
    %20 = tpu.matmul %18, %19, %cst_13 {dimension_numbers = #tpu.dot_dimension_numbers<[1], [0], [0], [1], [0, 0, 1, 1], [], []>} : vector<2x128xbf16>, vector<128x256xbf16>, vector<2x256xf32> -> vector<2x256xf32>
    %21 = arith.addf %17, %20 : vector<2x256xf32>
    %22 = vector.extract_strided_slice %14 {offsets = [8, 0], sizes = [2, 128], strides = [1, 1]} : vector<32x128xbf16> to vector<2x128xbf16>
    %c256 = arith.constant 256 : index
    %c0_14 = arith.constant 0 : index
    %23 = vector.load %arg5[%c256, %c0_14] : memref<3200x256xbf16, #tpu.memory_space<vmem>>, vector<128x256xbf16>
    %cst_15 = arith.constant dense<0.000000e+00> : vector<2x256xf32>
    %24 = tpu.matmul %22, %23, %cst_15 {dimension_numbers = #tpu.dot_dimension_numbers<[1], [0], [0], [1], [0, 0, 1, 1], [], []>} : vector<2x128xbf16>, vector<128x256xbf16>, vector<2x256xf32> -> vector<2x256xf32>
    %25 = arith.addf %21, %24 : vector<2x256xf32>
    %26 = vector.extract_strided_slice %14 {offsets = [10, 0], sizes = [2, 128], strides = [1, 1]} : vector<32x128xbf16> to vector<2x128xbf16>
    %c384 = arith.constant 384 : index
    %c0_16 = arith.constant 0 : index
    %27 = vector.load %arg5[%c384, %c0_16] : memref<3200x256xbf16, #tpu.memory_space<vmem>>, vector<128x256xbf16>
    %cst_17 = arith.constant dense<0.000000e+00> : vector<2x256xf32>
    %28 = tpu.matmul %26, %27, %cst_17 {dimension_numbers = #tpu.dot_dimension_numbers<[1], [0], [0], [1], [0, 0, 1, 1], [], []>} : vector<2x128xbf16>, vector<128x256xbf16>, vector<2x256xf32> -> vector<2x256xf32>
    %29 = arith.addf %25, %28 : vector<2x256xf32>
    %c0_18 = arith.constant 0 : index
    %c0_19 = arith.constant 0 : index
    %30 = vector.load %arg6[%c0_18, %c0_19] : memref<1x256xf32, #tpu.memory_space<vmem>>, vector<1x256xf32>
    %31 = vector.broadcast %30 : vector<1x256xf32> to vector<2x256xf32>
    %32 = arith.addf %29, %31 : vector<2x256xf32>
    %cst_20 = arith.constant 0.000000e+00 : f32
    %33 = vector.broadcast %cst_20 : f32 to vector<2x256xf32>
    %34 = arith.cmpf ogt, %32, %33 : vector<2x256xf32>
    %cst_21 = arith.constant 2.000000e-01 : f32
    %35 = vector.broadcast %cst_21 : f32 to vector<2x256xf32>
    %36 = arith.mulf %35, %32 : vector<2x256xf32>
    %37 = arith.select %34, %32, %36 : vector<2x256xi1>, vector<2x256xf32>
    %c0_22 = arith.constant 0 : index
    %c0_23 = arith.constant 0 : index
    %38 = vector.load %arg7[%c0_22, %c0_23] : memref<1x256xf32, #tpu.memory_space<vmem>>, vector<1x256xf32>
    %39 = vector.broadcast %38 : vector<1x256xf32> to vector<2x256xf32>
    %40 = arith.addf %37, %39 : vector<2x256xf32>
    %41 = arith.truncf %40 : vector<2x256xf32> to vector<2x256xbf16>
    %c0_24 = arith.constant 0 : index
    %c0_25 = arith.constant 0 : index
    %42 = vector.load %arg8[%c0_24, %c0_25] : memref<1024x512xbf16, #tpu.memory_space<vmem>>, vector<256x512xbf16>
    %cst_26 = arith.constant dense<0.000000e+00> : vector<2x512xf32>
    %43 = tpu.matmul %41, %42, %cst_26 {dimension_numbers = #tpu.dot_dimension_numbers<[1], [0], [0], [1], [0, 0, 1, 1], [], []>} : vector<2x256xbf16>, vector<256x512xbf16>, vector<2x512xf32> -> vector<2x512xf32>
    %44 = vector.extract_strided_slice %14 {offsets = [2, 0], sizes = [2, 128], strides = [1, 1]} : vector<32x128xbf16> to vector<2x128xbf16>
    %c512 = arith.constant 512 : index
    %c0_27 = arith.constant 0 : index
    %45 = vector.load %arg5[%c512, %c0_27] : memref<3200x256xbf16, #tpu.memory_space<vmem>>, vector<128x256xbf16>
    %cst_28 = arith.constant dense<0.000000e+00> : vector<2x256xf32>
    %46 = tpu.matmul %44, %45, %cst_28 {dimension_numbers = #tpu.dot_dimension_numbers<[1], [0], [0], [1], [0, 0, 1, 1], [], []>} : vector<2x128xbf16>, vector<128x256xbf16>, vector<2x256xf32> -> vector<2x256xf32>
    %47 = vector.extract_strided_slice %14 {offsets = [4, 0], sizes = [2, 128], strides = [1, 1]} : vector<32x128xbf16> to vector<2x128xbf16>
    %c640 = arith.constant 640 : index
    %c0_29 = arith.constant 0 : index
    %48 = vector.load %arg5[%c640, %c0_29] : memref<3200x256xbf16, #tpu.memory_space<vmem>>, vector<128x256xbf16>
    %cst_30 = arith.constant dense<0.000000e+00> : vector<2x256xf32>
    %49 = tpu.matmul %47, %48, %cst_30 {dimension_numbers = #tpu.dot_dimension_numbers<[1], [0], [0], [1], [0, 0, 1, 1], [], []>} : vector<2x128xbf16>, vector<128x256xbf16>, vector<2x256xf32> -> vector<2x256xf32>
    %50 = arith.addf %46, %49 : vector<2x256xf32>
    %51 = vector.extract_strided_slice %14 {offsets = [6, 0], sizes = [2, 128], strides = [1, 1]} : vector<32x128xbf16> to vector<2x128xbf16>
    %c768 = arith.constant 768 : index
    %c0_31 = arith.constant 0 : index
    %52 = vector.load %arg5[%c768, %c0_31] : memref<3200x256xbf16, #tpu.memory_space<vmem>>, vector<128x256xbf16>
    %cst_32 = arith.constant dense<0.000000e+00> : vector<2x256xf32>
    %53 = tpu.matmul %51, %52, %cst_32 {dimension_numbers = #tpu.dot_dimension_numbers<[1], [0], [0], [1], [0, 0, 1, 1], [], []>} : vector<2x128xbf16>, vector<128x256xbf16>, vector<2x256xf32> -> vector<2x256xf32>
    %54 = arith.addf %50, %53 : vector<2x256xf32>
    %55 = vector.extract_strided_slice %14 {offsets = [10, 0], sizes = [2, 128], strides = [1, 1]} : vector<32x128xbf16> to vector<2x128xbf16>
    %c896 = arith.constant 896 : index
    %c0_33 = arith.constant 0 : index
    %56 = vector.load %arg5[%c896, %c0_33] : memref<3200x256xbf16, #tpu.memory_space<vmem>>, vector<128x256xbf16>
    %cst_34 = arith.constant dense<0.000000e+00> : vector<2x256xf32>
    %57 = tpu.matmul %55, %56, %cst_34 {dimension_numbers = #tpu.dot_dimension_numbers<[1], [0], [0], [1], [0, 0, 1, 1], [], []>} : vector<2x128xbf16>, vector<128x256xbf16>, vector<2x256xf32> -> vector<2x256xf32>
    %58 = arith.addf %54, %57 : vector<2x256xf32>
    %59 = vector.extract_strided_slice %14 {offsets = [12, 0], sizes = [2, 128], strides = [1, 1]} : vector<32x128xbf16> to vector<2x128xbf16>
    %c1024 = arith.constant 1024 : index
    %c0_35 = arith.constant 0 : index
    %60 = vector.load %arg5[%c1024, %c0_35] : memref<3200x256xbf16, #tpu.memory_space<vmem>>, vector<128x256xbf16>
    %cst_36 = arith.constant dense<0.000000e+00> : vector<2x256xf32>
    %61 = tpu.matmul %59, %60, %cst_36 {dimension_numbers = #tpu.dot_dimension_numbers<[1], [0], [0], [1], [0, 0, 1, 1], [], []>} : vector<2x128xbf16>, vector<128x256xbf16>, vector<2x256xf32> -> vector<2x256xf32>
    %62 = arith.addf %58, %61 : vector<2x256xf32>
    %63 = vector.extract_strided_slice %14 {offsets = [14, 0], sizes = [2, 128], strides = [1, 1]} : vector<32x128xbf16> to vector<2x128xbf16>
    %c1152 = arith.constant 1152 : index
    %c0_37 = arith.constant 0 : index
    %64 = vector.load %arg5[%c1152, %c0_37] : memref<3200x256xbf16, #tpu.memory_space<vmem>>, vector<128x256xbf16>
    %cst_38 = arith.constant dense<0.000000e+00> : vector<2x256xf32>
    %65 = tpu.matmul %63, %64, %cst_38 {dimension_numbers = #tpu.dot_dimension_numbers<[1], [0], [0], [1], [0, 0, 1, 1], [], []>} : vector<2x128xbf16>, vector<128x256xbf16>, vector<2x256xf32> -> vector<2x256xf32>
    %66 = arith.addf %62, %65 : vector<2x256xf32>
    %c0_39 = arith.constant 0 : index
    %c0_40 = arith.constant 0 : index
    %67 = vector.load %arg6[%c0_39, %c0_40] : memref<1x256xf32, #tpu.memory_space<vmem>>, vector<1x256xf32>
    %68 = vector.broadcast %67 : vector<1x256xf32> to vector<2x256xf32>
    %69 = arith.addf %66, %68 : vector<2x256xf32>
    %cst_41 = arith.constant 0.000000e+00 : f32
    %70 = vector.broadcast %cst_41 : f32 to vector<2x256xf32>
    %71 = arith.cmpf ogt, %69, %70 : vector<2x256xf32>
    %cst_42 = arith.constant 2.000000e-01 : f32
    %72 = vector.broadcast %cst_42 : f32 to vector<2x256xf32>
    %73 = arith.mulf %72, %69 : vector<2x256xf32>
    %74 = arith.select %71, %69, %73 : vector<2x256xi1>, vector<2x256xf32>
    %c0_43 = arith.constant 0 : index
    %c0_44 = arith.constant 0 : index
    %75 = vector.load %arg7[%c0_43, %c0_44] : memref<1x256xf32, #tpu.memory_space<vmem>>, vector<1x256xf32>
    %76 = vector.broadcast %75 : vector<1x256xf32> to vector<2x256xf32>
    %77 = arith.addf %74, %76 : vector<2x256xf32>
    %78 = arith.truncf %77 : vector<2x256xf32> to vector<2x256xbf16>
    %c256_45 = arith.constant 256 : index
    %c0_46 = arith.constant 0 : index
    %79 = vector.load %arg8[%c256_45, %c0_46] : memref<1024x512xbf16, #tpu.memory_space<vmem>>, vector<256x512xbf16>
    %cst_47 = arith.constant dense<0.000000e+00> : vector<2x512xf32>
    %80 = tpu.matmul %78, %79, %cst_47 {dimension_numbers = #tpu.dot_dimension_numbers<[1], [0], [0], [1], [0, 0, 1, 1], [], []>} : vector<2x256xbf16>, vector<256x512xbf16>, vector<2x512xf32> -> vector<2x512xf32>
    %81 = arith.addf %43, %80 : vector<2x512xf32>
    %82 = vector.extract_strided_slice %14 {offsets = [8, 0], sizes = [2, 128], strides = [1, 1]} : vector<32x128xbf16> to vector<2x128xbf16>
    %c1280 = arith.constant 1280 : index
    %c0_48 = arith.constant 0 : index
    %83 = vector.load %arg5[%c1280, %c0_48] : memref<3200x256xbf16, #tpu.memory_space<vmem>>, vector<128x256xbf16>
    %cst_49 = arith.constant dense<0.000000e+00> : vector<2x256xf32>
    %84 = tpu.matmul %82, %83, %cst_49 {dimension_numbers = #tpu.dot_dimension_numbers<[1], [0], [0], [1], [0, 0, 1, 1], [], []>} : vector<2x128xbf16>, vector<128x256xbf16>, vector<2x256xf32> -> vector<2x256xf32>
    %85 = vector.extract_strided_slice %14 {offsets = [10, 0], sizes = [2, 128], strides = [1, 1]} : vector<32x128xbf16> to vector<2x128xbf16>
    %c1408 = arith.constant 1408 : index
    %c0_50 = arith.constant 0 : index
    %86 = vector.load %arg5[%c1408, %c0_50] : memref<3200x256xbf16, #tpu.memory_space<vmem>>, vector<128x256xbf16>
    %cst_51 = arith.constant dense<0.000000e+00> : vector<2x256xf32>
    %87 = tpu.matmul %85, %86, %cst_51 {dimension_numbers = #tpu.dot_dimension_numbers<[1], [0], [0], [1], [0, 0, 1, 1], [], []>} : vector<2x128xbf16>, vector<128x256xbf16>, vector<2x256xf32> -> vector<2x256xf32>
    %88 = arith.addf %84, %87 : vector<2x256xf32>
    %89 = vector.extract_strided_slice %14 {offsets = [16, 0], sizes = [2, 128], strides = [1, 1]} : vector<32x128xbf16> to vector<2x128xbf16>
    %c1536 = arith.constant 1536 : index
    %c0_52 = arith.constant 0 : index
    %90 = vector.load %arg5[%c1536, %c0_52] : memref<3200x256xbf16, #tpu.memory_space<vmem>>, vector<128x256xbf16>
    %cst_53 = arith.constant dense<0.000000e+00> : vector<2x256xf32>
    %91 = tpu.matmul %89, %90, %cst_53 {dimension_numbers = #tpu.dot_dimension_numbers<[1], [0], [0], [1], [0, 0, 1, 1], [], []>} : vector<2x128xbf16>, vector<128x256xbf16>, vector<2x256xf32> -> vector<2x256xf32>
    %92 = arith.addf %88, %91 : vector<2x256xf32>
    %93 = vector.extract_strided_slice %14 {offsets = [18, 0], sizes = [2, 128], strides = [1, 1]} : vector<32x128xbf16> to vector<2x128xbf16>
    %c1664 = arith.constant 1664 : index
    %c0_54 = arith.constant 0 : index
    %94 = vector.load %arg5[%c1664, %c0_54] : memref<3200x256xbf16, #tpu.memory_space<vmem>>, vector<128x256xbf16>
    %cst_55 = arith.constant dense<0.000000e+00> : vector<2x256xf32>
    %95 = tpu.matmul %93, %94, %cst_55 {dimension_numbers = #tpu.dot_dimension_numbers<[1], [0], [0], [1], [0, 0, 1, 1], [], []>} : vector<2x128xbf16>, vector<128x256xbf16>, vector<2x256xf32> -> vector<2x256xf32>
    %96 = arith.addf %92, %95 : vector<2x256xf32>
    %97 = vector.extract_strided_slice %14 {offsets = [24, 0], sizes = [2, 128], strides = [1, 1]} : vector<32x128xbf16> to vector<2x128xbf16>
    %c1792 = arith.constant 1792 : index
    %c0_56 = arith.constant 0 : index
    %98 = vector.load %arg5[%c1792, %c0_56] : memref<3200x256xbf16, #tpu.memory_space<vmem>>, vector<128x256xbf16>
    %cst_57 = arith.constant dense<0.000000e+00> : vector<2x256xf32>
    %99 = tpu.matmul %97, %98, %cst_57 {dimension_numbers = #tpu.dot_dimension_numbers<[1], [0], [0], [1], [0, 0, 1, 1], [], []>} : vector<2x128xbf16>, vector<128x256xbf16>, vector<2x256xf32> -> vector<2x256xf32>
    %100 = arith.addf %96, %99 : vector<2x256xf32>
    %101 = vector.extract_strided_slice %14 {offsets = [26, 0], sizes = [2, 128], strides = [1, 1]} : vector<32x128xbf16> to vector<2x128xbf16>
    %c1920 = arith.constant 1920 : index
    %c0_58 = arith.constant 0 : index
    %102 = vector.load %arg5[%c1920, %c0_58] : memref<3200x256xbf16, #tpu.memory_space<vmem>>, vector<128x256xbf16>
    %cst_59 = arith.constant dense<0.000000e+00> : vector<2x256xf32>
    %103 = tpu.matmul %101, %102, %cst_59 {dimension_numbers = #tpu.dot_dimension_numbers<[1], [0], [0], [1], [0, 0, 1, 1], [], []>} : vector<2x128xbf16>, vector<128x256xbf16>, vector<2x256xf32> -> vector<2x256xf32>
    %104 = arith.addf %100, %103 : vector<2x256xf32>
    %c0_60 = arith.constant 0 : index
    %c0_61 = arith.constant 0 : index
    %105 = vector.load %arg6[%c0_60, %c0_61] : memref<1x256xf32, #tpu.memory_space<vmem>>, vector<1x256xf32>
    %106 = vector.broadcast %105 : vector<1x256xf32> to vector<2x256xf32>
    %107 = arith.addf %104, %106 : vector<2x256xf32>
    %cst_62 = arith.constant 0.000000e+00 : f32
    %108 = vector.broadcast %cst_62 : f32 to vector<2x256xf32>
    %109 = arith.cmpf ogt, %107, %108 : vector<2x256xf32>
    %cst_63 = arith.constant 2.000000e-01 : f32
    %110 = vector.broadcast %cst_63 : f32 to vector<2x256xf32>
    %111 = arith.mulf %110, %107 : vector<2x256xf32>
    %112 = arith.select %109, %107, %111 : vector<2x256xi1>, vector<2x256xf32>
    %c0_64 = arith.constant 0 : index
    %c0_65 = arith.constant 0 : index
    %113 = vector.load %arg7[%c0_64, %c0_65] : memref<1x256xf32, #tpu.memory_space<vmem>>, vector<1x256xf32>
    %114 = vector.broadcast %113 : vector<1x256xf32> to vector<2x256xf32>
    %115 = arith.addf %112, %114 : vector<2x256xf32>
    %116 = arith.truncf %115 : vector<2x256xf32> to vector<2x256xbf16>
    %c512_66 = arith.constant 512 : index
    %c0_67 = arith.constant 0 : index
    %117 = vector.load %arg8[%c512_66, %c0_67] : memref<1024x512xbf16, #tpu.memory_space<vmem>>, vector<256x512xbf16>
    %cst_68 = arith.constant dense<0.000000e+00> : vector<2x512xf32>
    %118 = tpu.matmul %116, %117, %cst_68 {dimension_numbers = #tpu.dot_dimension_numbers<[1], [0], [0], [1], [0, 0, 1, 1], [], []>} : vector<2x256xbf16>, vector<256x512xbf16>, vector<2x512xf32> -> vector<2x512xf32>
    %119 = arith.addf %81, %118 : vector<2x512xf32>
    %120 = vector.extract_strided_slice %14 {offsets = [10, 0], sizes = [2, 128], strides = [1, 1]} : vector<32x128xbf16> to vector<2x128xbf16>
    %c2048 = arith.constant 2048 : index
    %c0_69 = arith.constant 0 : index
    %121 = vector.load %arg5[%c2048, %c0_69] : memref<3200x256xbf16, #tpu.memory_space<vmem>>, vector<128x256xbf16>
    %cst_70 = arith.constant dense<0.000000e+00> : vector<2x256xf32>
    %122 = tpu.matmul %120, %121, %cst_70 {dimension_numbers = #tpu.dot_dimension_numbers<[1], [0], [0], [1], [0, 0, 1, 1], [], []>} : vector<2x128xbf16>, vector<128x256xbf16>, vector<2x256xf32> -> vector<2x256xf32>
    %123 = vector.extract_strided_slice %14 {offsets = [12, 0], sizes = [2, 128], strides = [1, 1]} : vector<32x128xbf16> to vector<2x128xbf16>
    %c2176 = arith.constant 2176 : index
    %c0_71 = arith.constant 0 : index
    %124 = vector.load %arg5[%c2176, %c0_71] : memref<3200x256xbf16, #tpu.memory_space<vmem>>, vector<128x256xbf16>
    %cst_72 = arith.constant dense<0.000000e+00> : vector<2x256xf32>
    %125 = tpu.matmul %123, %124, %cst_72 {dimension_numbers = #tpu.dot_dimension_numbers<[1], [0], [0], [1], [0, 0, 1, 1], [], []>} : vector<2x128xbf16>, vector<128x256xbf16>, vector<2x256xf32> -> vector<2x256xf32>
    %126 = arith.addf %122, %125 : vector<2x256xf32>
    %127 = vector.extract_strided_slice %14 {offsets = [14, 0], sizes = [2, 128], strides = [1, 1]} : vector<32x128xbf16> to vector<2x128xbf16>
    %c2304 = arith.constant 2304 : index
    %c0_73 = arith.constant 0 : index
    %128 = vector.load %arg5[%c2304, %c0_73] : memref<3200x256xbf16, #tpu.memory_space<vmem>>, vector<128x256xbf16>
    %cst_74 = arith.constant dense<0.000000e+00> : vector<2x256xf32>
    %129 = tpu.matmul %127, %128, %cst_74 {dimension_numbers = #tpu.dot_dimension_numbers<[1], [0], [0], [1], [0, 0, 1, 1], [], []>} : vector<2x128xbf16>, vector<128x256xbf16>, vector<2x256xf32> -> vector<2x256xf32>
    %130 = arith.addf %126, %129 : vector<2x256xf32>
    %131 = vector.extract_strided_slice %14 {offsets = [18, 0], sizes = [2, 128], strides = [1, 1]} : vector<32x128xbf16> to vector<2x128xbf16>
    %c2432 = arith.constant 2432 : index
    %c0_75 = arith.constant 0 : index
    %132 = vector.load %arg5[%c2432, %c0_75] : memref<3200x256xbf16, #tpu.memory_space<vmem>>, vector<128x256xbf16>
    %cst_76 = arith.constant dense<0.000000e+00> : vector<2x256xf32>
    %133 = tpu.matmul %131, %132, %cst_76 {dimension_numbers = #tpu.dot_dimension_numbers<[1], [0], [0], [1], [0, 0, 1, 1], [], []>} : vector<2x128xbf16>, vector<128x256xbf16>, vector<2x256xf32> -> vector<2x256xf32>
    %134 = arith.addf %130, %133 : vector<2x256xf32>
    %135 = vector.extract_strided_slice %14 {offsets = [20, 0], sizes = [2, 128], strides = [1, 1]} : vector<32x128xbf16> to vector<2x128xbf16>
    %c2560 = arith.constant 2560 : index
    %c0_77 = arith.constant 0 : index
    %136 = vector.load %arg5[%c2560, %c0_77] : memref<3200x256xbf16, #tpu.memory_space<vmem>>, vector<128x256xbf16>
    %cst_78 = arith.constant dense<0.000000e+00> : vector<2x256xf32>
    %137 = tpu.matmul %135, %136, %cst_78 {dimension_numbers = #tpu.dot_dimension_numbers<[1], [0], [0], [1], [0, 0, 1, 1], [], []>} : vector<2x128xbf16>, vector<128x256xbf16>, vector<2x256xf32> -> vector<2x256xf32>
    %138 = arith.addf %134, %137 : vector<2x256xf32>
    %139 = vector.extract_strided_slice %14 {offsets = [22, 0], sizes = [2, 128], strides = [1, 1]} : vector<32x128xbf16> to vector<2x128xbf16>
    %c2688 = arith.constant 2688 : index
    %c0_79 = arith.constant 0 : index
    %140 = vector.load %arg5[%c2688, %c0_79] : memref<3200x256xbf16, #tpu.memory_space<vmem>>, vector<128x256xbf16>
    %cst_80 = arith.constant dense<0.000000e+00> : vector<2x256xf32>
    %141 = tpu.matmul %139, %140, %cst_80 {dimension_numbers = #tpu.dot_dimension_numbers<[1], [0], [0], [1], [0, 0, 1, 1], [], []>} : vector<2x128xbf16>, vector<128x256xbf16>, vector<2x256xf32> -> vector<2x256xf32>
    %142 = arith.addf %138, %141 : vector<2x256xf32>
    %143 = vector.extract_strided_slice %14 {offsets = [26, 0], sizes = [2, 128], strides = [1, 1]} : vector<32x128xbf16> to vector<2x128xbf16>
    %c2816 = arith.constant 2816 : index
    %c0_81 = arith.constant 0 : index
    %144 = vector.load %arg5[%c2816, %c0_81] : memref<3200x256xbf16, #tpu.memory_space<vmem>>, vector<128x256xbf16>
    %cst_82 = arith.constant dense<0.000000e+00> : vector<2x256xf32>
    %145 = tpu.matmul %143, %144, %cst_82 {dimension_numbers = #tpu.dot_dimension_numbers<[1], [0], [0], [1], [0, 0, 1, 1], [], []>} : vector<2x128xbf16>, vector<128x256xbf16>, vector<2x256xf32> -> vector<2x256xf32>
    %146 = arith.addf %142, %145 : vector<2x256xf32>
    %147 = vector.extract_strided_slice %14 {offsets = [28, 0], sizes = [2, 128], strides = [1, 1]} : vector<32x128xbf16> to vector<2x128xbf16>
    %c2944 = arith.constant 2944 : index
    %c0_83 = arith.constant 0 : index
    %148 = vector.load %arg5[%c2944, %c0_83] : memref<3200x256xbf16, #tpu.memory_space<vmem>>, vector<128x256xbf16>
    %cst_84 = arith.constant dense<0.000000e+00> : vector<2x256xf32>
    %149 = tpu.matmul %147, %148, %cst_84 {dimension_numbers = #tpu.dot_dimension_numbers<[1], [0], [0], [1], [0, 0, 1, 1], [], []>} : vector<2x128xbf16>, vector<128x256xbf16>, vector<2x256xf32> -> vector<2x256xf32>
    %150 = arith.addf %146, %149 : vector<2x256xf32>
    %151 = vector.extract_strided_slice %14 {offsets = [30, 0], sizes = [2, 128], strides = [1, 1]} : vector<32x128xbf16> to vector<2x128xbf16>
    %c3072 = arith.constant 3072 : index
    %c0_85 = arith.constant 0 : index
    %152 = vector.load %arg5[%c3072, %c0_85] : memref<3200x256xbf16, #tpu.memory_space<vmem>>, vector<128x256xbf16>
    %cst_86 = arith.constant dense<0.000000e+00> : vector<2x256xf32>
    %153 = tpu.matmul %151, %152, %cst_86 {dimension_numbers = #tpu.dot_dimension_numbers<[1], [0], [0], [1], [0, 0, 1, 1], [], []>} : vector<2x128xbf16>, vector<128x256xbf16>, vector<2x256xf32> -> vector<2x256xf32>
    %154 = arith.addf %150, %153 : vector<2x256xf32>
    %c0_87 = arith.constant 0 : index
    %c0_88 = arith.constant 0 : index
    %155 = vector.load %arg6[%c0_87, %c0_88] : memref<1x256xf32, #tpu.memory_space<vmem>>, vector<1x256xf32>
    %156 = vector.broadcast %155 : vector<1x256xf32> to vector<2x256xf32>
    %157 = arith.addf %154, %156 : vector<2x256xf32>
    %cst_89 = arith.constant 0.000000e+00 : f32
    %158 = vector.broadcast %cst_89 : f32 to vector<2x256xf32>
    %159 = arith.cmpf ogt, %157, %158 : vector<2x256xf32>
    %cst_90 = arith.constant 2.000000e-01 : f32
    %160 = vector.broadcast %cst_90 : f32 to vector<2x256xf32>
    %161 = arith.mulf %160, %157 : vector<2x256xf32>
    %162 = arith.select %159, %157, %161 : vector<2x256xi1>, vector<2x256xf32>
    %c0_91 = arith.constant 0 : index
    %c0_92 = arith.constant 0 : index
    %163 = vector.load %arg7[%c0_91, %c0_92] : memref<1x256xf32, #tpu.memory_space<vmem>>, vector<1x256xf32>
    %164 = vector.broadcast %163 : vector<1x256xf32> to vector<2x256xf32>
    %165 = arith.addf %162, %164 : vector<2x256xf32>
    %166 = arith.truncf %165 : vector<2x256xf32> to vector<2x256xbf16>
    %c768_93 = arith.constant 768 : index
    %c0_94 = arith.constant 0 : index
    %167 = vector.load %arg8[%c768_93, %c0_94] : memref<1024x512xbf16, #tpu.memory_space<vmem>>, vector<256x512xbf16>
    %cst_95 = arith.constant dense<0.000000e+00> : vector<2x512xf32>
    %168 = tpu.matmul %166, %167, %cst_95 {dimension_numbers = #tpu.dot_dimension_numbers<[1], [0], [0], [1], [0, 0, 1, 1], [], []>} : vector<2x256xbf16>, vector<256x512xbf16>, vector<2x512xf32> -> vector<2x512xf32>
    %169 = arith.addf %119, %168 : vector<2x512xf32>
    %c0_96 = arith.constant 0 : index
    %c0_97 = arith.constant 0 : index
    %170 = vector.load %arg9[%c0_96, %c0_97] : memref<1x512xf32, #tpu.memory_space<vmem>>, vector<1x512xf32>
    %171 = vector.broadcast %170 : vector<1x512xf32> to vector<2x512xf32>
    %172 = arith.addf %169, %171 : vector<2x512xf32>
    %cst_98 = arith.constant 0.000000e+00 : f32
    %173 = vector.broadcast %cst_98 : f32 to vector<2x512xf32>
    %174 = arith.cmpf ogt, %172, %173 : vector<2x512xf32>
    %cst_99 = arith.constant 2.000000e-01 : f32
    %175 = vector.broadcast %cst_99 : f32 to vector<2x512xf32>
    %176 = arith.mulf %175, %172 : vector<2x512xf32>
    %177 = arith.select %174, %172, %176 : vector<2x512xi1>, vector<2x512xf32>
    %c0_100 = arith.constant 0 : index
    %c0_101 = arith.constant 0 : index
    %178 = vector.load %arg10[%c0_100, %c0_101] : memref<1x512xf32, #tpu.memory_space<vmem>>, vector<1x512xf32>
    %179 = vector.broadcast %178 : vector<1x512xf32> to vector<2x512xf32>
    %180 = arith.addf %177, %179 : vector<2x512xf32>
    %c0_102 = arith.constant 0 : index
    %c0_103 = arith.constant 0 : index
    %181 = vector.load %arg11[%c0_102, %c0_103] : memref<1x512xf32, #tpu.memory_space<vmem>>, vector<1x512xf32>
    %182 = vector.broadcast %181 : vector<1x512xf32> to vector<2x512xf32>
    %183 = arith.mulf %180, %182 : vector<2x512xf32>
    %cst_104 = arith.constant dense<0.000000e+00> : vector<2xf32>
    %184 = vector.multi_reduction <add>, %183, %cst_104 [1] : vector<2x512xf32> to vector<2xf32>
    %185 = vector.shape_cast %184 : vector<2xf32> to vector<2x1xf32>
    %c0_105 = arith.constant 0 : index
    %c0_106 = arith.constant 0 : index
    %186 = vector.load %arg12[%c0_105, %c0_106] : memref<1x1xf32, #tpu.memory_space<vmem>>, vector<1x1xf32>
    %187 = vector.broadcast %186 : vector<1x1xf32> to vector<2x1xf32>
    %188 = arith.addf %185, %187 : vector<2x1xf32>
    %cst_107 = arith.constant 0.000000e+00 : f32
    %189 = vector.broadcast %cst_107 : f32 to vector<2x1xf32>
    %190 = arith.maximumf %188, %189 : vector<2x1xf32>
    %191 = arith.subf %188, %190 : vector<2x1xf32>
    %192 = math.exp %191 : vector<2x1xf32>
    %cst_108 = arith.constant 0.000000e+00 : f32
    %193 = vector.broadcast %cst_108 : f32 to vector<2x1xf32>
    %194 = arith.subf %193, %190 : vector<2x1xf32>
    %195 = math.exp %194 : vector<2x1xf32>
    %196 = arith.addf %192, %195 : vector<2x1xf32>
    %197 = arith.divf %192, %196 : vector<2x1xf32>
    %198 = vector.shape_cast %197 : vector<2x1xf32> to vector<2x1xf32>
    %199 = vector.broadcast %198 : vector<2x1xf32> to vector<2x128xf32>
    %c0_109 = arith.constant 0 : index
    %c0_110 = arith.constant 0 : index
    %200 = vector.load %arg13[%c0_109, %c0_110] : memref<2x128xf32, #tpu.memory_space<vmem>>, vector<2x128xf32>
    tpu.vector_store %arg13[%c0_109, %c0_110], %199 {strides = array<i32>} : memref<2x128xf32, #tpu.memory_space<vmem>>, vector<2x128xf32>,
    return
  }
  func.func @transform_0(%arg0: i32) -> (i32, i32) {
    %c0_i32 = arith.constant 0 : i32
    %c0_i32_0 = arith.constant 0 : i32
    return %arg0, %c0_i32 : i32, i32
  }
  func.func @transform_1(%arg0: i32) -> (i32, i32) {
    %c0_i32 = arith.constant 0 : i32
    %c0_i32_0 = arith.constant 0 : i32
    %c0_i32_1 = arith.constant 0 : i32
    return %c0_i32, %c0_i32_0 : i32, i32
  }
  func.func @transform_2(%arg0: i32) -> (i32, i32) {
    %c0_i32 = arith.constant 0 : i32
    %c0_i32_0 = arith.constant 0 : i32
    %c0_i32_1 = arith.constant 0 : i32
    return %c0_i32, %c0_i32_0 : i32, i32
  }
  func.func @transform_3(%arg0: i32) -> (i32, i32) {
    %c0_i32 = arith.constant 0 : i32
    %c0_i32_0 = arith.constant 0 : i32
    %c0_i32_1 = arith.constant 0 : i32
    return %c0_i32, %c0_i32_0 : i32, i32
  }
  func.func @transform_4(%arg0: i32) -> (i32, i32) {
    %c0_i32 = arith.constant 0 : i32
    %c0_i32_0 = arith.constant 0 : i32
    %c0_i32_1 = arith.constant 0 : i32
    return %c0_i32, %c0_i32_0 : i32, i32
  }
  func.func @transform_5(%arg0: i32) -> (i32, i32) {
    %c0_i32 = arith.constant 0 : i32
    %c0_i32_0 = arith.constant 0 : i32
    %c0_i32_1 = arith.constant 0 : i32
    return %c0_i32, %c0_i32_0 : i32, i32
  }
  func.func @transform_6(%arg0: i32) -> (i32, i32) {
    %c0_i32 = arith.constant 0 : i32
    %c0_i32_0 = arith.constant 0 : i32
    %c0_i32_1 = arith.constant 0 : i32
    return %c0_i32, %c0_i32_0 : i32, i32
  }
  func.func @transform_7(%arg0: i32) -> (i32, i32) {
    %c0_i32 = arith.constant 0 : i32
    %c0_i32_0 = arith.constant 0 : i32
    %c0_i32_1 = arith.constant 0 : i32
    return %c0_i32, %c0_i32_0 : i32, i32
  }
  func.func @transform_8(%arg0: i32) -> (i32, i32) {
    %c0_i32 = arith.constant 0 : i32
    %c0_i32_0 = arith.constant 0 : i32
    %c0_i32_1 = arith.constant 0 : i32
    return %c0_i32, %c0_i32_0 : i32, i32
  }
  func.func @transform_9(%arg0: i32) -> (i32, i32) {
    %c0_i32 = arith.constant 0 : i32
    %c0_i32_0 = arith.constant 0 : i32
    %c0_i32_1 = arith.constant 0 : i32
    return %c0_i32, %c0_i32_0 : i32, i32
  }
  func.func @transform_10(%arg0: i32) -> (i32, i32) {
    %c0_i32 = arith.constant 0 : i32
    %c0_i32_0 = arith.constant 0 : i32
    %c0_i32_1 = arith.constant 0 : i32
    return %c0_i32, %c0_i32_0 : i32, i32
  }
  func.func @transform_11(%arg0: i32) -> (i32, i32) {
    %c0_i32 = arith.constant 0 : i32
    %c0_i32_0 = arith.constant 0 : i32
    %c0_i32_1 = arith.constant 0 : i32
    return %c0_i32, %c0_i32_0 : i32, i32
  }
  func.func @transform_12(%arg0: i32) -> (i32, i32) {
    %c0_i32 = arith.constant 0 : i32
    %c0_i32_0 = arith.constant 0 : i32
    return %arg0, %c0_i32 : i32, i32
  }
}

</mosaic_0001>

<llo_original>
// kernel: dc_discriminator_forward.2
$region0: #{dc_discriminator_forward.2}
  #allocation0 [shape = 'u32[]', space=smem, size = 0x4, offset = 0x4, fixed_abs, tag = 'smem constant byte address 0x4 - core index']
  #allocation1 [shape = 'u32[144,128]{1,0:T(1,128)}', space=vmem, size = 0x12000, scoped, tag = 'internal scratch']
  %s0 = inlined_call_operand.vmem [shape: bf16[128,27], index: 0, kind: input, shape index: {}]
  %s1 = inlined_call_operand.hbm [shape: bf16[27,64], index: 1, kind: input, shape index: {}]
  %s2 = inlined_call_operand.hbm [shape: f32[1,64], index: 2, kind: input, shape index: {}]
  %s3 = inlined_call_operand.vmem [shape: bf16[128,64], index: 3, kind: output, shape index: {}]
  %s4 = sld [smem:[#allocation0]]
  $region30: #{dc_discriminator_forward.2} parent=0
    _
  %s6 = ssub.s32 1, %s4
  %s7 = scalar_select 0, %s6, %s4
  $region1: #{dc_discriminator_forward.2} parent=0
    #allocation2 [shape = 'u8[8192]{0}', space=vmem, size = 0x2000, scoped, tag = 'input window, operand 1, single buffered']
    #allocation3 [shape = 's32[1]{0}', space=sflag, size = 0x4, scoped, tag = 'scoped memory for dc_discriminator_forward.2']
    #allocation4 [shape = 'u8[512]{0}', space=vmem, size = 0x400, scoped, tag = 'input window, operand 2, single buffered']
    #allocation5 [shape = 's32[1]{0}', space=sflag, size = 0x4, scoped, tag = 'scoped memory for dc_discriminator_forward.2']
    %8 = vsyncpa [#allocation3], 0
    %9 = vsyncpa [#allocation5], 0
    // Predicated region
    $region2: #{dc_discriminator_forward.2} parent=1 // pred_check
      _
    $region3: #{dc_discriminator_forward.2} parent=1 // pred_check_branch
      %11 = sbr.rel (0) target = $region5
    $region4: #{dc_discriminator_forward.2} parent=1 // pred_region
      _
    $region5: #{dc_discriminator_forward.2} parent=1 // pred_fallthru
      _
    // Predicated region
    $region6: #{dc_discriminator_forward.2} parent=1 // pred_check
      _
    $region7: #{dc_discriminator_forward.2} parent=1 // pred_check_branch
      %13 = sbr.rel (0) target = $region9
    $region8: #{dc_discriminator_forward.2} parent=1 // pred_region
      %s15 = ssub.s32 256, 256
      %16 = vsyncadd [#allocation3], %s15
      %s17 = sshll.u32 [#allocation2], 4
      %s18 = int_to_ptr.vmem [resolvable:$true] %s17
      %23 = dma.hbm_to_vmem [thread:$0]  %s1, 256, %s18, [#allocation3], 64, 64, 4
    $region9: #{dc_discriminator_forward.2} parent=1 // pred_fallthru
      _
    // Predicated region
    $region10: #{dc_discriminator_forward.2} parent=1 // pred_check
      _
    $region11: #{dc_discriminator_forward.2} parent=1 // pred_check_branch
      %25 = sbr.rel (0) target = $region13
    $region12: #{dc_discriminator_forward.2} parent=1 // pred_region
      %s27 = ssub.s32 16, 16
      %28 = vsyncadd [#allocation5], %s27
      %s30 = sshll.u32 [#allocation4], 4
      %s31 = int_to_ptr.vmem [resolvable:$true] %s30
      %33 = dma.hbm_to_vmem [thread:$0]  %s2, 16, %s31, [#allocation5]
    $region13: #{dc_discriminator_forward.2} parent=1 // pred_fallthru
      _
    // Predicated region
    $region14: #{dc_discriminator_forward.2} parent=1 // pred_check
      _
    $region15: #{dc_discriminator_forward.2} parent=1 // pred_check_branch
      %35 = sbr.rel (0) target = $region17
    $region16: #{dc_discriminator_forward.2} parent=1 // pred_region
      %36 = dma.done [#allocation3], 256
    $region17: #{dc_discriminator_forward.2} parent=1 // pred_fallthru
      _
    // Predicated region
    $region18: #{dc_discriminator_forward.2} parent=1 // pred_check
      _
    $region19: #{dc_discriminator_forward.2} parent=1 // pred_check_branch
      %38 = sbr.rel (0) target = $region21
    $region20: #{dc_discriminator_forward.2} parent=1 // pred_region
      %39 = dma.done [#allocation5], 16
    $region21: #{dc_discriminator_forward.2} parent=1 // pred_fallthru
      _
    %v41 = vld [vmem:[%s0] sm:$0xf]
    %v42 = vld [vmem:[%s0 + $0x4] sm:$0xf]
    %v43 = vld [vmem:[%s0 + $0x8] sm:$0xf]
    %v44 = vld [vmem:[%s0 + $0xc] sm:$0xf]
    %v45 = vld [vmem:[%s0 + $0x10] sm:$0xf]
    %v46 = vld [vmem:[%s0 + $0x14] sm:$0xf]
    %v47 = vld [vmem:[%s0 + $0x18] sm:$0xf]
    %v48 = vld [vmem:[%s0 + $0x1c] sm:$0xf]
    %v49 = vld [vmem:[%s0 + $0x20] sm:$0xf]
    %v50 = vld [vmem:[%s0 + $0x24] sm:$0xf]
    %v51 = vld [vmem:[%s0 + $0x28] sm:$0xf]
    %v52 = vld [vmem:[%s0 + $0x2c] sm:$0xf]
    %v53 = vld [vmem:[%s0 + $0x30] sm:$0xf]
    %v54 = vld [vmem:[%s0 + $0x34] sm:$0xf]
    %v55 = vld [vmem:[%s0 + $0x38] sm:$0xf]
    %v56 = vld [vmem:[%s0 + $0x3c] sm:$0xf]
    %v57 = vld [vmem:[#allocation2] sm:$0xf]
    %v58 = vld [vmem:[#allocation2 + $0x4] sm:$0xf]
    %v59 = vld [vmem:[#allocation2 + $0x8] sm:$0xf]
    %v60 = vld [vmem:[#allocation2 + $0xc] sm:$0x3]
    %v61 = vld [vmem:[#allocation4] sm:$0x1]
    %v63 = vlaneseq
    %v64 = vshrl.u32 %v63, 7
    %v65 = vsub.s32 0, %v64
    %v66 = vrot.slane %v61, %v65
    %v84 = vunpack.c.l.b16 %v41
    %v85 = vunpack.c.l.b16 %v42
    %v86 = vunpack.c.l.b16 %v43
    %v87 = vunpack.c.l.b16 %v44
    %v88 = vunpack.c.l.b16 %v45
    %v89 = vunpack.c.l.b16 %v46
    %v90 = vunpack.c.l.b16 %v47
    %v91 = vunpack.c.l.b16 %v48
    %v92 = vunpack.c.l.b16 %v49
    %v93 = vunpack.c.l.b16 %v50
    %v94 = vunpack.c.l.b16 %v51
    %v95 = vunpack.c.l.b16 %v52
    %v96 = vunpack.c.l.b16 %v53
    %v97 = vunpack.c.l.b16 %v54
    %v98 = vunpack.c.l.b16 %v55
    %v99 = vunpack.c.l.b16 %v56
    %v100 = vpack.c.b16 %v85, %v84
    %v101 = vpack.c.b16 %v87, %v86
    %v102 = vpack.c.b16 %v89, %v88
    %v103 = vpack.c.b16 %v91, %v90
    %v104 = vpack.c.b16 %v93, %v92
    %v105 = vpack.c.b16 %v95, %v94
    %v106 = vpack.c.b16 %v97, %v96
    %v107 = vpack.c.b16 %v99, %v98
    %v112 = vunpack.c.l.b16 %v57
    %v113 = vunpack.c.l.b16 %v58
    %v114 = vunpack.c.l.b16 %v59
    %v115 = vunpack.c.l.b16 %v60
    %v116 = vpack.c.b16 %v113, %v112
    %v117 = vpack.c.b16 %v115, %v114
    %vm119 = vcmask 220160
    %v121 = vsel %vm119, %v100, 0
    %v124 = vsel %vm119, %v101, 0
    %v127 = vsel %vm119, %v102, 0
    %v130 = vsel %vm119, %v103, 0
    %v133 = vsel %vm119, %v104, 0
    %v136 = vsel %vm119, %v105, 0
    %v139 = vsel %vm119, %v106, 0
    %v142 = vsel %vm119, %v107, 0
    %vm144 = vcmask 1044480
    %vm145 = vcmask 1045504
    %v146 = vsel %vm144, 4294967295, 65535
    %v147 = vsel %vm145, %v146, 0
    %v149 = vand.u32 %v117, %v147
    %151 = vmatprep.subr.bf16.mxu0 0
    %152 = vmatpush1.bf16.msra.mxu0 0
    %153 = vmatprep.subr.bf16.mxu0 0
    %154 = vmatpush1.bf16.msra.mxu0 0
    %155 = vmatprep.subr.bf16.mxu0 0
    %156 = vmatpush1.bf16.msra.mxu0 0
    %157 = vmatprep.subr.bf16.mxu0 0
    %158 = vmatpush1.bf16.msra.mxu0 0
    %159 = vmatprep.subr.bf16.mxu0 0
    %160 = vmatpush1.bf16.msra.mxu0 0
    %161 = vmatprep.subr.bf16.mxu0 0
    %162 = vmatpush1.bf16.msra.mxu0 0
    %163 = vmatprep.subr.bf16.mxu0 0
    %164 = vmatpush1.bf16.msra.mxu0 %v149
    %165 = vmatprep.subr.bf16.mxu0 0
    %166 = vmatpush1.bf16.msra.mxu0 %v116
    %167 = vmatprep.subr.bf16.mxu0 0
    %168 = vmatpush2.bf16.msra.mxu0 0
    %169 = vmatprep.subr.bf16.mxu0 0
    %170 = vmatpush2.bf16.msra.mxu0 0
    %171 = vmatprep.subr.bf16.mxu0 0
    %172 = vmatpush2.bf16.msra.mxu0 0
    %173 = vmatprep.subr.bf16.mxu0 0
    %174 = vmatpush2.bf16.msra.mxu0 0
    %175 = vmatprep.subr.bf16.mxu0 0
    %176 = vmatpush2.bf16.msra.mxu0 0
    %177 = vmatprep.subr.bf16.mxu0 0
    %178 = vmatpush2.bf16.msra.mxu0 0
    %179 = vmatprep.subr.bf16.mxu0 0
    %180 = vmatpush2.bf16.msra.mxu0 0
    %181 = vmatprep.subr.bf16.mxu0 0
    %182 = vmatpush2.bf16.msra.mxu0 0
    %183 = vmatprep.mubr.bf16.mxu0 0
    %184 = vmatmul.mubr.bf16.gmra.mxu0 %v121
    %v185 = vpop.f32.mrf.mxu0
    %v186 = vadd.f32 %v66, %v185
    %v187 = vpop.f32.mrf.mxu0
    %v188 = vpop.f32.mrf.mxu0
    %v189 = vadd.f32 %v66, %v188
    %v190 = vpop.f32.mrf.mxu0
    %191 = vmatprep.mubr.bf16.mxu0 0
    %192 = vmatmul.mubr.bf16.gmra.mxu0 %v124
    %v193 = vpop.f32.mrf.mxu0
    %v194 = vadd.f32 %v66, %v193
    %v195 = vpop.f32.mrf.mxu0
    %v196 = vpop.f32.mrf.mxu0
    %v197 = vadd.f32 %v66, %v196
    %v198 = vpop.f32.mrf.mxu0
    %199 = vmatprep.mubr.bf16.mxu0 0
    %200 = vmatmul.mubr.bf16.gmra.mxu0 %v127
    %v201 = vpop.f32.mrf.mxu0
    %v202 = vadd.f32 %v66, %v201
    %v203 = vpop.f32.mrf.mxu0
    %v204 = vpop.f32.mrf.mxu0
    %v205 = vadd.f32 %v66, %v204
    %v206 = vpop.f32.mrf.mxu0
    %207 = vmatprep.mubr.bf16.mxu0 0
    %208 = vmatmul.mubr.bf16.gmra.mxu0 %v130
    %v209 = vpop.f32.mrf.mxu0
    %v210 = vadd.f32 %v66, %v209
    %v211 = vpop.f32.mrf.mxu0
    %v212 = vpop.f32.mrf.mxu0
    %v213 = vadd.f32 %v66, %v212
    %v214 = vpop.f32.mrf.mxu0
    %215 = vmatprep.mubr.bf16.mxu0 0
    %216 = vmatmul.mubr.bf16.gmra.mxu0 %v133
    %v217 = vpop.f32.mrf.mxu0
    %v218 = vadd.f32 %v66, %v217
    %v219 = vpop.f32.mrf.mxu0
    %v220 = vpop.f32.mrf.mxu0
    %v221 = vadd.f32 %v66, %v220
    %v222 = vpop.f32.mrf.mxu0
    %223 = vmatprep.mubr.bf16.mxu0 0
    %224 = vmatmul.mubr.bf16.gmra.mxu0 %v136
    %v225 = vpop.f32.mrf.mxu0
    %v226 = vadd.f32 %v66, %v225
    %v227 = vpop.f32.mrf.mxu0
    %v228 = vpop.f32.mrf.mxu0
    %v229 = vadd.f32 %v66, %v228
    %v230 = vpop.f32.mrf.mxu0
    %231 = vmatprep.mubr.bf16.mxu0 0
    %232 = vmatmul.mubr.bf16.gmra.mxu0 %v139
    %v233 = vpop.f32.mrf.mxu0
    %v234 = vadd.f32 %v66, %v233
    %v235 = vpop.f32.mrf.mxu0
    %v236 = vpop.f32.mrf.mxu0
    %v237 = vadd.f32 %v66, %v236
    %v238 = vpop.f32.mrf.mxu0
    %239 = vmatprep.mubr.bf16.mxu0 0
    %240 = vmatmul.mubr.bf16.gmra.mxu0 %v142
    %v241 = vpop.f32.mrf.mxu0
    %v242 = vadd.f32 %v66, %v241
    %v243 = vpop.f32.mrf.mxu0
    %v244 = vpop.f32.mrf.mxu0
    %v245 = vadd.f32 %v66, %v244
    %v246 = vpop.f32.mrf.mxu0
    %247 = vdwg.mxu0
    %vm248 = vcmp.gt.f32.partialorder %v186, 0.0
    %vm249 = vcmp.gt.f32.partialorder %v189, 0.0
    %vm250 = vcmp.gt.f32.partialorder %v194, 0.0
    %vm251 = vcmp.gt.f32.partialorder %v197, 0.0
    %vm252 = vcmp.gt.f32.partialorder %v202, 0.0
    %vm253 = vcmp.gt.f32.partialorder %v205, 0.0
    %vm254 = vcmp.gt.f32.partialorder %v210, 0.0
    %vm255 = vcmp.gt.f32.partialorder %v213, 0.0
    %vm256 = vcmp.gt.f32.partialorder %v218, 0.0
    %vm257 = vcmp.gt.f32.partialorder %v221, 0.0
    %vm258 = vcmp.gt.f32.partialorder %v226, 0.0
    %vm259 = vcmp.gt.f32.partialorder %v229, 0.0
    %vm260 = vcmp.gt.f32.partialorder %v234, 0.0
    %vm261 = vcmp.gt.f32.partialorder %v237, 0.0
    %vm262 = vcmp.gt.f32.partialorder %v242, 0.0
    %vm263 = vcmp.gt.f32.partialorder %v245, 0.0
    %v264 = vmul.f32 %v186, 0.2
    %v265 = vmul.f32 %v189, 0.2
    %v266 = vmul.f32 %v194, 0.2
    %v267 = vmul.f32 %v197, 0.2
    %v268 = vmul.f32 %v202, 0.2
    %v269 = vmul.f32 %v205, 0.2
    %v270 = vmul.f32 %v210, 0.2
    %v271 = vmul.f32 %v213, 0.2
    %v272 = vmul.f32 %v218, 0.2
    %v273 = vmul.f32 %v221, 0.2
    %v274 = vmul.f32 %v226, 0.2
    %v275 = vmul.f32 %v229, 0.2
    %v276 = vmul.f32 %v234, 0.2
    %v277 = vmul.f32 %v237, 0.2
    %v278 = vmul.f32 %v242, 0.2
    %v279 = vmul.f32 %v245, 0.2
    %v280 = vsel %vm248, %v186, %v264
    %v281 = vsel %vm249, %v189, %v265
    %v282 = vsel %vm250, %v194, %v266
    %v283 = vsel %vm251, %v197, %v267
    %v284 = vsel %vm252, %v202, %v268
    %v285 = vsel %vm253, %v205, %v269
    %v286 = vsel %vm254, %v210, %v270
    %v287 = vsel %vm255, %v213, %v271
    %v288 = vsel %vm256, %v218, %v272
    %v289 = vsel %vm257, %v221, %v273
    %v290 = vsel %vm258, %v226, %v274
    %v291 = vsel %vm259, %v229, %v275
    %v292 = vsel %vm260, %v234, %v276
    %v293 = vsel %vm261, %v237, %v277
    %v294 = vsel %vm262, %v242, %v278
    %v295 = vsel %vm263, %v245, %v279
    %v296 = vpack.c.bf16 %v281, %v280
    %v297 = vpack.c.bf16 %v283, %v282
    %v298 = vpack.c.bf16 %v285, %v284
    %v299 = vpack.c.bf16 %v287, %v286
    %v300 = vpack.c.bf16 %v289, %v288
    %v301 = vpack.c.bf16 %v291, %v290
    %v302 = vpack.c.bf16 %v293, %v292
    %v303 = vpack.c.bf16 %v295, %v294
    %v312 = vunpack.c.l.b16 %v296
    %v313 = vunpack.c.h.b16 %v296
    %v314 = vunpack.c.l.b16 %v297
    %v315 = vunpack.c.h.b16 %v297
    %v316 = vunpack.c.l.b16 %v298
    %v317 = vunpack.c.h.b16 %v298
    %v318 = vunpack.c.l.b16 %v299
    %v319 = vunpack.c.h.b16 %v299
    %v320 = vunpack.c.l.b16 %v300
    %v321 = vunpack.c.h.b16 %v300
    %v322 = vunpack.c.l.b16 %v301
    %v323 = vunpack.c.h.b16 %v301
    %v324 = vunpack.c.l.b16 %v302
    %v325 = vunpack.c.h.b16 %v302
    %v326 = vunpack.c.l.b16 %v303
    %v327 = vunpack.c.h.b16 %v303
    %v328 = vpack.c.b16 %v312, %v312
    %v329 = vpack.c.b16 %v313, %v313
    %v330 = vpack.c.b16 %v314, %v314
    %v331 = vpack.c.b16 %v315, %v315
    %v332 = vpack.c.b16 %v316, %v316
    %v333 = vpack.c.b16 %v317, %v317
    %v334 = vpack.c.b16 %v318, %v318
    %v335 = vpack.c.b16 %v319, %v319
    %v336 = vpack.c.b16 %v320, %v320
    %v337 = vpack.c.b16 %v321, %v321
    %v338 = vpack.c.b16 %v322, %v322
    %v339 = vpack.c.b16 %v323, %v323
    %v340 = vpack.c.b16 %v324, %v324
    %v341 = vpack.c.b16 %v325, %v325
    %v342 = vpack.c.b16 %v326, %v326
    %v343 = vpack.c.b16 %v327, %v327
    %vm360 = vcmask 519168
    %361 = vst.msk [vmem:[%s3] sm:$0xf] %vm360, %v328
    %362 = vst.msk [vmem:[%s3 + $0x4] sm:$0xf] %vm360, %v329
    %363 = vst.msk [vmem:[%s3 + $0x8] sm:$0xf] %vm360, %v330
    %364 = vst.msk [vmem:[%s3 + $0xc] sm:$0xf] %vm360, %v331
    %365 = vst.msk [vmem:[%s3 + $0x10] sm:$0xf] %vm360, %v332
    %366 = vst.msk [vmem:[%s3 + $0x14] sm:$0xf] %vm360, %v333
    %367 = vst.msk [vmem:[%s3 + $0x18] sm:$0xf] %vm360, %v334
    %368 = vst.msk [vmem:[%s3 + $0x1c] sm:$0xf] %vm360, %v335
    %369 = vst.msk [vmem:[%s3 + $0x20] sm:$0xf] %vm360, %v336
    %370 = vst.msk [vmem:[%s3 + $0x24] sm:$0xf] %vm360, %v337
    %371 = vst.msk [vmem:[%s3 + $0x28] sm:$0xf] %vm360, %v338
    %372 = vst.msk [vmem:[%s3 + $0x2c] sm:$0xf] %vm360, %v339
    %373 = vst.msk [vmem:[%s3 + $0x30] sm:$0xf] %vm360, %v340
    %374 = vst.msk [vmem:[%s3 + $0x34] sm:$0xf] %vm360, %v341
    %375 = vst.msk [vmem:[%s3 + $0x38] sm:$0xf] %vm360, %v342
    %376 = vst.msk [vmem:[%s3 + $0x3c] sm:$0xf] %vm360, %v343
    // Predicated region
    $region22: #{dc_discriminator_forward.2} parent=1 // pred_check
      _
    $region23: #{dc_discriminator_forward.2} parent=1 // pred_check_branch
      %378 = sbr.rel (0) target = $region25
    $region24: #{dc_discriminator_forward.2} parent=1 // pred_region
      _
    $region25: #{dc_discriminator_forward.2} parent=1 // pred_fallthru
      _
    // Predicated region
    $region26: #{dc_discriminator_forward.2} parent=1 // pred_check
      _
    $region27: #{dc_discriminator_forward.2} parent=1 // pred_check_branch
      %380 = sbr.rel (0) target = $region29
    $region28: #{dc_discriminator_forward.2} parent=1 // pred_region
      _
    $region29: #{dc_discriminator_forward.2} parent=1 // pred_fallthru
      _
    %381 = vsyncpa [#allocation3], 1
    %382 = vsyncpa [#allocation5], 1

// kernel: dc_discriminator_forward.3
$region0: #{dc_discriminator_forward.3}
  #allocation0 [shape = 'u32[]', space=smem, size = 0x4, offset = 0x4, fixed_abs, tag = 'smem constant byte address 0x4 - core index']
  #allocation1 [shape = 'u32[144,128]{1,0:T(1,128)}', space=vmem, size = 0x12000, scoped, tag = 'internal scratch']
  #allocation2 [shape = 'f32[1,1]{1,0:T(1,128)S(1)}', space=vmem, size = 0x200, scoped, tag = 'scoped memory for dc_discriminator_forward.3']
  %s0 = inlined_call_operand.vmem [shape: bf16[32,576], index: 0, kind: input, shape index: {}]
  %s1 = inlined_call_operand.vmem [shape: bf16[576,128], index: 1, kind: input, shape index: {}]
  %s2 = inlined_call_operand.vmem [shape: f32[1,128], index: 2, kind: input, shape index: {}]
  %s3 = inlined_call_operand.vmem [shape: f32[1,128], index: 3, kind: input, shape index: {}]
  %s4 = inlined_call_operand.vmem [shape: bf16[3200,256], index: 4, kind: input, shape index: {}]
  %s5 = inlined_call_operand.vmem [shape: f32[1,256], index: 5, kind: input, shape index: {}]
  %s6 = inlined_call_operand.vmem [shape: f32[1,256], index: 6, kind: input, shape index: {}]
  %s7 = inlined_call_operand.hbm [shape: bf16[1024,512], index: 7, kind: input, shape index: {}]
  %s8 = inlined_call_operand.vmem [shape: f32[1,512], index: 8, kind: input, shape index: {}]
  %s9 = inlined_call_operand.vmem [shape: f32[1,512], index: 9, kind: input, shape index: {}]
  %s10 = inlined_call_operand.vmem [shape: f32[1,512], index: 10, kind: input, shape index: {}]
  %s11 = inlined_call_operand.<no memory space> [shape: f32[1,1], index: 11, kind: input, shape index: {}]
  %s12 = inlined_call_operand.vmem [shape: f32[2,128], index: 12, kind: output, shape index: {}]
  %s13 = sld [smem:[#allocation0]]
  $region62: #{dc_discriminator_forward.3} parent=0
    _
  %s15 = ssub.s32 1, %s13
  %s16 = scalar_select 0, %s15, %s13
  %v17 = vstv %s11
  %18 = vst [vmem:[#allocation2] sm:$0x1] %v17
  $region1: #{dc_discriminator_forward.3} parent=0
    #allocation3 [shape = 'u8[1048576]{0}', space=vmem, size = 0x100000, scoped, tag = 'input window, operand 7, single buffered']
    #allocation4 [shape = 's32[1]{0}', space=sflag, size = 0x4, scoped, tag = 'scoped memory for dc_discriminator_forward.3']
    %19 = vsyncpa [#allocation4], 0
    // Predicated region
    $region2: #{dc_discriminator_forward.3} parent=1 // pred_check
      _
    $region3: #{dc_discriminator_forward.3} parent=1 // pred_check_branch
      %21 = sbr.rel (0) target = $region5
    $region4: #{dc_discriminator_forward.3} parent=1 // pred_region
      _
    $region5: #{dc_discriminator_forward.3} parent=1 // pred_fallthru
      _
    // Predicated region
    $region6: #{dc_discriminator_forward.3} parent=1 // pred_check
      _
    $region7: #{dc_discriminator_forward.3} parent=1 // pred_check_branch
      %23 = sbr.rel (0) target = $region9
    $region8: #{dc_discriminator_forward.3} parent=1 // pred_region
      _
    $region9: #{dc_discriminator_forward.3} parent=1 // pred_fallthru
      _
    // Predicated region
    $region10: #{dc_discriminator_forward.3} parent=1 // pred_check
      _
    $region11: #{dc_discriminator_forward.3} parent=1 // pred_check_branch
      %25 = sbr.rel (0) target = $region13
    $region12: #{dc_discriminator_forward.3} parent=1 // pred_region
      _
    $region13: #{dc_discriminator_forward.3} parent=1 // pred_fallthru
      _
    // Predicated region
    $region14: #{dc_discriminator_forward.3} parent=1 // pred_check
      _
    $region15: #{dc_discriminator_forward.3} parent=1 // pred_check_branch
      %27 = sbr.rel (0) target = $region17
    $region16: #{dc_discriminator_forward.3} parent=1 // pred_region
      _
    $region17: #{dc_discriminator_forward.3} parent=1 // pred_fallthru
      _
    // Predicated region
    $region18: #{dc_discriminator_forward.3} parent=1 // pred_check
      _
    $region19: #{dc_discriminator_forward.3} parent=1 // pred_check_branch
      %29 = sbr.rel (0) target = $region21
    $region20: #{dc_discriminator_forward.3} parent=1 // pred_region
      _
    $region21: #{dc_discriminator_forward.3} parent=1 // pred_fallthru
      _
    // Predicated region
    $region22: #{dc_discriminator_forward.3} parent=1 // pred_check
      _
    $region23: #{dc_discriminator_forward.3} parent=1 // pred_check_branch
      %31 = sbr.rel (0) target = $region25
    $region24: #{dc_discriminator_forward.3} parent=1 // pred_region
      _
    $region25: #{dc_discriminator_forward.3} parent=1 // pred_fallthru
      _
    // Predicated region
    $region26: #{dc_discriminator_forward.3} parent=1 // pred_check
      _
    $region27: #{dc_discriminator_forward.3} parent=1 // pred_check_branch
      %33 = sbr.rel (0) target = $region29
    $region28: #{dc_discriminator_forward.3} parent=1 // pred_region
      _
    $region29: #{dc_discriminator_forward.3} parent=1 // pred_fallthru
      _
    // Predicated region
    $region30: #{dc_discriminator_forward.3} parent=1 // pred_check
      _
    $region31: #{dc_discriminator_forward.3} parent=1 // pred_check_branch
      %35 = sbr.rel (0) target = $region33
    $region32: #{dc_discriminator_forward.3} parent=1 // pred_region
      %s37 = ssub.s32 32768, 32768
      %38 = vsyncadd [#allocation4], %s37
      %s39 = sshll.u32 [#allocation3], 4
      %s40 = int_to_ptr.vmem [resolvable:$true] %s39
      %45 = dma.hbm_to_vmem [thread:$0]  %s7, 32768, %s40, [#allocation4], 256, 256, 16
    $region33: #{dc_discriminator_forward.3} parent=1 // pred_fallthru
      _
    // Predicated region
    $region34: #{dc_discriminator_forward.3} parent=1 // pred_check
      _
    $region35: #{dc_discriminator_forward.3} parent=1 // pred_check_branch
      %47 = sbr.rel (0) target = $region37
    $region36: #{dc_discriminator_forward.3} parent=1 // pred_region
      _
    $region37: #{dc_discriminator_forward.3} parent=1 // pred_fallthru
      _
    // Predicated region
    $region38: #{dc_discriminator_forward.3} parent=1 // pred_check
      _
    $region39: #{dc_discriminator_forward.3} parent=1 // pred_check_branch
      %49 = sbr.rel (0) target = $region41
    $region40: #{dc_discriminator_forward.3} parent=1 // pred_region
      _
    $region41: #{dc_discriminator_forward.3} parent=1 // pred_fallthru
      _
    // Predicated region
    $region42: #{dc_discriminator_forward.3} parent=1 // pred_check
      _
    $region43: #{dc_discriminator_forward.3} parent=1 // pred_check_branch
      %51 = sbr.rel (0) target = $region45
    $region44: #{dc_discriminator_forward.3} parent=1 // pred_region
      _
    $region45: #{dc_discriminator_forward.3} parent=1 // pred_fallthru
      _
    // Predicated region
    $region46: #{dc_discriminator_forward.3} parent=1 // pred_check
      _
    $region47: #{dc_discriminator_forward.3} parent=1 // pred_check_branch
      %53 = sbr.rel (0) target = $region49
    $region48: #{dc_discriminator_forward.3} parent=1 // pred_region
      _
    $region49: #{dc_discriminator_forward.3} parent=1 // pred_fallthru
      _
    // Predicated region
    $region50: #{dc_discriminator_forward.3} parent=1 // pred_check
      _
    $region51: #{dc_discriminator_forward.3} parent=1 // pred_check_branch
      %55 = sbr.rel (0) target = $region53
    $region52: #{dc_discriminator_forward.3} parent=1 // pred_region
      %56 = dma.done [#allocation4], 32768
    $region53: #{dc_discriminator_forward.3} parent=1 // pred_fallthru
      _
    %v58 = vld [vmem:[%s0] sm:$0xff]
    %v59 = vld [vmem:[%s0 + $0x8] sm:$0xff]
    %v60 = vld [vmem:[%s0 + $0x10] sm:$0xf]
    %v61 = vld [vmem:[%s0 + $0x14] sm:$0xff]
    %v62 = vld [vmem:[%s0 + $0x1c] sm:$0xff]
    %v63 = vld [vmem:[%s0 + $0x24] sm:$0xf]
    %v64 = vld [vmem:[%s0 + $0x28] sm:$0xff]
    %v65 = vld [vmem:[%s0 + $0x30] sm:$0xff]
    %v66 = vld [vmem:[%s0 + $0x38] sm:$0xf]
    %v67 = vld [vmem:[%s0 + $0x3c] sm:$0xff]
    %v68 = vld [vmem:[%s0 + $0x44] sm:$0xff]
    %v69 = vld [vmem:[%s0 + $0x4c] sm:$0xf]
    %v70 = vld [vmem:[%s1] sm:$0xf]
    %v71 = vld [vmem:[%s1 + $0x4] sm:$0xf]
    %v72 = vld [vmem:[%s1 + $0x8] sm:$0xf]
    %v73 = vld [vmem:[%s1 + $0xc] sm:$0xf]
    %v74 = vld [vmem:[%s1 + $0x10] sm:$0xf]
    %v75 = vld [vmem:[%s1 + $0x14] sm:$0xf]
    %v76 = vld [vmem:[%s1 + $0x18] sm:$0xf]
    %v77 = vld [vmem:[%s1 + $0x1c] sm:$0xf]
    %v78 = vld [vmem:[%s1 + $0x20] sm:$0xf]
    %v79 = vld [vmem:[%s1 + $0x24] sm:$0xf]
    %v80 = vld [vmem:[%s1 + $0x28] sm:$0xf]
    %v81 = vld [vmem:[%s1 + $0x2c] sm:$0xf]
    %v82 = vld [vmem:[%s1 + $0x30] sm:$0xf]
    %v83 = vld [vmem:[%s1 + $0x34] sm:$0xf]
    %v84 = vld [vmem:[%s1 + $0x38] sm:$0xf]
    %v85 = vld [vmem:[%s1 + $0x3c] sm:$0xf]
    %v86 = vld [vmem:[%s1 + $0x40] sm:$0xf]
    %v87 = vld [vmem:[%s1 + $0x44] sm:$0xf]
    %v88 = vld [vmem:[%s1 + $0x48] sm:$0xf]
    %v89 = vld [vmem:[%s1 + $0x4c] sm:$0xf]
    %v90 = vld [vmem:[%s1 + $0x50] sm:$0xf]
    %v91 = vld [vmem:[%s1 + $0x54] sm:$0xf]
    %v92 = vld [vmem:[%s1 + $0x58] sm:$0xf]
    %v93 = vld [vmem:[%s1 + $0x5c] sm:$0xf]
    %v94 = vld [vmem:[%s1 + $0x60] sm:$0xf]
    %v95 = vld [vmem:[%s1 + $0x64] sm:$0xf]
    %v96 = vld [vmem:[%s1 + $0x68] sm:$0xf]
    %v97 = vld [vmem:[%s1 + $0x6c] sm:$0xf]
    %v98 = vld [vmem:[%s1 + $0x70] sm:$0xf]
    %v99 = vld [vmem:[%s1 + $0x74] sm:$0xf]
    %v100 = vld [vmem:[%s1 + $0x78] sm:$0xf]
    %v101 = vld [vmem:[%s1 + $0x7c] sm:$0xf]
    %v102 = vld [vmem:[%s1 + $0x80] sm:$0xf]
    %v103 = vld [vmem:[%s1 + $0x84] sm:$0xf]
    %v104 = vld [vmem:[%s1 + $0x88] sm:$0xf]
    %v105 = vld [vmem:[%s1 + $0x8c] sm:$0xf]
    %v106 = vld [vmem:[%s1 + $0x90] sm:$0xf]
    %v107 = vld [vmem:[%s1 + $0x94] sm:$0xf]
    %v108 = vld [vmem:[%s1 + $0x98] sm:$0xf]
    %v109 = vld [vmem:[%s1 + $0x9c] sm:$0xf]
    %v110 = vld [vmem:[%s1 + $0xa0] sm:$0xf]
    %v111 = vld [vmem:[%s1 + $0xa4] sm:$0xf]
    %v112 = vld [vmem:[%s1 + $0xa8] sm:$0xf]
    %v113 = vld [vmem:[%s1 + $0xac] sm:$0xf]
    %v114 = vld [vmem:[%s1 + $0xb0] sm:$0xf]
    %v115 = vld [vmem:[%s1 + $0xb4] sm:$0xf]
    %v116 = vld [vmem:[%s1 + $0xb8] sm:$0xf]
    %v117 = vld [vmem:[%s1 + $0xbc] sm:$0xf]
    %v118 = vld [vmem:[%s1 + $0xc0] sm:$0xf]
    %v119 = vld [vmem:[%s1 + $0xc4] sm:$0xf]
    %v120 = vld [vmem:[%s1 + $0xc8] sm:$0xf]
    %v121 = vld [vmem:[%s1 + $0xcc] sm:$0xf]
    %v122 = vld [vmem:[%s1 + $0xd0] sm:$0xf]
    %v123 = vld [vmem:[%s1 + $0xd4] sm:$0xf]
    %v124 = vld [vmem:[%s1 + $0xd8] sm:$0xf]
    %v125 = vld [vmem:[%s1 + $0xdc] sm:$0xf]
    %v126 = vld [vmem:[%s1 + $0xe0] sm:$0xf]
    %v127 = vld [vmem:[%s1 + $0xe4] sm:$0xf]
    %v128 = vld [vmem:[%s1 + $0xe8] sm:$0xf]
    %v129 = vld [vmem:[%s1 + $0xec] sm:$0xf]
    %v130 = vld [vmem:[%s1 + $0xf0] sm:$0xf]
    %v131 = vld [vmem:[%s1 + $0xf4] sm:$0xf]
    %v132 = vld [vmem:[%s1 + $0xf8] sm:$0xf]
    %v133 = vld [vmem:[%s1 + $0xfc] sm:$0xf]
    %v134 = vld [vmem:[%s1 + $0x100] sm:$0xf]
    %v135 = vld [vmem:[%s1 + $0x104] sm:$0xf]
    %v136 = vld [vmem:[%s1 + $0x108] sm:$0xf]
    %v137 = vld [vmem:[%s1 + $0x10c] sm:$0xf]
    %v138 = vld [vmem:[%s1 + $0x110] sm:$0xf]
    %v139 = vld [vmem:[%s1 + $0x114] sm:$0xf]
    %v140 = vld [vmem:[%s1 + $0x118] sm:$0xf]
    %v141 = vld [vmem:[%s1 + $0x11c] sm:$0xf]
    %v142 = vld [vmem:[%s2] sm:$0x1]
    %v144 = vlaneseq
    %v145 = vshrl.u32 %v144, 7
    %v146 = vsub.s32 0, %v145
    %v147 = vrot.slane %v142, %v146
    %v161 = vunpack.c.l.b16 %v58
    %v162 = vunpack.c.h.b16 %v58
    %v163 = vunpack.c.l.b16 %v59
    %v164 = vunpack.c.h.b16 %v59
    %v165 = vunpack.c.l.b16 %v60
    %v166 = vunpack.c.l.b16 %v61
    %v167 = vunpack.c.h.b16 %v61
    %v168 = vunpack.c.l.b16 %v62
    %v169 = vunpack.c.h.b16 %v62
    %v170 = vunpack.c.l.b16 %v63
    %v171 = vunpack.c.l.b16 %v64
    %v172 = vunpack.c.h.b16 %v64
    %v173 = vunpack.c.l.b16 %v65
    %v174 = vunpack.c.h.b16 %v65
    %v175 = vunpack.c.l.b16 %v66
    %v176 = vunpack.c.l.b16 %v67
    %v177 = vunpack.c.h.b16 %v67
    %v178 = vunpack.c.l.b16 %v68
    %v179 = vunpack.c.h.b16 %v68
    %v180 = vunpack.c.l.b16 %v69
    %v181 = vpack.c.b16 %v166, %v161
    %v182 = vpack.c.b16 %v167, %v162
    %v183 = vpack.c.b16 %v168, %v163
    %v184 = vpack.c.b16 %v169, %v164
    %v185 = vpack.c.b16 %v170, %v165
    %v186 = vpack.c.b16 %v176, %v171
    %v187 = vpack.c.b16 %v177, %v172
    %v188 = vpack.c.b16 %v178, %v173
    %v189 = vpack.c.b16 %v179, %v174
    %v190 = vpack.c.b16 %v180, %v175
    %v271 = vunpack.c.l.b16 %v70
    %v272 = vunpack.c.l.b16 %v71
    %v273 = vunpack.c.l.b16 %v72
    %v274 = vunpack.c.l.b16 %v73
    %v275 = vunpack.c.l.b16 %v74
    %v276 = vunpack.c.l.b16 %v75
    %v277 = vunpack.c.l.b16 %v76
    %v278 = vunpack.c.l.b16 %v77
    %v279 = vunpack.c.l.b16 %v78
    %v280 = vunpack.c.l.b16 %v79
    %v281 = vunpack.c.l.b16 %v80
    %v282 = vunpack.c.l.b16 %v81
    %v283 = vunpack.c.l.b16 %v82
    %v284 = vunpack.c.l.b16 %v83
    %v285 = vunpack.c.l.b16 %v84
    %v286 = vunpack.c.l.b16 %v85
    %v287 = vunpack.c.l.b16 %v86
    %v288 = vunpack.c.l.b16 %v87
    %v289 = vunpack.c.l.b16 %v88
    %v290 = vunpack.c.l.b16 %v89
    %v291 = vunpack.c.l.b16 %v90
    %v292 = vunpack.c.l.b16 %v91
    %v293 = vunpack.c.l.b16 %v92
    %v294 = vunpack.c.l.b16 %v93
    %v295 = vunpack.c.l.b16 %v94
    %v296 = vunpack.c.l.b16 %v95
    %v297 = vunpack.c.l.b16 %v96
    %v298 = vunpack.c.l.b16 %v97
    %v299 = vunpack.c.l.b16 %v98
    %v300 = vunpack.c.l.b16 %v99
    %v301 = vunpack.c.l.b16 %v100
    %v302 = vunpack.c.l.b16 %v101
    %v303 = vunpack.c.l.b16 %v102
    %v304 = vunpack.c.l.b16 %v103
    %v305 = vunpack.c.l.b16 %v104
    %v306 = vunpack.c.l.b16 %v105
    %v307 = vunpack.c.l.b16 %v106
    %v308 = vunpack.c.l.b16 %v107
    %v309 = vunpack.c.l.b16 %v108
    %v310 = vunpack.c.l.b16 %v109
    %v311 = vunpack.c.l.b16 %v110
    %v312 = vunpack.c.l.b16 %v111
    %v313 = vunpack.c.l.b16 %v112
    %v314 = vunpack.c.l.b16 %v113
    %v315 = vunpack.c.l.b16 %v114
    %v316 = vunpack.c.l.b16 %v115
    %v317 = vunpack.c.l.b16 %v116
    %v318 = vunpack.c.l.b16 %v117
    %v319 = vunpack.c.l.b16 %v118
    %v320 = vunpack.c.l.b16 %v119
    %v321 = vunpack.c.l.b16 %v120
    %v322 = vunpack.c.l.b16 %v121
    %v323 = vunpack.c.l.b16 %v122
    %v324 = vunpack.c.l.b16 %v123
    %v325 = vunpack.c.l.b16 %v124
    %v326 = vunpack.c.l.b16 %v125
    %v327 = vunpack.c.l.b16 %v126
    %v328 = vunpack.c.l.b16 %v127
    %v329 = vunpack.c.l.b16 %v128
    %v330 = vunpack.c.l.b16 %v129
    %v331 = vunpack.c.l.b16 %v130
    %v332 = vunpack.c.l.b16 %v131
    %v333 = vunpack.c.l.b16 %v132
    %v334 = vunpack.c.l.b16 %v133
    %v335 = vunpack.c.l.b16 %v134
    %v336 = vunpack.c.l.b16 %v135
    %v337 = vunpack.c.l.b16 %v136
    %v338 = vunpack.c.l.b16 %v137
    %v339 = vunpack.c.l.b16 %v138
    %v340 = vunpack.c.l.b16 %v139
    %v341 = vunpack.c.l.b16 %v140
    %v342 = vunpack.c.l.b16 %v141
    %v343 = vpack.c.b16 %v272, %v271
    %v344 = vpack.c.b16 %v274, %v273
    %v345 = vpack.c.b16 %v276, %v275
    %v346 = vpack.c.b16 %v278, %v277
    %v347 = vpack.c.b16 %v280, %v279
    %v348 = vpack.c.b16 %v282, %v281
    %v349 = vpack.c.b16 %v284, %v283
    %v350 = vpack.c.b16 %v286, %v285
    %v351 = vpack.c.b16 %v288, %v287
    %v352 = vpack.c.b16 %v290, %v289
    %v353 = vpack.c.b16 %v292, %v291
    %v354 = vpack.c.b16 %v294, %v293
    %v355 = vpack.c.b16 %v296, %v295
    %v356 = vpack.c.b16 %v298, %v297
    %v357 = vpack.c.b16 %v300, %v299
    %v358 = vpack.c.b16 %v302, %v301
    %v359 = vpack.c.b16 %v304, %v303
    %v360 = vpack.c.b16 %v306, %v305
    %v361 = vpack.c.b16 %v308, %v307
    %v362 = vpack.c.b16 %v310, %v309
    %v363 = vpack.c.b16 %v312, %v311
    %v364 = vpack.c.b16 %v314, %v313
    %v365 = vpack.c.b16 %v316, %v315
    %v366 = vpack.c.b16 %v318, %v317
    %v367 = vpack.c.b16 %v320, %v319
    %v368 = vpack.c.b16 %v322, %v321
    %v369 = vpack.c.b16 %v324, %v323
    %v370 = vpack.c.b16 %v326, %v325
    %v371 = vpack.c.b16 %v328, %v327
    %v372 = vpack.c.b16 %v330, %v329
    %v373 = vpack.c.b16 %v332, %v331
    %v374 = vpack.c.b16 %v334, %v333
    %v375 = vpack.c.b16 %v336, %v335
    %v376 = vpack.c.b16 %v338, %v337
    %v377 = vpack.c.b16 %v340, %v339
    %v378 = vpack.c.b16 %v342, %v341
    %vm415 = vcmask 523264
    %v417 = vsel %vm415, %v185, 0
    %v420 = vsel %vm415, %v190, 0
    %422 = vmatprep.subr.bf16.mxu0 0
    %423 = vmatpush1.bf16.msra.mxu0 %v350
    %424 = vmatprep.subr.bf16.mxu0 0
    %425 = vmatpush1.bf16.msra.mxu0 %v349
    %426 = vmatprep.subr.bf16.mxu0 0
    %427 = vmatpush1.bf16.msra.mxu0 %v348
    %428 = vmatprep.subr.bf16.mxu0 0
    %429 = vmatpush1.bf16.msra.mxu0 %v347
    %430 = vmatprep.subr.bf16.mxu0 0
    %431 = vmatpush1.bf16.msra.mxu0 %v346
    %432 = vmatprep.subr.bf16.mxu0 0
    %433 = vmatpush1.bf16.msra.mxu0 %v345
    %434 = vmatprep.subr.bf16.mxu0 0
    %435 = vmatpush1.bf16.msra.mxu0 %v344
    %436 = vmatprep.subr.bf16.mxu0 0
    %437 = vmatpush1.bf16.msra.mxu0 %v343
    %438 = vmatprep.subr.bf16.mxu0 0
    %439 = vmatpush2.bf16.msra.mxu0 %v358
    %440 = vmatprep.subr.bf16.mxu0 0
    %441 = vmatpush2.bf16.msra.mxu0 %v357
    %442 = vmatprep.subr.bf16.mxu0 0
    %443 = vmatpush2.bf16.msra.mxu0 %v356
    %444 = vmatprep.subr.bf16.mxu0 0
    %445 = vmatpush2.bf16.msra.mxu0 %v355
    %446 = vmatprep.subr.bf16.mxu0 0
    %447 = vmatpush2.bf16.msra.mxu0 %v354
    %448 = vmatprep.subr.bf16.mxu0 0
    %449 = vmatpush2.bf16.msra.mxu0 %v353
    %450 = vmatprep.subr.bf16.mxu0 0
    %451 = vmatpush2.bf16.msra.mxu0 %v352
    %452 = vmatprep.subr.bf16.mxu0 0
    %453 = vmatpush2.bf16.msra.mxu0 %v351
    %454 = vmatprep.mubr.bf16.mxu0 %v182
    %455 = vmatmul.mubr.bf16.gmra.mxu0 %v181
    %v456 = vpop.f32.mrf.mxu0
    %v457 = vadd.f32 %v147, %v456
    %v458 = vpop.f32.mrf.mxu0
    %v459 = vpop.f32.mrf.mxu0
    %v460 = vadd.f32 %v147, %v459
    %v461 = vpop.f32.mrf.mxu0
    %462 = vmatprep.mubr.bf16.mxu0 %v187
    %463 = vmatmul.mubr.bf16.gmra.mxu0 %v186
    %v464 = vpop.f32.mrf.mxu0
    %v465 = vadd.f32 %v147, %v464
    %v466 = vpop.f32.mrf.mxu0
    %v467 = vpop.f32.mrf.mxu0
    %v468 = vadd.f32 %v147, %v467
    %v469 = vpop.f32.mrf.mxu0
    %470 = vdwg.mxu0
    %471 = vmatprep.subr.bf16.mxu0 0
    %472 = vmatpush1.bf16.msra.mxu0 %v366
    %473 = vmatprep.subr.bf16.mxu0 0
    %474 = vmatpush1.bf16.msra.mxu0 %v365
    %475 = vmatprep.subr.bf16.mxu0 0
    %476 = vmatpush1.bf16.msra.mxu0 %v364
    %477 = vmatprep.subr.bf16.mxu0 0
    %478 = vmatpush1.bf16.msra.mxu0 %v363
    %479 = vmatprep.subr.bf16.mxu0 0
    %480 = vmatpush1.bf16.msra.mxu0 %v362
    %481 = vmatprep.subr.bf16.mxu0 0
    %482 = vmatpush1.bf16.msra.mxu0 %v361
    %483 = vmatprep.subr.bf16.mxu0 0
    %484 = vmatpush1.bf16.msra.mxu0 %v360
    %485 = vmatprep.subr.bf16.mxu0 0
    %486 = vmatpush1.bf16.msra.mxu0 %v359
    %487 = vmatprep.subr.bf16.mxu0 0
    %488 = vmatpush2.bf16.msra.mxu0 %v374
    %489 = vmatprep.subr.bf16.mxu0 0
    %490 = vmatpush2.bf16.msra.mxu0 %v373
    %491 = vmatprep.subr.bf16.mxu0 0
    %492 = vmatpush2.bf16.msra.mxu0 %v372
    %493 = vmatprep.subr.bf16.mxu0 0
    %494 = vmatpush2.bf16.msra.mxu0 %v371
    %495 = vmatprep.subr.bf16.mxu0 0
    %496 = vmatpush2.bf16.msra.mxu0 %v370
    %497 = vmatprep.subr.bf16.mxu0 0
    %498 = vmatpush2.bf16.msra.mxu0 %v369
    %499 = vmatprep.subr.bf16.mxu0 0
    %500 = vmatpush2.bf16.msra.mxu0 %v368
    %501 = vmatprep.subr.bf16.mxu0 0
    %502 = vmatpush2.bf16.msra.mxu0 %v367
    %503 = vmatprep.mubr.bf16.mxu0 %v184
    %504 = vmatmul.mubr.bf16.gmra.mxu0 %v183
    %v505 = vpop.f32.mrf.mxu0
    %v506 = vadd.f32 %v457, %v505
    %v507 = vpop.f32.mrf.mxu0
    %v508 = vpop.f32.mrf.mxu0
    %v509 = vadd.f32 %v460, %v508
    %v510 = vpop.f32.mrf.mxu0
    %511 = vmatprep.mubr.bf16.mxu0 %v189
    %512 = vmatmul.mubr.bf16.gmra.mxu0 %v188
    %v513 = vpop.f32.mrf.mxu0
    %v514 = vadd.f32 %v465, %v513
    %v515 = vpop.f32.mrf.mxu0
    %v516 = vpop.f32.mrf.mxu0
    %v517 = vadd.f32 %v468, %v516
    %v518 = vpop.f32.mrf.mxu0
    %519 = vdwg.mxu0
    %520 = vmatprep.subr.bf16.mxu0 0
    %521 = vmatpush1.bf16.msra.mxu0 0
    %522 = vmatprep.subr.bf16.mxu0 0
    %523 = vmatpush1.bf16.msra.mxu0 0
    %524 = vmatprep.subr.bf16.mxu0 0
    %525 = vmatpush1.bf16.msra.mxu0 0
    %526 = vmatprep.subr.bf16.mxu0 0
    %527 = vmatpush1.bf16.msra.mxu0 0
    %528 = vmatprep.subr.bf16.mxu0 0
    %529 = vmatpush1.bf16.msra.mxu0 %v378
    %530 = vmatprep.subr.bf16.mxu0 0
    %531 = vmatpush1.bf16.msra.mxu0 %v377
    %532 = vmatprep.subr.bf16.mxu0 0
    %533 = vmatpush1.bf16.msra.mxu0 %v376
    %534 = vmatprep.subr.bf16.mxu0 0
    %535 = vmatpush1.bf16.msra.mxu0 %v375
    %536 = vmatprep.subr.bf16.mxu0 0
    %537 = vmatpush2.bf16.msra.mxu0 0
    %538 = vmatprep.subr.bf16.mxu0 0
    %539 = vmatpush2.bf16.msra.mxu0 0
    %540 = vmatprep.subr.bf16.mxu0 0
    %541 = vmatpush2.bf16.msra.mxu0 0
    %542 = vmatprep.subr.bf16.mxu0 0
    %543 = vmatpush2.bf16.msra.mxu0 0
    %544 = vmatprep.subr.bf16.mxu0 0
    %545 = vmatpush2.bf16.msra.mxu0 0
    %546 = vmatprep.subr.bf16.mxu0 0
    %547 = vmatpush2.bf16.msra.mxu0 0
    %548 = vmatprep.subr.bf16.mxu0 0
    %549 = vmatpush2.bf16.msra.mxu0 0
    %550 = vmatprep.subr.bf16.mxu0 0
    %551 = vmatpush2.bf16.msra.mxu0 0
    %552 = vmatprep.mubr.bf16.mxu0 0
    %553 = vmatmul.mubr.bf16.gmra.mxu0 %v417
    %v554 = vpop.f32.mrf.mxu0
    %v555 = vadd.f32 %v506, %v554
    %v556 = vpop.f32.mrf.mxu0
    %v557 = vpop.f32.mrf.mxu0
    %v558 = vadd.f32 %v509, %v557
    %v559 = vpop.f32.mrf.mxu0
    %560 = vmatprep.mubr.bf16.mxu0 0
    %561 = vmatmul.mubr.bf16.gmra.mxu0 %v420
    %v562 = vpop.f32.mrf.mxu0
    %v563 = vadd.f32 %v514, %v562
    %v564 = vpop.f32.mrf.mxu0
    %v565 = vpop.f32.mrf.mxu0
    %v566 = vadd.f32 %v517, %v565
    %v567 = vpop.f32.mrf.mxu0
    %568 = vdwg.mxu0
    %vm569 = vcmp.gt.f32.partialorder %v555, 0.0
    %vm570 = vcmp.gt.f32.partialorder %v558, 0.0
    %vm571 = vcmp.gt.f32.partialorder %v563, 0.0
    %vm572 = vcmp.gt.f32.partialorder %v566, 0.0
    %v573 = vmul.f32 %v555, 0.2
    %v574 = vmul.f32 %v558, 0.2
    %v575 = vmul.f32 %v563, 0.2
    %v576 = vmul.f32 %v566, 0.2
    %v577 = vsel %vm569, %v555, %v573
    %v578 = vsel %vm570, %v558, %v574
    %v579 = vsel %vm571, %v563, %v575
    %v580 = vsel %vm572, %v566, %v576
    %v581 = vld [vmem:[%s3] sm:$0x1]
    %v583 = vlaneseq
    %v584 = vshrl.u32 %v583, 7
    %v585 = vsub.s32 0, %v584
    %v586 = vrot.slane %v581, %v585
    %v588 = vadd.f32 %v577, %v586
    %v589 = vadd.f32 %v578, %v586
    %v590 = vadd.f32 %v579, %v586
    %v591 = vadd.f32 %v580, %v586
    %v592 = vpack.c.bf16 %v589, %v588
    %v593 = vpack.c.bf16 %v591, %v590
    %v594 = vld [vmem:[%s4] sm:$0xff]
    %v595 = vld [vmem:[%s4 + $0x8] sm:$0xff]
    %v596 = vld [vmem:[%s4 + $0x10] sm:$0xff]
    %v597 = vld [vmem:[%s4 + $0x18] sm:$0xff]
    %v598 = vld [vmem:[%s4 + $0x20] sm:$0xff]
    %v599 = vld [vmem:[%s4 + $0x28] sm:$0xff]
    %v600 = vld [vmem:[%s4 + $0x30] sm:$0xff]
    %v601 = vld [vmem:[%s4 + $0x38] sm:$0xff]
    %v602 = vld [vmem:[%s4 + $0x40] sm:$0xff]
    %v603 = vld [vmem:[%s4 + $0x48] sm:$0xff]
    %v604 = vld [vmem:[%s4 + $0x50] sm:$0xff]
    %v605 = vld [vmem:[%s4 + $0x58] sm:$0xff]
    %v606 = vld [vmem:[%s4 + $0x60] sm:$0xff]
    %v607 = vld [vmem:[%s4 + $0x68] sm:$0xff]
    %v608 = vld [vmem:[%s4 + $0x70] sm:$0xff]
    %v609 = vld [vmem:[%s4 + $0x78] sm:$0xff]
    %v610 = vld [vmem:[%s4 + $0x80] sm:$0xff]
    %v611 = vld [vmem:[%s4 + $0x88] sm:$0xff]
    %v612 = vld [vmem:[%s4 + $0x90] sm:$0xff]
    %v613 = vld [vmem:[%s4 + $0x98] sm:$0xff]
    %v614 = vld [vmem:[%s4 + $0xa0] sm:$0xff]
    %v615 = vld [vmem:[%s4 + $0xa8] sm:$0xff]
    %v616 = vld [vmem:[%s4 + $0xb0] sm:$0xff]
    %v617 = vld [vmem:[%s4 + $0xb8] sm:$0xff]
    %v618 = vld [vmem:[%s4 + $0xc0] sm:$0xff]
    %v619 = vld [vmem:[%s4 + $0xc8] sm:$0xff]
    %v620 = vld [vmem:[%s4 + $0xd0] sm:$0xff]
    %v621 = vld [vmem:[%s4 + $0xd8] sm:$0xff]
    %v622 = vld [vmem:[%s4 + $0xe0] sm:$0xff]
    %v623 = vld [vmem:[%s4 + $0xe8] sm:$0xff]
    %v624 = vld [vmem:[%s4 + $0xf0] sm:$0xff]
    %v625 = vld [vmem:[%s4 + $0xf8] sm:$0xff]
    %v627 = vrot.slane %v592, 1
    %v645 = vunpack.c.l.b16 %v610
    %v646 = vunpack.c.h.b16 %v610
    %v647 = vunpack.c.l.b16 %v611
    %v648 = vunpack.c.h.b16 %v611
    %v649 = vunpack.c.l.b16 %v612
    %v650 = vunpack.c.h.b16 %v612
    %v651 = vunpack.c.l.b16 %v613
    %v652 = vunpack.c.h.b16 %v613
    %v653 = vunpack.c.l.b16 %v614
    %v654 = vunpack.c.h.b16 %v614
    %v655 = vunpack.c.l.b16 %v615
    %v656 = vunpack.c.h.b16 %v615
    %v657 = vunpack.c.l.b16 %v616
    %v658 = vunpack.c.h.b16 %v616
    %v659 = vunpack.c.l.b16 %v617
    %v660 = vunpack.c.h.b16 %v617
    %v661 = vunpack.c.l.b16 %v618
    %v662 = vunpack.c.h.b16 %v618
    %v663 = vunpack.c.l.b16 %v619
    %v664 = vunpack.c.h.b16 %v619
    %v665 = vunpack.c.l.b16 %v620
    %v666 = vunpack.c.h.b16 %v620
    %v667 = vunpack.c.l.b16 %v621
    %v668 = vunpack.c.h.b16 %v621
    %v669 = vunpack.c.l.b16 %v622
    %v670 = vunpack.c.h.b16 %v622
    %v671 = vunpack.c.l.b16 %v623
    %v672 = vunpack.c.h.b16 %v623
    %v673 = vunpack.c.l.b16 %v624
    %v674 = vunpack.c.h.b16 %v624
    %v675 = vunpack.c.l.b16 %v625
    %v676 = vunpack.c.h.b16 %v625
    %v677 = vpack.c.b16 %v647, %v645
    %v678 = vpack.c.b16 %v648, %v646
    %v679 = vpack.c.b16 %v651, %v649
    %v680 = vpack.c.b16 %v652, %v650
    %v681 = vpack.c.b16 %v655, %v653
    %v682 = vpack.c.b16 %v656, %v654
    %v683 = vpack.c.b16 %v659, %v657
    %v684 = vpack.c.b16 %v660, %v658
    %v685 = vpack.c.b16 %v663, %v661
    %v686 = vpack.c.b16 %v664, %v662
    %v687 = vpack.c.b16 %v667, %v665
    %v688 = vpack.c.b16 %v668, %v666
    %v689 = vpack.c.b16 %v671, %v669
    %v690 = vpack.c.b16 %v672, %v670
    %v691 = vpack.c.b16 %v675, %v673
    %v692 = vpack.c.b16 %v676, %v674
    %709 = vmatprep.subr.bf16.mxu0 %v692
    %710 = vmatpush1.bf16.msra.mxu0 %v691
    %711 = vmatprep.subr.bf16.mxu0 %v690
    %712 = vmatpush1.bf16.msra.mxu0 %v689
    %713 = vmatprep.subr.bf16.mxu0 %v688
    %714 = vmatpush1.bf16.msra.mxu0 %v687
    %715 = vmatprep.subr.bf16.mxu0 %v686
    %716 = vmatpush1.bf16.msra.mxu0 %v685
    %717 = vmatprep.subr.bf16.mxu0 %v684
    %718 = vmatpush1.bf16.msra.mxu0 %v683
    %719 = vmatprep.subr.bf16.mxu0 %v682
    %720 = vmatpush1.bf16.msra.mxu0 %v681
    %721 = vmatprep.subr.bf16.mxu0 %v680
    %722 = vmatpush1.bf16.msra.mxu0 %v679
    %723 = vmatprep.subr.bf16.mxu0 %v678
    %724 = vmatpush1.bf16.msra.mxu0 %v677
    %725 = vmatprep.subr.bf16.mxu0 0
    %726 = vmatpush2.bf16.msra.mxu0 0
    %727 = vmatprep.subr.bf16.mxu0 0
    %728 = vmatpush2.bf16.msra.mxu0 0
    %729 = vmatprep.subr.bf16.mxu0 0
    %730 = vmatpush2.bf16.msra.mxu0 0
    %731 = vmatprep.subr.bf16.mxu0 0
    %732 = vmatpush2.bf16.msra.mxu0 0
    %733 = vmatprep.subr.bf16.mxu0 0
    %734 = vmatpush2.bf16.msra.mxu0 0
    %735 = vmatprep.subr.bf16.mxu0 0
    %736 = vmatpush2.bf16.msra.mxu0 0
    %737 = vmatprep.subr.bf16.mxu0 0
    %738 = vmatpush2.bf16.msra.mxu0 0
    %739 = vmatprep.subr.bf16.mxu0 0
    %740 = vmatpush2.bf16.msra.mxu0 0
    %741 = vmatprep.mubr.bf16.mxu0 0
    %742 = vmatmul.mubr.bf16.gmra.mxu0 %v627
    %v743 = vpop.f32.mrf.mxu0
    %v744 = vadd.f32 0.0, %v743
    %v745 = vpop.f32.mrf.mxu0
    %v746 = vadd.f32 0.0, %v745
    %v747 = vpop.f32.mrf.mxu0
    %v748 = vpop.f32.mrf.mxu0
    %749 = vdwg.mxu0
    %v766 = vunpack.c.l.b16 %v594
    %v767 = vunpack.c.h.b16 %v594
    %v768 = vunpack.c.l.b16 %v595
    %v769 = vunpack.c.h.b16 %v595
    %v770 = vunpack.c.l.b16 %v596
    %v771 = vunpack.c.h.b16 %v596
    %v772 = vunpack.c.l.b16 %v597
    %v773 = vunpack.c.h.b16 %v597
    %v774 = vunpack.c.l.b16 %v598
    %v775 = vunpack.c.h.b16 %v598
    %v776 = vunpack.c.l.b16 %v599
    %v777 = vunpack.c.h.b16 %v599
    %v778 = vunpack.c.l.b16 %v600
    %v779 = vunpack.c.h.b16 %v600
    %v780 = vunpack.c.l.b16 %v601
    %v781 = vunpack.c.h.b16 %v601
    %v782 = vunpack.c.l.b16 %v602
    %v783 = vunpack.c.h.b16 %v602
    %v784 = vunpack.c.l.b16 %v603
    %v785 = vunpack.c.h.b16 %v603
    %v786 = vunpack.c.l.b16 %v604
    %v787 = vunpack.c.h.b16 %v604
    %v788 = vunpack.c.l.b16 %v605
    %v789 = vunpack.c.h.b16 %v605
    %v790 = vunpack.c.l.b16 %v606
    %v791 = vunpack.c.h.b16 %v606
    %v792 = vunpack.c.l.b16 %v607
    %v793 = vunpack.c.h.b16 %v607
    %v794 = vunpack.c.l.b16 %v608
    %v795 = vunpack.c.h.b16 %v608
    %v796 = vunpack.c.l.b16 %v609
    %v797 = vunpack.c.h.b16 %v609
    %v798 = vpack.c.b16 %v768, %v766
    %v799 = vpack.c.b16 %v769, %v767
    %v800 = vpack.c.b16 %v772, %v770
    %v801 = vpack.c.b16 %v773, %v771
    %v802 = vpack.c.b16 %v776, %v774
    %v803 = vpack.c.b16 %v777, %v775
    %v804 = vpack.c.b16 %v780, %v778
    %v805 = vpack.c.b16 %v781, %v779
    %v806 = vpack.c.b16 %v784, %v782
    %v807 = vpack.c.b16 %v785, %v783
    %v808 = vpack.c.b16 %v788, %v786
    %v809 = vpack.c.b16 %v789, %v787
    %v810 = vpack.c.b16 %v792, %v790
    %v811 = vpack.c.b16 %v793, %v791
    %v812 = vpack.c.b16 %v796, %v794
    %v813 = vpack.c.b16 %v797, %v795
    %830 = vmatprep.subr.bf16.mxu0 %v813
    %831 = vmatpush1.bf16.msra.mxu0 %v812
    %832 = vmatprep.subr.bf16.mxu0 %v811
    %833 = vmatpush1.bf16.msra.mxu0 %v810
    %834 = vmatprep.subr.bf16.mxu0 %v809
    %835 = vmatpush1.bf16.msra.mxu0 %v808
    %836 = vmatprep.subr.bf16.mxu0 %v807
    %837 = vmatpush1.bf16.msra.mxu0 %v806
    %838 = vmatprep.subr.bf16.mxu0 %v805
    %839 = vmatpush1.bf16.msra.mxu0 %v804
    %840 = vmatprep.subr.bf16.mxu0 %v803
    %841 = vmatpush1.bf16.msra.mxu0 %v802
    %842 = vmatprep.subr.bf16.mxu0 %v801
    %843 = vmatpush1.bf16.msra.mxu0 %v800
    %844 = vmatprep.subr.bf16.mxu0 %v799
    %845 = vmatpush1.bf16.msra.mxu0 %v798
    %846 = vmatprep.subr.bf16.mxu0 0
    %847 = vmatpush2.bf16.msra.mxu0 0
    %848 = vmatprep.subr.bf16.mxu0 0
    %849 = vmatpush2.bf16.msra.mxu0 0
    %850 = vmatprep.subr.bf16.mxu0 0
    %851 = vmatpush2.bf16.msra.mxu0 0
    %852 = vmatprep.subr.bf16.mxu0 0
    %853 = vmatpush2.bf16.msra.mxu0 0
    %854 = vmatprep.subr.bf16.mxu0 0
    %855 = vmatpush2.bf16.msra.mxu0 0
    %856 = vmatprep.subr.bf16.mxu0 0
    %857 = vmatpush2.bf16.msra.mxu0 0
    %858 = vmatprep.subr.bf16.mxu0 0
    %859 = vmatpush2.bf16.msra.mxu0 0
    %860 = vmatprep.subr.bf16.mxu0 0
    %861 = vmatpush2.bf16.msra.mxu0 0
    %862 = vmatprep.mubr.bf16.mxu0 0
    %863 = vmatmul.mubr.bf16.gmra.mxu0 %v592
    %v864 = vpop.f32.mrf.mxu0
    %v865 = vadd.f32 %v744, %v864
    %v866 = vpop.f32.mrf.mxu0
    %v867 = vadd.f32 %v746, %v866
    %v868 = vpop.f32.mrf.mxu0
    %v869 = vpop.f32.mrf.mxu0
    %870 = vdwg.mxu0
    %v871 = vld [vmem:[%s4 + $0x100] sm:$0xff]
    %v872 = vld [vmem:[%s4 + $0x108] sm:$0xff]
    %v873 = vld [vmem:[%s4 + $0x110] sm:$0xff]
    %v874 = vld [vmem:[%s4 + $0x118] sm:$0xff]
    %v875 = vld [vmem:[%s4 + $0x120] sm:$0xff]
    %v876 = vld [vmem:[%s4 + $0x128] sm:$0xff]
    %v877 = vld [vmem:[%s4 + $0x130] sm:$0xff]
    %v878 = vld [vmem:[%s4 + $0x138] sm:$0xff]
    %v879 = vld [vmem:[%s4 + $0x140] sm:$0xff]
    %v880 = vld [vmem:[%s4 + $0x148] sm:$0xff]
    %v881 = vld [vmem:[%s4 + $0x150] sm:$0xff]
    %v882 = vld [vmem:[%s4 + $0x158] sm:$0xff]
    %v883 = vld [vmem:[%s4 + $0x160] sm:$0xff]
    %v884 = vld [vmem:[%s4 + $0x168] sm:$0xff]
    %v885 = vld [vmem:[%s4 + $0x170] sm:$0xff]
    %v886 = vld [vmem:[%s4 + $0x178] sm:$0xff]
    %v887 = vrot.slane %v592, 4
    %v905 = vunpack.c.l.b16 %v871
    %v906 = vunpack.c.h.b16 %v871
    %v907 = vunpack.c.l.b16 %v872
    %v908 = vunpack.c.h.b16 %v872
    %v909 = vunpack.c.l.b16 %v873
    %v910 = vunpack.c.h.b16 %v873
    %v911 = vunpack.c.l.b16 %v874
    %v912 = vunpack.c.h.b16 %v874
    %v913 = vunpack.c.l.b16 %v875
    %v914 = vunpack.c.h.b16 %v875
    %v915 = vunpack.c.l.b16 %v876
    %v916 = vunpack.c.h.b16 %v876
    %v917 = vunpack.c.l.b16 %v877
    %v918 = vunpack.c.h.b16 %v877
    %v919 = vunpack.c.l.b16 %v878
    %v920 = vunpack.c.h.b16 %v878
    %v921 = vunpack.c.l.b16 %v879
    %v922 = vunpack.c.h.b16 %v879
    %v923 = vunpack.c.l.b16 %v880
    %v924 = vunpack.c.h.b16 %v880
    %v925 = vunpack.c.l.b16 %v881
    %v926 = vunpack.c.h.b16 %v881
    %v927 = vunpack.c.l.b16 %v882
    %v928 = vunpack.c.h.b16 %v882
    %v929 = vunpack.c.l.b16 %v883
    %v930 = vunpack.c.h.b16 %v883
    %v931 = vunpack.c.l.b16 %v884
    %v932 = vunpack.c.h.b16 %v884
    %v933 = vunpack.c.l.b16 %v885
    %v934 = vunpack.c.h.b16 %v885
    %v935 = vunpack.c.l.b16 %v886
    %v936 = vunpack.c.h.b16 %v886
    %v937 = vpack.c.b16 %v907, %v905
    %v938 = vpack.c.b16 %v908, %v906
    %v939 = vpack.c.b16 %v911, %v909
    %v940 = vpack.c.b16 %v912, %v910
    %v941 = vpack.c.b16 %v915, %v913
    %v942 = vpack.c.b16 %v916, %v914
    %v943 = vpack.c.b16 %v919, %v917
    %v944 = vpack.c.b16 %v920, %v918
    %v945 = vpack.c.b16 %v923, %v921
    %v946 = vpack.c.b16 %v924, %v922
    %v947 = vpack.c.b16 %v927, %v925
    %v948 = vpack.c.b16 %v928, %v926
    %v949 = vpack.c.b16 %v931, %v929
    %v950 = vpack.c.b16 %v932, %v930
    %v951 = vpack.c.b16 %v935, %v933
    %v952 = vpack.c.b16 %v936, %v934
    %969 = vmatprep.subr.bf16.mxu0 %v952
    %970 = vmatpush1.bf16.msra.mxu0 %v951
    %971 = vmatprep.subr.bf16.mxu0 %v950
    %972 = vmatpush1.bf16.msra.mxu0 %v949
    %973 = vmatprep.subr.bf16.mxu0 %v948
    %974 = vmatpush1.bf16.msra.mxu0 %v947
    %975 = vmatprep.subr.bf16.mxu0 %v946
    %976 = vmatpush1.bf16.msra.mxu0 %v945
    %977 = vmatprep.subr.bf16.mxu0 %v944
    %978 = vmatpush1.bf16.msra.mxu0 %v943
    %979 = vmatprep.subr.bf16.mxu0 %v942
    %980 = vmatpush1.bf16.msra.mxu0 %v941
    %981 = vmatprep.subr.bf16.mxu0 %v940
    %982 = vmatpush1.bf16.msra.mxu0 %v939
    %983 = vmatprep.subr.bf16.mxu0 %v938
    %984 = vmatpush1.bf16.msra.mxu0 %v937
    %985 = vmatprep.subr.bf16.mxu0 0
    %986 = vmatpush2.bf16.msra.mxu0 0
    %987 = vmatprep.subr.bf16.mxu0 0
    %988 = vmatpush2.bf16.msra.mxu0 0
    %989 = vmatprep.subr.bf16.mxu0 0
    %990 = vmatpush2.bf16.msra.mxu0 0
    %991 = vmatprep.subr.bf16.mxu0 0
    %992 = vmatpush2.bf16.msra.mxu0 0
    %993 = vmatprep.subr.bf16.mxu0 0
    %994 = vmatpush2.bf16.msra.mxu0 0
    %995 = vmatprep.subr.bf16.mxu0 0
    %996 = vmatpush2.bf16.msra.mxu0 0
    %997 = vmatprep.subr.bf16.mxu0 0
    %998 = vmatpush2.bf16.msra.mxu0 0
    %999 = vmatprep.subr.bf16.mxu0 0
    %1000 = vmatpush2.bf16.msra.mxu0 0
    %1001 = vmatprep.mubr.bf16.mxu0 0
    %1002 = vmatmul.mubr.bf16.gmra.mxu0 %v887
    %v1003 = vpop.f32.mrf.mxu0
    %v1004 = vadd.f32 0.0, %v1003
    %v1005 = vpop.f32.mrf.mxu0
    %v1006 = vadd.f32 0.0, %v1005
    %v1007 = vpop.f32.mrf.mxu0
    %v1008 = vpop.f32.mrf.mxu0
    %1009 = vdwg.mxu0
    %v1010 = vadd.f32 %v865, %v1004
    %v1011 = vadd.f32 %v867, %v1006
    %v1012 = vld [vmem:[%s4 + $0x180] sm:$0xff]
    %v1013 = vld [vmem:[%s4 + $0x188] sm:$0xff]
    %v1014 = vld [vmem:[%s4 + $0x190] sm:$0xff]
    %v1015 = vld [vmem:[%s4 + $0x198] sm:$0xff]
    %v1016 = vld [vmem:[%s4 + $0x1a0] sm:$0xff]
    %v1017 = vld [vmem:[%s4 + $0x1a8] sm:$0xff]
    %v1018 = vld [vmem:[%s4 + $0x1b0] sm:$0xff]
    %v1019 = vld [vmem:[%s4 + $0x1b8] sm:$0xff]
    %v1020 = vld [vmem:[%s4 + $0x1c0] sm:$0xff]
    %v1021 = vld [vmem:[%s4 + $0x1c8] sm:$0xff]
    %v1022 = vld [vmem:[%s4 + $0x1d0] sm:$0xff]
    %v1023 = vld [vmem:[%s4 + $0x1d8] sm:$0xff]
    %v1024 = vld [vmem:[%s4 + $0x1e0] sm:$0xff]
    %v1025 = vld [vmem:[%s4 + $0x1e8] sm:$0xff]
    %v1026 = vld [vmem:[%s4 + $0x1f0] sm:$0xff]
    %v1027 = vld [vmem:[%s4 + $0x1f8] sm:$0xff]
    %v1028 = vrot.slane %v592, 5
    %v1046 = vunpack.c.l.b16 %v1012
    %v1047 = vunpack.c.h.b16 %v1012
    %v1048 = vunpack.c.l.b16 %v1013
    %v1049 = vunpack.c.h.b16 %v1013
    %v1050 = vunpack.c.l.b16 %v1014
    %v1051 = vunpack.c.h.b16 %v1014
    %v1052 = vunpack.c.l.b16 %v1015
    %v1053 = vunpack.c.h.b16 %v1015
    %v1054 = vunpack.c.l.b16 %v1016
    %v1055 = vunpack.c.h.b16 %v1016
    %v1056 = vunpack.c.l.b16 %v1017
    %v1057 = vunpack.c.h.b16 %v1017
    %v1058 = vunpack.c.l.b16 %v1018
    %v1059 = vunpack.c.h.b16 %v1018
    %v1060 = vunpack.c.l.b16 %v1019
    %v1061 = vunpack.c.h.b16 %v1019
    %v1062 = vunpack.c.l.b16 %v1020
    %v1063 = vunpack.c.h.b16 %v1020
    %v1064 = vunpack.c.l.b16 %v1021
    %v1065 = vunpack.c.h.b16 %v1021
    %v1066 = vunpack.c.l.b16 %v1022
    %v1067 = vunpack.c.h.b16 %v1022
    %v1068 = vunpack.c.l.b16 %v1023
    %v1069 = vunpack.c.h.b16 %v1023
    %v1070 = vunpack.c.l.b16 %v1024
    %v1071 = vunpack.c.h.b16 %v1024
    %v1072 = vunpack.c.l.b16 %v1025
    %v1073 = vunpack.c.h.b16 %v1025
    %v1074 = vunpack.c.l.b16 %v1026
    %v1075 = vunpack.c.h.b16 %v1026
    %v1076 = vunpack.c.l.b16 %v1027
    %v1077 = vunpack.c.h.b16 %v1027
    %v1078 = vpack.c.b16 %v1048, %v1046
    %v1079 = vpack.c.b16 %v1049, %v1047
    %v1080 = vpack.c.b16 %v1052, %v1050
    %v1081 = vpack.c.b16 %v1053, %v1051
    %v1082 = vpack.c.b16 %v1056, %v1054
    %v1083 = vpack.c.b16 %v1057, %v1055
    %v1084 = vpack.c.b16 %v1060, %v1058
    %v1085 = vpack.c.b16 %v1061, %v1059
    %v1086 = vpack.c.b16 %v1064, %v1062
    %v1087 = vpack.c.b16 %v1065, %v1063
    %v1088 = vpack.c.b16 %v1068, %v1066
    %v1089 = vpack.c.b16 %v1069, %v1067
    %v1090 = vpack.c.b16 %v1072, %v1070
    %v1091 = vpack.c.b16 %v1073, %v1071
    %v1092 = vpack.c.b16 %v1076, %v1074
    %v1093 = vpack.c.b16 %v1077, %v1075
    %1110 = vmatprep.subr.bf16.mxu0 %v1093
    %1111 = vmatpush1.bf16.msra.mxu0 %v1092
    %1112 = vmatprep.subr.bf16.mxu0 %v1091
    %1113 = vmatpush1.bf16.msra.mxu0 %v1090
    %1114 = vmatprep.subr.bf16.mxu0 %v1089
    %1115 = vmatpush1.bf16.msra.mxu0 %v1088
    %1116 = vmatprep.subr.bf16.mxu0 %v1087
    %1117 = vmatpush1.bf16.msra.mxu0 %v1086
    %1118 = vmatprep.subr.bf16.mxu0 %v1085
    %1119 = vmatpush1.bf16.msra.mxu0 %v1084
    %1120 = vmatprep.subr.bf16.mxu0 %v1083
    %1121 = vmatpush1.bf16.msra.mxu0 %v1082
    %1122 = vmatprep.subr.bf16.mxu0 %v1081
    %1123 = vmatpush1.bf16.msra.mxu0 %v1080
    %1124 = vmatprep.subr.bf16.mxu0 %v1079
    %1125 = vmatpush1.bf16.msra.mxu0 %v1078
    %1126 = vmatprep.subr.bf16.mxu0 0
    %1127 = vmatpush2.bf16.msra.mxu0 0
    %1128 = vmatprep.subr.bf16.mxu0 0
    %1129 = vmatpush2.bf16.msra.mxu0 0
    %1130 = vmatprep.subr.bf16.mxu0 0
    %1131 = vmatpush2.bf16.msra.mxu0 0
    %1132 = vmatprep.subr.bf16.mxu0 0
    %1133 = vmatpush2.bf16.msra.mxu0 0
    %1134 = vmatprep.subr.bf16.mxu0 0
    %1135 = vmatpush2.bf16.msra.mxu0 0
    %1136 = vmatprep.subr.bf16.mxu0 0
    %1137 = vmatpush2.bf16.msra.mxu0 0
    %1138 = vmatprep.subr.bf16.mxu0 0
    %1139 = vmatpush2.bf16.msra.mxu0 0
    %1140 = vmatprep.subr.bf16.mxu0 0
    %1141 = vmatpush2.bf16.msra.mxu0 0
    %1142 = vmatprep.mubr.bf16.mxu0 0
    %1143 = vmatmul.mubr.bf16.gmra.mxu0 %v1028
    %v1144 = vpop.f32.mrf.mxu0
    %v1145 = vadd.f32 0.0, %v1144
    %v1146 = vpop.f32.mrf.mxu0
    %v1147 = vadd.f32 0.0, %v1146
    %v1148 = vpop.f32.mrf.mxu0
    %v1149 = vpop.f32.mrf.mxu0
    %1150 = vdwg.mxu0
    %v1151 = vadd.f32 %v1010, %v1145
    %v1152 = vadd.f32 %v1011, %v1147
    %v1153 = vld [vmem:[%s5] sm:$0x3]
    %v1155 = vlaneseq
    %v1156 = vshrl.u32 %v1155, 7
    %v1157 = vsub.s32 0, %v1156
    %v1158 = vrot.slane %v1153, %v1157
    %v1159 = vlaneseq
    %v1160 = vshrl.u32 %v1159, 7
    %v1161 = vsub.s32 1, %v1160
    %v1162 = vrot.slane %v1153, %v1161
    %v1165 = vadd.f32 %v1151, %v1158
    %v1166 = vadd.f32 %v1152, %v1162
    %vm1167 = vcmp.gt.f32.partialorder %v1165, 0.0
    %vm1168 = vcmp.gt.f32.partialorder %v1166, 0.0
    %v1169 = vmul.f32 %v1165, 0.2
    %v1170 = vmul.f32 %v1166, 0.2
    %v1171 = vsel %vm1167, %v1165, %v1169
    %v1172 = vsel %vm1168, %v1166, %v1170
    %v1173 = vld [vmem:[%s6] sm:$0x3]
    %v1175 = vlaneseq
    %v1176 = vshrl.u32 %v1175, 7
    %v1177 = vsub.s32 0, %v1176
    %v1178 = vrot.slane %v1173, %v1177
    %v1179 = vlaneseq
    %v1180 = vshrl.u32 %v1179, 7
    %v1181 = vsub.s32 1, %v1180
    %v1182 = vrot.slane %v1173, %v1181
    %v1185 = vadd.f32 %v1171, %v1178
    %v1186 = vadd.f32 %v1172, %v1182
    %v1187 = vpack.c.bf16 %v1185, %v1185
    %v1188 = vpack.c.bf16 %v1186, %v1186
    %v1189 = vld [vmem:[#allocation3] sm:$0xff]
    %v1190 = vld [vmem:[#allocation3 + $0x8] sm:$0xff]
    %v1191 = vld [vmem:[#allocation3 + $0x10] sm:$0xff]
    %v1192 = vld [vmem:[#allocation3 + $0x18] sm:$0xff]
    %v1193 = vld [vmem:[#allocation3 + $0x20] sm:$0xff]
    %v1194 = vld [vmem:[#allocation3 + $0x28] sm:$0xff]
    %v1195 = vld [vmem:[#allocation3 + $0x30] sm:$0xff]
    %v1196 = vld [vmem:[#allocation3 + $0x38] sm:$0xff]
    %v1197 = vld [vmem:[#allocation3 + $0x40] sm:$0xff]
    %v1198 = vld [vmem:[#allocation3 + $0x48] sm:$0xff]
    %v1199 = vld [vmem:[#allocation3 + $0x50] sm:$0xff]
    %v1200 = vld [vmem:[#allocation3 + $0x58] sm:$0xff]
    %v1201 = vld [vmem:[#allocation3 + $0x60] sm:$0xff]
    %v1202 = vld [vmem:[#allocation3 + $0x68] sm:$0xff]
    %v1203 = vld [vmem:[#allocation3 + $0x70] sm:$0xff]
    %v1204 = vld [vmem:[#allocation3 + $0x78] sm:$0xff]
    %v1205 = vld [vmem:[#allocation3 + $0x80] sm:$0xff]
    %v1206 = vld [vmem:[#allocation3 + $0x88] sm:$0xff]
    %v1207 = vld [vmem:[#allocation3 + $0x90] sm:$0xff]
    %v1208 = vld [vmem:[#allocation3 + $0x98] sm:$0xff]
    %v1209 = vld [vmem:[#allocation3 + $0xa0] sm:$0xff]
    %v1210 = vld [vmem:[#allocation3 + $0xa8] sm:$0xff]
    %v1211 = vld [vmem:[#allocation3 + $0xb0] sm:$0xff]
    %v1212 = vld [vmem:[#allocation3 + $0xb8] sm:$0xff]
    %v1213 = vld [vmem:[#allocation3 + $0xc0] sm:$0xff]
    %v1214 = vld [vmem:[#allocation3 + $0xc8] sm:$0xff]
    %v1215 = vld [vmem:[#allocation3 + $0xd0] sm:$0xff]
    %v1216 = vld [vmem:[#allocation3 + $0xd8] sm:$0xff]
    %v1217 = vld [vmem:[#allocation3 + $0xe0] sm:$0xff]
    %v1218 = vld [vmem:[#allocation3 + $0xe8] sm:$0xff]
    %v1219 = vld [vmem:[#allocation3 + $0xf0] sm:$0xff]
    %v1220 = vld [vmem:[#allocation3 + $0xf8] sm:$0xff]
    %v1221 = vld [vmem:[#allocation3 + $0x100] sm:$0xff]
    %v1222 = vld [vmem:[#allocation3 + $0x108] sm:$0xff]
    %v1223 = vld [vmem:[#allocation3 + $0x110] sm:$0xff]
    %v1224 = vld [vmem:[#allocation3 + $0x118] sm:$0xff]
    %v1225 = vld [vmem:[#allocation3 + $0x120] sm:$0xff]
    %v1226 = vld [vmem:[#allocation3 + $0x128] sm:$0xff]
    %v1227 = vld [vmem:[#allocation3 + $0x130] sm:$0xff]
    %v1228 = vld [vmem:[#allocation3 + $0x138] sm:$0xff]
    %v1229 = vld [vmem:[#allocation3 + $0x140] sm:$0xff]
    %v1230 = vld [vmem:[#allocation3 + $0x148] sm:$0xff]
    %v1231 = vld [vmem:[#allocation3 + $0x150] sm:$0xff]
    %v1232 = vld [vmem:[#allocation3 + $0x158] sm:$0xff]
    %v1233 = vld [vmem:[#allocation3 + $0x160] sm:$0xff]
    %v1234 = vld [vmem:[#allocation3 + $0x168] sm:$0xff]
    %v1235 = vld [vmem:[#allocation3 + $0x170] sm:$0xff]
    %v1236 = vld [vmem:[#allocation3 + $0x178] sm:$0xff]
    %v1237 = vld [vmem:[#allocation3 + $0x180] sm:$0xff]
    %v1238 = vld [vmem:[#allocation3 + $0x188] sm:$0xff]
    %v1239 = vld [vmem:[#allocation3 + $0x190] sm:$0xff]
    %v1240 = vld [vmem:[#allocation3 + $0x198] sm:$0xff]
    %v1241 = vld [vmem:[#allocation3 + $0x1a0] sm:$0xff]
    %v1242 = vld [vmem:[#allocation3 + $0x1a8] sm:$0xff]
    %v1243 = vld [vmem:[#allocation3 + $0x1b0] sm:$0xff]
    %v1244 = vld [vmem:[#allocation3 + $0x1b8] sm:$0xff]
    %v1245 = vld [vmem:[#allocation3 + $0x1c0] sm:$0xff]
    %v1246 = vld [vmem:[#allocation3 + $0x1c8] sm:$0xff]
    %v1247 = vld [vmem:[#allocation3 + $0x1d0] sm:$0xff]
    %v1248 = vld [vmem:[#allocation3 + $0x1d8] sm:$0xff]
    %v1249 = vld [vmem:[#allocation3 + $0x1e0] sm:$0xff]
    %v1250 = vld [vmem:[#allocation3 + $0x1e8] sm:$0xff]
    %v1251 = vld [vmem:[#allocation3 + $0x1f0] sm:$0xff]
    %v1252 = vld [vmem:[#allocation3 + $0x1f8] sm:$0xff]
    %v1253 = vld [vmem:[%s4 + $0x200] sm:$0xff]
    %v1254 = vld [vmem:[%s4 + $0x208] sm:$0xff]
    %v1255 = vld [vmem:[%s4 + $0x210] sm:$0xff]
    %v1256 = vld [vmem:[%s4 + $0x218] sm:$0xff]
    %v1257 = vld [vmem:[%s4 + $0x220] sm:$0xff]
    %v1258 = vld [vmem:[%s4 + $0x228] sm:$0xff]
    %v1259 = vld [vmem:[%s4 + $0x230] sm:$0xff]
    %v1260 = vld [vmem:[%s4 + $0x238] sm:$0xff]
    %v1261 = vld [vmem:[%s4 + $0x240] sm:$0xff]
    %v1262 = vld [vmem:[%s4 + $0x248] sm:$0xff]
    %v1263 = vld [vmem:[%s4 + $0x250] sm:$0xff]
    %v1264 = vld [vmem:[%s4 + $0x258] sm:$0xff]
    %v1265 = vld [vmem:[%s4 + $0x260] sm:$0xff]
    %v1266 = vld [vmem:[%s4 + $0x268] sm:$0xff]
    %v1267 = vld [vmem:[%s4 + $0x270] sm:$0xff]
    %v1268 = vld [vmem:[%s4 + $0x278] sm:$0xff]
    %v1269 = vld [vmem:[%s4 + $0x280] sm:$0xff]
    %v1270 = vld [vmem:[%s4 + $0x288] sm:$0xff]
    %v1271 = vld [vmem:[%s4 + $0x290] sm:$0xff]
    %v1272 = vld [vmem:[%s4 + $0x298] sm:$0xff]
    %v1273 = vld [vmem:[%s4 + $0x2a0] sm:$0xff]
    %v1274 = vld [vmem:[%s4 + $0x2a8] sm:$0xff]
    %v1275 = vld [vmem:[%s4 + $0x2b0] sm:$0xff]
    %v1276 = vld [vmem:[%s4 + $0x2b8] sm:$0xff]
    %v1277 = vld [vmem:[%s4 + $0x2c0] sm:$0xff]
    %v1278 = vld [vmem:[%s4 + $0x2c8] sm:$0xff]
    %v1279 = vld [vmem:[%s4 + $0x2d0] sm:$0xff]
    %v1280 = vld [vmem:[%s4 + $0x2d8] sm:$0xff]
    %v1281 = vld [vmem:[%s4 + $0x2e0] sm:$0xff]
    %v1282 = vld [vmem:[%s4 + $0x2e8] sm:$0xff]
    %v1283 = vld [vmem:[%s4 + $0x2f0] sm:$0xff]
    %v1284 = vld [vmem:[%s4 + $0x2f8] sm:$0xff]
    %v1285 = vrot.slane %v592, 2
    %v1303 = vunpack.c.l.b16 %v1269
    %v1304 = vunpack.c.h.b16 %v1269
    %v1305 = vunpack.c.l.b16 %v1270
    %v1306 = vunpack.c.h.b16 %v1270
    %v1307 = vunpack.c.l.b16 %v1271
    %v1308 = vunpack.c.h.b16 %v1271
    %v1309 = vunpack.c.l.b16 %v1272
    %v1310 = vunpack.c.h.b16 %v1272
    %v1311 = vunpack.c.l.b16 %v1273
    %v1312 = vunpack.c.h.b16 %v1273
    %v1313 = vunpack.c.l.b16 %v1274
    %v1314 = vunpack.c.h.b16 %v1274
    %v1315 = vunpack.c.l.b16 %v1275
    %v1316 = vunpack.c.h.b16 %v1275
    %v1317 = vunpack.c.l.b16 %v1276
    %v1318 = vunpack.c.h.b16 %v1276
    %v1319 = vunpack.c.l.b16 %v1277
    %v1320 = vunpack.c.h.b16 %v1277
    %v1321 = vunpack.c.l.b16 %v1278
    %v1322 = vunpack.c.h.b16 %v1278
    %v1323 = vunpack.c.l.b16 %v1279
    %v1324 = vunpack.c.h.b16 %v1279
    %v1325 = vunpack.c.l.b16 %v1280
    %v1326 = vunpack.c.h.b16 %v1280
    %v1327 = vunpack.c.l.b16 %v1281
    %v1328 = vunpack.c.h.b16 %v1281
    %v1329 = vunpack.c.l.b16 %v1282
    %v1330 = vunpack.c.h.b16 %v1282
    %v1331 = vunpack.c.l.b16 %v1283
    %v1332 = vunpack.c.h.b16 %v1283
    %v1333 = vunpack.c.l.b16 %v1284
    %v1334 = vunpack.c.h.b16 %v1284
    %v1335 = vpack.c.b16 %v1305, %v1303
    %v1336 = vpack.c.b16 %v1306, %v1304
    %v1337 = vpack.c.b16 %v1309, %v1307
    %v1338 = vpack.c.b16 %v1310, %v1308
    %v1339 = vpack.c.b16 %v1313, %v1311
    %v1340 = vpack.c.b16 %v1314, %v1312
    %v1341 = vpack.c.b16 %v1317, %v1315
    %v1342 = vpack.c.b16 %v1318, %v1316
    %v1343 = vpack.c.b16 %v1321, %v1319
    %v1344 = vpack.c.b16 %v1322, %v1320
    %v1345 = vpack.c.b16 %v1325, %v1323
    %v1346 = vpack.c.b16 %v1326, %v1324
    %v1347 = vpack.c.b16 %v1329, %v1327
    %v1348 = vpack.c.b16 %v1330, %v1328
    %v1349 = vpack.c.b16 %v1333, %v1331
    %v1350 = vpack.c.b16 %v1334, %v1332
    %1367 = vmatprep.subr.bf16.mxu0 %v1350
    %1368 = vmatpush1.bf16.msra.mxu0 %v1349
    %1369 = vmatprep.subr.bf16.mxu0 %v1348
    %1370 = vmatpush1.bf16.msra.mxu0 %v1347
    %1371 = vmatprep.subr.bf16.mxu0 %v1346
    %1372 = vmatpush1.bf16.msra.mxu0 %v1345
    %1373 = vmatprep.subr.bf16.mxu0 %v1344
    %1374 = vmatpush1.bf16.msra.mxu0 %v1343
    %1375 = vmatprep.subr.bf16.mxu0 %v1342
    %1376 = vmatpush1.bf16.msra.mxu0 %v1341
    %1377 = vmatprep.subr.bf16.mxu0 %v1340
    %1378 = vmatpush1.bf16.msra.mxu0 %v1339
    %1379 = vmatprep.subr.bf16.mxu0 %v1338
    %1380 = vmatpush1.bf16.msra.mxu0 %v1337
    %1381 = vmatprep.subr.bf16.mxu0 %v1336
    %1382 = vmatpush1.bf16.msra.mxu0 %v1335
    %1383 = vmatprep.subr.bf16.mxu0 0
    %1384 = vmatpush2.bf16.msra.mxu0 0
    %1385 = vmatprep.subr.bf16.mxu0 0
    %1386 = vmatpush2.bf16.msra.mxu0 0
    %1387 = vmatprep.subr.bf16.mxu0 0
    %1388 = vmatpush2.bf16.msra.mxu0 0
    %1389 = vmatprep.subr.bf16.mxu0 0
    %1390 = vmatpush2.bf16.msra.mxu0 0
    %1391 = vmatprep.subr.bf16.mxu0 0
    %1392 = vmatpush2.bf16.msra.mxu0 0
    %1393 = vmatprep.subr.bf16.mxu0 0
    %1394 = vmatpush2.bf16.msra.mxu0 0
    %1395 = vmatprep.subr.bf16.mxu0 0
    %1396 = vmatpush2.bf16.msra.mxu0 0
    %1397 = vmatprep.subr.bf16.mxu0 0
    %1398 = vmatpush2.bf16.msra.mxu0 0
    %1399 = vmatprep.mubr.bf16.mxu0 0
    %1400 = vmatmul.mubr.bf16.gmra.mxu0 %v1285
    %v1401 = vpop.f32.mrf.mxu0
    %v1402 = vadd.f32 0.0, %v1401
    %v1403 = vpop.f32.mrf.mxu0
    %v1404 = vadd.f32 0.0, %v1403
    %v1405 = vpop.f32.mrf.mxu0
    %v1406 = vpop.f32.mrf.mxu0
    %1407 = vdwg.mxu0
    %v1424 = vunpack.c.l.b16 %v1253
    %v1425 = vunpack.c.h.b16 %v1253
    %v1426 = vunpack.c.l.b16 %v1254
    %v1427 = vunpack.c.h.b16 %v1254
    %v1428 = vunpack.c.l.b16 %v1255
    %v1429 = vunpack.c.h.b16 %v1255
    %v1430 = vunpack.c.l.b16 %v1256
    %v1431 = vunpack.c.h.b16 %v1256
    %v1432 = vunpack.c.l.b16 %v1257
    %v1433 = vunpack.c.h.b16 %v1257
    %v1434 = vunpack.c.l.b16 %v1258
    %v1435 = vunpack.c.h.b16 %v1258
    %v1436 = vunpack.c.l.b16 %v1259
    %v1437 = vunpack.c.h.b16 %v1259
    %v1438 = vunpack.c.l.b16 %v1260
    %v1439 = vunpack.c.h.b16 %v1260
    %v1440 = vunpack.c.l.b16 %v1261
    %v1441 = vunpack.c.h.b16 %v1261
    %v1442 = vunpack.c.l.b16 %v1262
    %v1443 = vunpack.c.h.b16 %v1262
    %v1444 = vunpack.c.l.b16 %v1263
    %v1445 = vunpack.c.h.b16 %v1263
    %v1446 = vunpack.c.l.b16 %v1264
    %v1447 = vunpack.c.h.b16 %v1264
    %v1448 = vunpack.c.l.b16 %v1265
    %v1449 = vunpack.c.h.b16 %v1265
    %v1450 = vunpack.c.l.b16 %v1266
    %v1451 = vunpack.c.h.b16 %v1266
    %v1452 = vunpack.c.l.b16 %v1267
    %v1453 = vunpack.c.h.b16 %v1267
    %v1454 = vunpack.c.l.b16 %v1268
    %v1455 = vunpack.c.h.b16 %v1268
    %v1456 = vpack.c.b16 %v1426, %v1424
    %v1457 = vpack.c.b16 %v1427, %v1425
    %v1458 = vpack.c.b16 %v1430, %v1428
    %v1459 = vpack.c.b16 %v1431, %v1429
    %v1460 = vpack.c.b16 %v1434, %v1432
    %v1461 = vpack.c.b16 %v1435, %v1433
    %v1462 = vpack.c.b16 %v1438, %v1436
    %v1463 = vpack.c.b16 %v1439, %v1437
    %v1464 = vpack.c.b16 %v1442, %v1440
    %v1465 = vpack.c.b16 %v1443, %v1441
    %v1466 = vpack.c.b16 %v1446, %v1444
    %v1467 = vpack.c.b16 %v1447, %v1445
    %v1468 = vpack.c.b16 %v1450, %v1448
    %v1469 = vpack.c.b16 %v1451, %v1449
    %v1470 = vpack.c.b16 %v1454, %v1452
    %v1471 = vpack.c.b16 %v1455, %v1453
    %1488 = vmatprep.subr.bf16.mxu0 %v1471
    %1489 = vmatpush1.bf16.msra.mxu0 %v1470
    %1490 = vmatprep.subr.bf16.mxu0 %v1469
    %1491 = vmatpush1.bf16.msra.mxu0 %v1468
    %1492 = vmatprep.subr.bf16.mxu0 %v1467
    %1493 = vmatpush1.bf16.msra.mxu0 %v1466
    %1494 = vmatprep.subr.bf16.mxu0 %v1465
    %1495 = vmatpush1.bf16.msra.mxu0 %v1464
    %1496 = vmatprep.subr.bf16.mxu0 %v1463
    %1497 = vmatpush1.bf16.msra.mxu0 %v1462
    %1498 = vmatprep.subr.bf16.mxu0 %v1461
    %1499 = vmatpush1.bf16.msra.mxu0 %v1460
    %1500 = vmatprep.subr.bf16.mxu0 %v1459
    %1501 = vmatpush1.bf16.msra.mxu0 %v1458
    %1502 = vmatprep.subr.bf16.mxu0 %v1457
    %1503 = vmatpush1.bf16.msra.mxu0 %v1456
    %1504 = vmatprep.subr.bf16.mxu0 0
    %1505 = vmatpush2.bf16.msra.mxu0 0
    %1506 = vmatprep.subr.bf16.mxu0 0
    %1507 = vmatpush2.bf16.msra.mxu0 0
    %1508 = vmatprep.subr.bf16.mxu0 0
    %1509 = vmatpush2.bf16.msra.mxu0 0
    %1510 = vmatprep.subr.bf16.mxu0 0
    %1511 = vmatpush2.bf16.msra.mxu0 0
    %1512 = vmatprep.subr.bf16.mxu0 0
    %1513 = vmatpush2.bf16.msra.mxu0 0
    %1514 = vmatprep.subr.bf16.mxu0 0
    %1515 = vmatpush2.bf16.msra.mxu0 0
    %1516 = vmatprep.subr.bf16.mxu0 0
    %1517 = vmatpush2.bf16.msra.mxu0 0
    %1518 = vmatprep.subr.bf16.mxu0 0
    %1519 = vmatpush2.bf16.msra.mxu0 0
    %1520 = vmatprep.mubr.bf16.mxu0 0
    %1521 = vmatmul.mubr.bf16.gmra.mxu0 %v627
    %v1522 = vpop.f32.mrf.mxu0
    %v1523 = vadd.f32 %v1402, %v1522
    %v1524 = vpop.f32.mrf.mxu0
    %v1525 = vadd.f32 %v1404, %v1524
    %v1526 = vpop.f32.mrf.mxu0
    %v1527 = vpop.f32.mrf.mxu0
    %1528 = vdwg.mxu0
    %v1529 = vld [vmem:[%s4 + $0x300] sm:$0xff]
    %v1530 = vld [vmem:[%s4 + $0x308] sm:$0xff]
    %v1531 = vld [vmem:[%s4 + $0x310] sm:$0xff]
    %v1532 = vld [vmem:[%s4 + $0x318] sm:$0xff]
    %v1533 = vld [vmem:[%s4 + $0x320] sm:$0xff]
    %v1534 = vld [vmem:[%s4 + $0x328] sm:$0xff]
    %v1535 = vld [vmem:[%s4 + $0x330] sm:$0xff]
    %v1536 = vld [vmem:[%s4 + $0x338] sm:$0xff]
    %v1537 = vld [vmem:[%s4 + $0x340] sm:$0xff]
    %v1538 = vld [vmem:[%s4 + $0x348] sm:$0xff]
    %v1539 = vld [vmem:[%s4 + $0x350] sm:$0xff]
    %v1540 = vld [vmem:[%s4 + $0x358] sm:$0xff]
    %v1541 = vld [vmem:[%s4 + $0x360] sm:$0xff]
    %v1542 = vld [vmem:[%s4 + $0x368] sm:$0xff]
    %v1543 = vld [vmem:[%s4 + $0x370] sm:$0xff]
    %v1544 = vld [vmem:[%s4 + $0x378] sm:$0xff]
    %v1545 = vrot.slane %v592, 3
    %v1563 = vunpack.c.l.b16 %v1529
    %v1564 = vunpack.c.h.b16 %v1529
    %v1565 = vunpack.c.l.b16 %v1530
    %v1566 = vunpack.c.h.b16 %v1530
    %v1567 = vunpack.c.l.b16 %v1531
    %v1568 = vunpack.c.h.b16 %v1531
    %v1569 = vunpack.c.l.b16 %v1532
    %v1570 = vunpack.c.h.b16 %v1532
    %v1571 = vunpack.c.l.b16 %v1533
    %v1572 = vunpack.c.h.b16 %v1533
    %v1573 = vunpack.c.l.b16 %v1534
    %v1574 = vunpack.c.h.b16 %v1534
    %v1575 = vunpack.c.l.b16 %v1535
    %v1576 = vunpack.c.h.b16 %v1535
    %v1577 = vunpack.c.l.b16 %v1536
    %v1578 = vunpack.c.h.b16 %v1536
    %v1579 = vunpack.c.l.b16 %v1537
    %v1580 = vunpack.c.h.b16 %v1537
    %v1581 = vunpack.c.l.b16 %v1538
    %v1582 = vunpack.c.h.b16 %v1538
    %v1583 = vunpack.c.l.b16 %v1539
    %v1584 = vunpack.c.h.b16 %v1539
    %v1585 = vunpack.c.l.b16 %v1540
    %v1586 = vunpack.c.h.b16 %v1540
    %v1587 = vunpack.c.l.b16 %v1541
    %v1588 = vunpack.c.h.b16 %v1541
    %v1589 = vunpack.c.l.b16 %v1542
    %v1590 = vunpack.c.h.b16 %v1542
    %v1591 = vunpack.c.l.b16 %v1543
    %v1592 = vunpack.c.h.b16 %v1543
    %v1593 = vunpack.c.l.b16 %v1544
    %v1594 = vunpack.c.h.b16 %v1544
    %v1595 = vpack.c.b16 %v1565, %v1563
    %v1596 = vpack.c.b16 %v1566, %v1564
    %v1597 = vpack.c.b16 %v1569, %v1567
    %v1598 = vpack.c.b16 %v1570, %v1568
    %v1599 = vpack.c.b16 %v1573, %v1571
    %v1600 = vpack.c.b16 %v1574, %v1572
    %v1601 = vpack.c.b16 %v1577, %v1575
    %v1602 = vpack.c.b16 %v1578, %v1576
    %v1603 = vpack.c.b16 %v1581, %v1579
    %v1604 = vpack.c.b16 %v1582, %v1580
    %v1605 = vpack.c.b16 %v1585, %v1583
    %v1606 = vpack.c.b16 %v1586, %v1584
    %v1607 = vpack.c.b16 %v1589, %v1587
    %v1608 = vpack.c.b16 %v1590, %v1588
    %v1609 = vpack.c.b16 %v1593, %v1591
    %v1610 = vpack.c.b16 %v1594, %v1592
    %1627 = vmatprep.subr.bf16.mxu0 %v1610
    %1628 = vmatpush1.bf16.msra.mxu0 %v1609
    %1629 = vmatprep.subr.bf16.mxu0 %v1608
    %1630 = vmatpush1.bf16.msra.mxu0 %v1607
    %1631 = vmatprep.subr.bf16.mxu0 %v1606
    %1632 = vmatpush1.bf16.msra.mxu0 %v1605
    %1633 = vmatprep.subr.bf16.mxu0 %v1604
    %1634 = vmatpush1.bf16.msra.mxu0 %v1603
    %1635 = vmatprep.subr.bf16.mxu0 %v1602
    %1636 = vmatpush1.bf16.msra.mxu0 %v1601
    %1637 = vmatprep.subr.bf16.mxu0 %v1600
    %1638 = vmatpush1.bf16.msra.mxu0 %v1599
    %1639 = vmatprep.subr.bf16.mxu0 %v1598
    %1640 = vmatpush1.bf16.msra.mxu0 %v1597
    %1641 = vmatprep.subr.bf16.mxu0 %v1596
    %1642 = vmatpush1.bf16.msra.mxu0 %v1595
    %1643 = vmatprep.subr.bf16.mxu0 0
    %1644 = vmatpush2.bf16.msra.mxu0 0
    %1645 = vmatprep.subr.bf16.mxu0 0
    %1646 = vmatpush2.bf16.msra.mxu0 0
    %1647 = vmatprep.subr.bf16.mxu0 0
    %1648 = vmatpush2.bf16.msra.mxu0 0
    %1649 = vmatprep.subr.bf16.mxu0 0
    %1650 = vmatpush2.bf16.msra.mxu0 0
    %1651 = vmatprep.subr.bf16.mxu0 0
    %1652 = vmatpush2.bf16.msra.mxu0 0
    %1653 = vmatprep.subr.bf16.mxu0 0
    %1654 = vmatpush2.bf16.msra.mxu0 0
    %1655 = vmatprep.subr.bf16.mxu0 0
    %1656 = vmatpush2.bf16.msra.mxu0 0
    %1657 = vmatprep.subr.bf16.mxu0 0
    %1658 = vmatpush2.bf16.msra.mxu0 0
    %1659 = vmatprep.mubr.bf16.mxu0 0
    %1660 = vmatmul.mubr.bf16.gmra.mxu0 %v1545
    %v1661 = vpop.f32.mrf.mxu0
    %v1662 = vadd.f32 0.0, %v1661
    %v1663 = vpop.f32.mrf.mxu0
    %v1664 = vadd.f32 0.0, %v1663
    %v1665 = vpop.f32.mrf.mxu0
    %v1666 = vpop.f32.mrf.mxu0
    %1667 = vdwg.mxu0
    %v1668 = vadd.f32 %v1523, %v1662
    %v1669 = vadd.f32 %v1525, %v1664
    %v1670 = vld [vmem:[%s4 + $0x380] sm:$0xff]
    %v1671 = vld [vmem:[%s4 + $0x388] sm:$0xff]
    %v1672 = vld [vmem:[%s4 + $0x390] sm:$0xff]
    %v1673 = vld [vmem:[%s4 + $0x398] sm:$0xff]
    %v1674 = vld [vmem:[%s4 + $0x3a0] sm:$0xff]
    %v1675 = vld [vmem:[%s4 + $0x3a8] sm:$0xff]
    %v1676 = vld [vmem:[%s4 + $0x3b0] sm:$0xff]
    %v1677 = vld [vmem:[%s4 + $0x3b8] sm:$0xff]
    %v1678 = vld [vmem:[%s4 + $0x3c0] sm:$0xff]
    %v1679 = vld [vmem:[%s4 + $0x3c8] sm:$0xff]
    %v1680 = vld [vmem:[%s4 + $0x3d0] sm:$0xff]
    %v1681 = vld [vmem:[%s4 + $0x3d8] sm:$0xff]
    %v1682 = vld [vmem:[%s4 + $0x3e0] sm:$0xff]
    %v1683 = vld [vmem:[%s4 + $0x3e8] sm:$0xff]
    %v1684 = vld [vmem:[%s4 + $0x3f0] sm:$0xff]
    %v1685 = vld [vmem:[%s4 + $0x3f8] sm:$0xff]
    %v1702 = vunpack.c.l.b16 %v1670
    %v1703 = vunpack.c.h.b16 %v1670
    %v1704 = vunpack.c.l.b16 %v1671
    %v1705 = vunpack.c.h.b16 %v1671
    %v1706 = vunpack.c.l.b16 %v1672
    %v1707 = vunpack.c.h.b16 %v1672
    %v1708 = vunpack.c.l.b16 %v1673
    %v1709 = vunpack.c.h.b16 %v1673
    %v1710 = vunpack.c.l.b16 %v1674
    %v1711 = vunpack.c.h.b16 %v1674
    %v1712 = vunpack.c.l.b16 %v1675
    %v1713 = vunpack.c.h.b16 %v1675
    %v1714 = vunpack.c.l.b16 %v1676
    %v1715 = vunpack.c.h.b16 %v1676
    %v1716 = vunpack.c.l.b16 %v1677
    %v1717 = vunpack.c.h.b16 %v1677
    %v1718 = vunpack.c.l.b16 %v1678
    %v1719 = vunpack.c.h.b16 %v1678
    %v1720 = vunpack.c.l.b16 %v1679
    %v1721 = vunpack.c.h.b16 %v1679
    %v1722 = vunpack.c.l.b16 %v1680
    %v1723 = vunpack.c.h.b16 %v1680
    %v1724 = vunpack.c.l.b16 %v1681
    %v1725 = vunpack.c.h.b16 %v1681
    %v1726 = vunpack.c.l.b16 %v1682
    %v1727 = vunpack.c.h.b16 %v1682
    %v1728 = vunpack.c.l.b16 %v1683
    %v1729 = vunpack.c.h.b16 %v1683
    %v1730 = vunpack.c.l.b16 %v1684
    %v1731 = vunpack.c.h.b16 %v1684
    %v1732 = vunpack.c.l.b16 %v1685
    %v1733 = vunpack.c.h.b16 %v1685
    %v1734 = vpack.c.b16 %v1704, %v1702
    %v1735 = vpack.c.b16 %v1705, %v1703
    %v1736 = vpack.c.b16 %v1708, %v1706
    %v1737 = vpack.c.b16 %v1709, %v1707
    %v1738 = vpack.c.b16 %v1712, %v1710
    %v1739 = vpack.c.b16 %v1713, %v1711
    %v1740 = vpack.c.b16 %v1716, %v1714
    %v1741 = vpack.c.b16 %v1717, %v1715
    %v1742 = vpack.c.b16 %v1720, %v1718
    %v1743 = vpack.c.b16 %v1721, %v1719
    %v1744 = vpack.c.b16 %v1724, %v1722
    %v1745 = vpack.c.b16 %v1725, %v1723
    %v1746 = vpack.c.b16 %v1728, %v1726
    %v1747 = vpack.c.b16 %v1729, %v1727
    %v1748 = vpack.c.b16 %v1732, %v1730
    %v1749 = vpack.c.b16 %v1733, %v1731
    %1766 = vmatprep.subr.bf16.mxu0 %v1749
    %1767 = vmatpush1.bf16.msra.mxu0 %v1748
    %1768 = vmatprep.subr.bf16.mxu0 %v1747
    %1769 = vmatpush1.bf16.msra.mxu0 %v1746
    %1770 = vmatprep.subr.bf16.mxu0 %v1745
    %1771 = vmatpush1.bf16.msra.mxu0 %v1744
    %1772 = vmatprep.subr.bf16.mxu0 %v1743
    %1773 = vmatpush1.bf16.msra.mxu0 %v1742
    %1774 = vmatprep.subr.bf16.mxu0 %v1741
    %1775 = vmatpush1.bf16.msra.mxu0 %v1740
    %1776 = vmatprep.subr.bf16.mxu0 %v1739
    %1777 = vmatpush1.bf16.msra.mxu0 %v1738
    %1778 = vmatprep.subr.bf16.mxu0 %v1737
    %1779 = vmatpush1.bf16.msra.mxu0 %v1736
    %1780 = vmatprep.subr.bf16.mxu0 %v1735
    %1781 = vmatpush1.bf16.msra.mxu0 %v1734
    %1782 = vmatprep.subr.bf16.mxu0 0
    %1783 = vmatpush2.bf16.msra.mxu0 0
    %1784 = vmatprep.subr.bf16.mxu0 0
    %1785 = vmatpush2.bf16.msra.mxu0 0
    %1786 = vmatprep.subr.bf16.mxu0 0
    %1787 = vmatpush2.bf16.msra.mxu0 0
    %1788 = vmatprep.subr.bf16.mxu0 0
    %1789 = vmatpush2.bf16.msra.mxu0 0
    %1790 = vmatprep.subr.bf16.mxu0 0
    %1791 = vmatpush2.bf16.msra.mxu0 0
    %1792 = vmatprep.subr.bf16.mxu0 0
    %1793 = vmatpush2.bf16.msra.mxu0 0
    %1794 = vmatprep.subr.bf16.mxu0 0
    %1795 = vmatpush2.bf16.msra.mxu0 0
    %1796 = vmatprep.subr.bf16.mxu0 0
    %1797 = vmatpush2.bf16.msra.mxu0 0
    %1798 = vmatprep.mubr.bf16.mxu0 0
    %1799 = vmatmul.mubr.bf16.gmra.mxu0 %v1028
    %v1800 = vpop.f32.mrf.mxu0
    %v1801 = vadd.f32 0.0, %v1800
    %v1802 = vpop.f32.mrf.mxu0
    %v1803 = vadd.f32 0.0, %v1802
    %v1804 = vpop.f32.mrf.mxu0
    %v1805 = vpop.f32.mrf.mxu0
    %1806 = vdwg.mxu0
    %v1807 = vadd.f32 %v1668, %v1801
    %v1808 = vadd.f32 %v1669, %v1803
    %v1809 = vld [vmem:[%s4 + $0x400] sm:$0xff]
    %v1810 = vld [vmem:[%s4 + $0x408] sm:$0xff]
    %v1811 = vld [vmem:[%s4 + $0x410] sm:$0xff]
    %v1812 = vld [vmem:[%s4 + $0x418] sm:$0xff]
    %v1813 = vld [vmem:[%s4 + $0x420] sm:$0xff]
    %v1814 = vld [vmem:[%s4 + $0x428] sm:$0xff]
    %v1815 = vld [vmem:[%s4 + $0x430] sm:$0xff]
    %v1816 = vld [vmem:[%s4 + $0x438] sm:$0xff]
    %v1817 = vld [vmem:[%s4 + $0x440] sm:$0xff]
    %v1818 = vld [vmem:[%s4 + $0x448] sm:$0xff]
    %v1819 = vld [vmem:[%s4 + $0x450] sm:$0xff]
    %v1820 = vld [vmem:[%s4 + $0x458] sm:$0xff]
    %v1821 = vld [vmem:[%s4 + $0x460] sm:$0xff]
    %v1822 = vld [vmem:[%s4 + $0x468] sm:$0xff]
    %v1823 = vld [vmem:[%s4 + $0x470] sm:$0xff]
    %v1824 = vld [vmem:[%s4 + $0x478] sm:$0xff]
    %v1825 = vrot.slane %v592, 6
    %v1843 = vunpack.c.l.b16 %v1809
    %v1844 = vunpack.c.h.b16 %v1809
    %v1845 = vunpack.c.l.b16 %v1810
    %v1846 = vunpack.c.h.b16 %v1810
    %v1847 = vunpack.c.l.b16 %v1811
    %v1848 = vunpack.c.h.b16 %v1811
    %v1849 = vunpack.c.l.b16 %v1812
    %v1850 = vunpack.c.h.b16 %v1812
    %v1851 = vunpack.c.l.b16 %v1813
    %v1852 = vunpack.c.h.b16 %v1813
    %v1853 = vunpack.c.l.b16 %v1814
    %v1854 = vunpack.c.h.b16 %v1814
    %v1855 = vunpack.c.l.b16 %v1815
    %v1856 = vunpack.c.h.b16 %v1815
    %v1857 = vunpack.c.l.b16 %v1816
    %v1858 = vunpack.c.h.b16 %v1816
    %v1859 = vunpack.c.l.b16 %v1817
    %v1860 = vunpack.c.h.b16 %v1817
    %v1861 = vunpack.c.l.b16 %v1818
    %v1862 = vunpack.c.h.b16 %v1818
    %v1863 = vunpack.c.l.b16 %v1819
    %v1864 = vunpack.c.h.b16 %v1819
    %v1865 = vunpack.c.l.b16 %v1820
    %v1866 = vunpack.c.h.b16 %v1820
    %v1867 = vunpack.c.l.b16 %v1821
    %v1868 = vunpack.c.h.b16 %v1821
    %v1869 = vunpack.c.l.b16 %v1822
    %v1870 = vunpack.c.h.b16 %v1822
    %v1871 = vunpack.c.l.b16 %v1823
    %v1872 = vunpack.c.h.b16 %v1823
    %v1873 = vunpack.c.l.b16 %v1824
    %v1874 = vunpack.c.h.b16 %v1824
    %v1875 = vpack.c.b16 %v1845, %v1843
    %v1876 = vpack.c.b16 %v1846, %v1844
    %v1877 = vpack.c.b16 %v1849, %v1847
    %v1878 = vpack.c.b16 %v1850, %v1848
    %v1879 = vpack.c.b16 %v1853, %v1851
    %v1880 = vpack.c.b16 %v1854, %v1852
    %v1881 = vpack.c.b16 %v1857, %v1855
    %v1882 = vpack.c.b16 %v1858, %v1856
    %v1883 = vpack.c.b16 %v1861, %v1859
    %v1884 = vpack.c.b16 %v1862, %v1860
    %v1885 = vpack.c.b16 %v1865, %v1863
    %v1886 = vpack.c.b16 %v1866, %v1864
    %v1887 = vpack.c.b16 %v1869, %v1867
    %v1888 = vpack.c.b16 %v1870, %v1868
    %v1889 = vpack.c.b16 %v1873, %v1871
    %v1890 = vpack.c.b16 %v1874, %v1872
    %1907 = vmatprep.subr.bf16.mxu0 %v1890
    %1908 = vmatpush1.bf16.msra.mxu0 %v1889
    %1909 = vmatprep.subr.bf16.mxu0 %v1888
    %1910 = vmatpush1.bf16.msra.mxu0 %v1887
    %1911 = vmatprep.subr.bf16.mxu0 %v1886
    %1912 = vmatpush1.bf16.msra.mxu0 %v1885
    %1913 = vmatprep.subr.bf16.mxu0 %v1884
    %1914 = vmatpush1.bf16.msra.mxu0 %v1883
    %1915 = vmatprep.subr.bf16.mxu0 %v1882
    %1916 = vmatpush1.bf16.msra.mxu0 %v1881
    %1917 = vmatprep.subr.bf16.mxu0 %v1880
    %1918 = vmatpush1.bf16.msra.mxu0 %v1879
    %1919 = vmatprep.subr.bf16.mxu0 %v1878
    %1920 = vmatpush1.bf16.msra.mxu0 %v1877
    %1921 = vmatprep.subr.bf16.mxu0 %v1876
    %1922 = vmatpush1.bf16.msra.mxu0 %v1875
    %1923 = vmatprep.subr.bf16.mxu0 0
    %1924 = vmatpush2.bf16.msra.mxu0 0
    %1925 = vmatprep.subr.bf16.mxu0 0
    %1926 = vmatpush2.bf16.msra.mxu0 0
    %1927 = vmatprep.subr.bf16.mxu0 0
    %1928 = vmatpush2.bf16.msra.mxu0 0
    %1929 = vmatprep.subr.bf16.mxu0 0
    %1930 = vmatpush2.bf16.msra.mxu0 0
    %1931 = vmatprep.subr.bf16.mxu0 0
    %1932 = vmatpush2.bf16.msra.mxu0 0
    %1933 = vmatprep.subr.bf16.mxu0 0
    %1934 = vmatpush2.bf16.msra.mxu0 0
    %1935 = vmatprep.subr.bf16.mxu0 0
    %1936 = vmatpush2.bf16.msra.mxu0 0
    %1937 = vmatprep.subr.bf16.mxu0 0
    %1938 = vmatpush2.bf16.msra.mxu0 0
    %1939 = vmatprep.mubr.bf16.mxu0 0
    %1940 = vmatmul.mubr.bf16.gmra.mxu0 %v1825
    %v1941 = vpop.f32.mrf.mxu0
    %v1942 = vadd.f32 0.0, %v1941
    %v1943 = vpop.f32.mrf.mxu0
    %v1944 = vadd.f32 0.0, %v1943
    %v1945 = vpop.f32.mrf.mxu0
    %v1946 = vpop.f32.mrf.mxu0
    %1947 = vdwg.mxu0
    %v1948 = vadd.f32 %v1807, %v1942
    %v1949 = vadd.f32 %v1808, %v1944
    %v1950 = vld [vmem:[%s4 + $0x480] sm:$0xff]
    %v1951 = vld [vmem:[%s4 + $0x488] sm:$0xff]
    %v1952 = vld [vmem:[%s4 + $0x490] sm:$0xff]
    %v1953 = vld [vmem:[%s4 + $0x498] sm:$0xff]
    %v1954 = vld [vmem:[%s4 + $0x4a0] sm:$0xff]
    %v1955 = vld [vmem:[%s4 + $0x4a8] sm:$0xff]
    %v1956 = vld [vmem:[%s4 + $0x4b0] sm:$0xff]
    %v1957 = vld [vmem:[%s4 + $0x4b8] sm:$0xff]
    %v1958 = vld [vmem:[%s4 + $0x4c0] sm:$0xff]
    %v1959 = vld [vmem:[%s4 + $0x4c8] sm:$0xff]
    %v1960 = vld [vmem:[%s4 + $0x4d0] sm:$0xff]
    %v1961 = vld [vmem:[%s4 + $0x4d8] sm:$0xff]
    %v1962 = vld [vmem:[%s4 + $0x4e0] sm:$0xff]
    %v1963 = vld [vmem:[%s4 + $0x4e8] sm:$0xff]
    %v1964 = vld [vmem:[%s4 + $0x4f0] sm:$0xff]
    %v1965 = vld [vmem:[%s4 + $0x4f8] sm:$0xff]
    %v1966 = vrot.slane %v592, 7
    %v1984 = vunpack.c.l.b16 %v1950
    %v1985 = vunpack.c.h.b16 %v1950
    %v1986 = vunpack.c.l.b16 %v1951
    %v1987 = vunpack.c.h.b16 %v1951
    %v1988 = vunpack.c.l.b16 %v1952
    %v1989 = vunpack.c.h.b16 %v1952
    %v1990 = vunpack.c.l.b16 %v1953
    %v1991 = vunpack.c.h.b16 %v1953
    %v1992 = vunpack.c.l.b16 %v1954
    %v1993 = vunpack.c.h.b16 %v1954
    %v1994 = vunpack.c.l.b16 %v1955
    %v1995 = vunpack.c.h.b16 %v1955
    %v1996 = vunpack.c.l.b16 %v1956
    %v1997 = vunpack.c.h.b16 %v1956
    %v1998 = vunpack.c.l.b16 %v1957
    %v1999 = vunpack.c.h.b16 %v1957
    %v2000 = vunpack.c.l.b16 %v1958
    %v2001 = vunpack.c.h.b16 %v1958
    %v2002 = vunpack.c.l.b16 %v1959
    %v2003 = vunpack.c.h.b16 %v1959
    %v2004 = vunpack.c.l.b16 %v1960
    %v2005 = vunpack.c.h.b16 %v1960
    %v2006 = vunpack.c.l.b16 %v1961
    %v2007 = vunpack.c.h.b16 %v1961
    %v2008 = vunpack.c.l.b16 %v1962
    %v2009 = vunpack.c.h.b16 %v1962
    %v2010 = vunpack.c.l.b16 %v1963
    %v2011 = vunpack.c.h.b16 %v1963
    %v2012 = vunpack.c.l.b16 %v1964
    %v2013 = vunpack.c.h.b16 %v1964
    %v2014 = vunpack.c.l.b16 %v1965
    %v2015 = vunpack.c.h.b16 %v1965
    %v2016 = vpack.c.b16 %v1986, %v1984
    %v2017 = vpack.c.b16 %v1987, %v1985
    %v2018 = vpack.c.b16 %v1990, %v1988
    %v2019 = vpack.c.b16 %v1991, %v1989
    %v2020 = vpack.c.b16 %v1994, %v1992
    %v2021 = vpack.c.b16 %v1995, %v1993
    %v2022 = vpack.c.b16 %v1998, %v1996
    %v2023 = vpack.c.b16 %v1999, %v1997
    %v2024 = vpack.c.b16 %v2002, %v2000
    %v2025 = vpack.c.b16 %v2003, %v2001
    %v2026 = vpack.c.b16 %v2006, %v2004
    %v2027 = vpack.c.b16 %v2007, %v2005
    %v2028 = vpack.c.b16 %v2010, %v2008
    %v2029 = vpack.c.b16 %v2011, %v2009
    %v2030 = vpack.c.b16 %v2014, %v2012
    %v2031 = vpack.c.b16 %v2015, %v2013
    %2048 = vmatprep.subr.bf16.mxu0 %v2031
    %2049 = vmatpush1.bf16.msra.mxu0 %v2030
    %2050 = vmatprep.subr.bf16.mxu0 %v2029
    %2051 = vmatpush1.bf16.msra.mxu0 %v2028
    %2052 = vmatprep.subr.bf16.mxu0 %v2027
    %2053 = vmatpush1.bf16.msra.mxu0 %v2026
    %2054 = vmatprep.subr.bf16.mxu0 %v2025
    %2055 = vmatpush1.bf16.msra.mxu0 %v2024
    %2056 = vmatprep.subr.bf16.mxu0 %v2023
    %2057 = vmatpush1.bf16.msra.mxu0 %v2022
    %2058 = vmatprep.subr.bf16.mxu0 %v2021
    %2059 = vmatpush1.bf16.msra.mxu0 %v2020
    %2060 = vmatprep.subr.bf16.mxu0 %v2019
    %2061 = vmatpush1.bf16.msra.mxu0 %v2018
    %2062 = vmatprep.subr.bf16.mxu0 %v2017
    %2063 = vmatpush1.bf16.msra.mxu0 %v2016
    %2064 = vmatprep.subr.bf16.mxu0 0
    %2065 = vmatpush2.bf16.msra.mxu0 0
    %2066 = vmatprep.subr.bf16.mxu0 0
    %2067 = vmatpush2.bf16.msra.mxu0 0
    %2068 = vmatprep.subr.bf16.mxu0 0
    %2069 = vmatpush2.bf16.msra.mxu0 0
    %2070 = vmatprep.subr.bf16.mxu0 0
    %2071 = vmatpush2.bf16.msra.mxu0 0
    %2072 = vmatprep.subr.bf16.mxu0 0
    %2073 = vmatpush2.bf16.msra.mxu0 0
    %2074 = vmatprep.subr.bf16.mxu0 0
    %2075 = vmatpush2.bf16.msra.mxu0 0
    %2076 = vmatprep.subr.bf16.mxu0 0
    %2077 = vmatpush2.bf16.msra.mxu0 0
    %2078 = vmatprep.subr.bf16.mxu0 0
    %2079 = vmatpush2.bf16.msra.mxu0 0
    %2080 = vmatprep.mubr.bf16.mxu0 0
    %2081 = vmatmul.mubr.bf16.gmra.mxu0 %v1966
    %v2082 = vpop.f32.mrf.mxu0
    %v2083 = vadd.f32 0.0, %v2082
    %v2084 = vpop.f32.mrf.mxu0
    %v2085 = vadd.f32 0.0, %v2084
    %v2086 = vpop.f32.mrf.mxu0
    %v2087 = vpop.f32.mrf.mxu0
    %2088 = vdwg.mxu0
    %v2089 = vadd.f32 %v1948, %v2083
    %v2090 = vadd.f32 %v1949, %v2085
    %v2091 = vadd.f32 %v2089, %v1158
    %v2092 = vadd.f32 %v2090, %v1162
    %vm2093 = vcmp.gt.f32.partialorder %v2091, 0.0
    %vm2094 = vcmp.gt.f32.partialorder %v2092, 0.0
    %v2095 = vmul.f32 %v2091, 0.2
    %v2096 = vmul.f32 %v2092, 0.2
    %v2097 = vsel %vm2093, %v2091, %v2095
    %v2098 = vsel %vm2094, %v2092, %v2096
    %v2099 = vadd.f32 %v2097, %v1178
    %v2100 = vadd.f32 %v2098, %v1182
    %v2101 = vpack.c.bf16 %v2099, %v2099
    %v2102 = vpack.c.bf16 %v2100, %v2100
    %v2103 = vld [vmem:[#allocation3 + $0x200] sm:$0xff]
    %v2104 = vld [vmem:[#allocation3 + $0x208] sm:$0xff]
    %v2105 = vld [vmem:[#allocation3 + $0x210] sm:$0xff]
    %v2106 = vld [vmem:[#allocation3 + $0x218] sm:$0xff]
    %v2107 = vld [vmem:[#allocation3 + $0x220] sm:$0xff]
    %v2108 = vld [vmem:[#allocation3 + $0x228] sm:$0xff]
    %v2109 = vld [vmem:[#allocation3 + $0x230] sm:$0xff]
    %v2110 = vld [vmem:[#allocation3 + $0x238] sm:$0xff]
    %v2111 = vld [vmem:[#allocation3 + $0x240] sm:$0xff]
    %v2112 = vld [vmem:[#allocation3 + $0x248] sm:$0xff]
    %v2113 = vld [vmem:[#allocation3 + $0x250] sm:$0xff]
    %v2114 = vld [vmem:[#allocation3 + $0x258] sm:$0xff]
    %v2115 = vld [vmem:[#allocation3 + $0x260] sm:$0xff]
    %v2116 = vld [vmem:[#allocation3 + $0x268] sm:$0xff]
    %v2117 = vld [vmem:[#allocation3 + $0x270] sm:$0xff]
    %v2118 = vld [vmem:[#allocation3 + $0x278] sm:$0xff]
    %v2119 = vld [vmem:[#allocation3 + $0x280] sm:$0xff]
    %v2120 = vld [vmem:[#allocation3 + $0x288] sm:$0xff]
    %v2121 = vld [vmem:[#allocation3 + $0x290] sm:$0xff]
    %v2122 = vld [vmem:[#allocation3 + $0x298] sm:$0xff]
    %v2123 = vld [vmem:[#allocation3 + $0x2a0] sm:$0xff]
    %v2124 = vld [vmem:[#allocation3 + $0x2a8] sm:$0xff]
    %v2125 = vld [vmem:[#allocation3 + $0x2b0] sm:$0xff]
    %v2126 = vld [vmem:[#allocation3 + $0x2b8] sm:$0xff]
    %v2127 = vld [vmem:[#allocation3 + $0x2c0] sm:$0xff]
    %v2128 = vld [vmem:[#allocation3 + $0x2c8] sm:$0xff]
    %v2129 = vld [vmem:[#allocation3 + $0x2d0] sm:$0xff]
    %v2130 = vld [vmem:[#allocation3 + $0x2d8] sm:$0xff]
    %v2131 = vld [vmem:[#allocation3 + $0x2e0] sm:$0xff]
    %v2132 = vld [vmem:[#allocation3 + $0x2e8] sm:$0xff]
    %v2133 = vld [vmem:[#allocation3 + $0x2f0] sm:$0xff]
    %v2134 = vld [vmem:[#allocation3 + $0x2f8] sm:$0xff]
    %v2135 = vld [vmem:[#allocation3 + $0x300] sm:$0xff]
    %v2136 = vld [vmem:[#allocation3 + $0x308] sm:$0xff]
    %v2137 = vld [vmem:[#allocation3 + $0x310] sm:$0xff]
    %v2138 = vld [vmem:[#allocation3 + $0x318] sm:$0xff]
    %v2139 = vld [vmem:[#allocation3 + $0x320] sm:$0xff]
    %v2140 = vld [vmem:[#allocation3 + $0x328] sm:$0xff]
    %v2141 = vld [vmem:[#allocation3 + $0x330] sm:$0xff]
    %v2142 = vld [vmem:[#allocation3 + $0x338] sm:$0xff]
    %v2143 = vld [vmem:[#allocation3 + $0x340] sm:$0xff]
    %v2144 = vld [vmem:[#allocation3 + $0x348] sm:$0xff]
    %v2145 = vld [vmem:[#allocation3 + $0x350] sm:$0xff]
    %v2146 = vld [vmem:[#allocation3 + $0x358] sm:$0xff]
    %v2147 = vld [vmem:[#allocation3 + $0x360] sm:$0xff]
    %v2148 = vld [vmem:[#allocation3 + $0x368] sm:$0xff]
    %v2149 = vld [vmem:[#allocation3 + $0x370] sm:$0xff]
    %v2150 = vld [vmem:[#allocation3 + $0x378] sm:$0xff]
    %v2151 = vld [vmem:[#allocation3 + $0x380] sm:$0xff]
    %v2152 = vld [vmem:[#allocation3 + $0x388] sm:$0xff]
    %v2153 = vld [vmem:[#allocation3 + $0x390] sm:$0xff]
    %v2154 = vld [vmem:[#allocation3 + $0x398] sm:$0xff]
    %v2155 = vld [vmem:[#allocation3 + $0x3a0] sm:$0xff]
    %v2156 = vld [vmem:[#allocation3 + $0x3a8] sm:$0xff]
    %v2157 = vld [vmem:[#allocation3 + $0x3b0] sm:$0xff]
    %v2158 = vld [vmem:[#allocation3 + $0x3b8] sm:$0xff]
    %v2159 = vld [vmem:[#allocation3 + $0x3c0] sm:$0xff]
    %v2160 = vld [vmem:[#allocation3 + $0x3c8] sm:$0xff]
    %v2161 = vld [vmem:[#allocation3 + $0x3d0] sm:$0xff]
    %v2162 = vld [vmem:[#allocation3 + $0x3d8] sm:$0xff]
    %v2163 = vld [vmem:[#allocation3 + $0x3e0] sm:$0xff]
    %v2164 = vld [vmem:[#allocation3 + $0x3e8] sm:$0xff]
    %v2165 = vld [vmem:[#allocation3 + $0x3f0] sm:$0xff]
    %v2166 = vld [vmem:[#allocation3 + $0x3f8] sm:$0xff]
    %v2231 = vunpack.c.l.b16 %v2103
    %v2232 = vunpack.c.h.b16 %v2103
    %v2233 = vunpack.c.l.b16 %v2104
    %v2234 = vunpack.c.h.b16 %v2104
    %v2235 = vunpack.c.l.b16 %v2105
    %v2236 = vunpack.c.h.b16 %v2105
    %v2237 = vunpack.c.l.b16 %v2106
    %v2238 = vunpack.c.h.b16 %v2106
    %v2239 = vunpack.c.l.b16 %v2107
    %v2240 = vunpack.c.h.b16 %v2107
    %v2241 = vunpack.c.l.b16 %v2108
    %v2242 = vunpack.c.h.b16 %v2108
    %v2243 = vunpack.c.l.b16 %v2109
    %v2244 = vunpack.c.h.b16 %v2109
    %v2245 = vunpack.c.l.b16 %v2110
    %v2246 = vunpack.c.h.b16 %v2110
    %v2247 = vunpack.c.l.b16 %v2111
    %v2248 = vunpack.c.h.b16 %v2111
    %v2249 = vunpack.c.l.b16 %v2112
    %v2250 = vunpack.c.h.b16 %v2112
    %v2251 = vunpack.c.l.b16 %v2113
    %v2252 = vunpack.c.h.b16 %v2113
    %v2253 = vunpack.c.l.b16 %v2114
    %v2254 = vunpack.c.h.b16 %v2114
    %v2255 = vunpack.c.l.b16 %v2115
    %v2256 = vunpack.c.h.b16 %v2115
    %v2257 = vunpack.c.l.b16 %v2116
    %v2258 = vunpack.c.h.b16 %v2116
    %v2259 = vunpack.c.l.b16 %v2117
    %v2260 = vunpack.c.h.b16 %v2117
    %v2261 = vunpack.c.l.b16 %v2118
    %v2262 = vunpack.c.h.b16 %v2118
    %v2263 = vunpack.c.l.b16 %v2119
    %v2264 = vunpack.c.h.b16 %v2119
    %v2265 = vunpack.c.l.b16 %v2120
    %v2266 = vunpack.c.h.b16 %v2120
    %v2267 = vunpack.c.l.b16 %v2121
    %v2268 = vunpack.c.h.b16 %v2121
    %v2269 = vunpack.c.l.b16 %v2122
    %v2270 = vunpack.c.h.b16 %v2122
    %v2271 = vunpack.c.l.b16 %v2123
    %v2272 = vunpack.c.h.b16 %v2123
    %v2273 = vunpack.c.l.b16 %v2124
    %v2274 = vunpack.c.h.b16 %v2124
    %v2275 = vunpack.c.l.b16 %v2125
    %v2276 = vunpack.c.h.b16 %v2125
    %v2277 = vunpack.c.l.b16 %v2126
    %v2278 = vunpack.c.h.b16 %v2126
    %v2279 = vunpack.c.l.b16 %v2127
    %v2280 = vunpack.c.h.b16 %v2127
    %v2281 = vunpack.c.l.b16 %v2128
    %v2282 = vunpack.c.h.b16 %v2128
    %v2283 = vunpack.c.l.b16 %v2129
    %v2284 = vunpack.c.h.b16 %v2129
    %v2285 = vunpack.c.l.b16 %v2130
    %v2286 = vunpack.c.h.b16 %v2130
    %v2287 = vunpack.c.l.b16 %v2131
    %v2288 = vunpack.c.h.b16 %v2131
    %v2289 = vunpack.c.l.b16 %v2132
    %v2290 = vunpack.c.h.b16 %v2132
    %v2291 = vunpack.c.l.b16 %v2133
    %v2292 = vunpack.c.h.b16 %v2133
    %v2293 = vunpack.c.l.b16 %v2134
    %v2294 = vunpack.c.h.b16 %v2134
    %v2295 = vunpack.c.l.b16 %v2135
    %v2296 = vunpack.c.h.b16 %v2135
    %v2297 = vunpack.c.l.b16 %v2136
    %v2298 = vunpack.c.h.b16 %v2136
    %v2299 = vunpack.c.l.b16 %v2137
    %v2300 = vunpack.c.h.b16 %v2137
    %v2301 = vunpack.c.l.b16 %v2138
    %v2302 = vunpack.c.h.b16 %v2138
    %v2303 = vunpack.c.l.b16 %v2139
    %v2304 = vunpack.c.h.b16 %v2139
    %v2305 = vunpack.c.l.b16 %v2140
    %v2306 = vunpack.c.h.b16 %v2140
    %v2307 = vunpack.c.l.b16 %v2141
    %v2308 = vunpack.c.h.b16 %v2141
    %v2309 = vunpack.c.l.b16 %v2142
    %v2310 = vunpack.c.h.b16 %v2142
    %v2311 = vunpack.c.l.b16 %v2143
    %v2312 = vunpack.c.h.b16 %v2143
    %v2313 = vunpack.c.l.b16 %v2144
    %v2314 = vunpack.c.h.b16 %v2144
    %v2315 = vunpack.c.l.b16 %v2145
    %v2316 = vunpack.c.h.b16 %v2145
    %v2317 = vunpack.c.l.b16 %v2146
    %v2318 = vunpack.c.h.b16 %v2146
    %v2319 = vunpack.c.l.b16 %v2147
    %v2320 = vunpack.c.h.b16 %v2147
    %v2321 = vunpack.c.l.b16 %v2148
    %v2322 = vunpack.c.h.b16 %v2148
    %v2323 = vunpack.c.l.b16 %v2149
    %v2324 = vunpack.c.h.b16 %v2149
    %v2325 = vunpack.c.l.b16 %v2150
    %v2326 = vunpack.c.h.b16 %v2150
    %v2327 = vunpack.c.l.b16 %v2151
    %v2328 = vunpack.c.h.b16 %v2151
    %v2329 = vunpack.c.l.b16 %v2152
    %v2330 = vunpack.c.h.b16 %v2152
    %v2331 = vunpack.c.l.b16 %v2153
    %v2332 = vunpack.c.h.b16 %v2153
    %v2333 = vunpack.c.l.b16 %v2154
    %v2334 = vunpack.c.h.b16 %v2154
    %v2335 = vunpack.c.l.b16 %v2155
    %v2336 = vunpack.c.h.b16 %v2155
    %v2337 = vunpack.c.l.b16 %v2156
    %v2338 = vunpack.c.h.b16 %v2156
    %v2339 = vunpack.c.l.b16 %v2157
    %v2340 = vunpack.c.h.b16 %v2157
    %v2341 = vunpack.c.l.b16 %v2158
    %v2342 = vunpack.c.h.b16 %v2158
    %v2343 = vunpack.c.l.b16 %v2159
    %v2344 = vunpack.c.h.b16 %v2159
    %v2345 = vunpack.c.l.b16 %v2160
    %v2346 = vunpack.c.h.b16 %v2160
    %v2347 = vunpack.c.l.b16 %v2161
    %v2348 = vunpack.c.h.b16 %v2161
    %v2349 = vunpack.c.l.b16 %v2162
    %v2350 = vunpack.c.h.b16 %v2162
    %v2351 = vunpack.c.l.b16 %v2163
    %v2352 = vunpack.c.h.b16 %v2163
    %v2353 = vunpack.c.l.b16 %v2164
    %v2354 = vunpack.c.h.b16 %v2164
    %v2355 = vunpack.c.l.b16 %v2165
    %v2356 = vunpack.c.h.b16 %v2165
    %v2357 = vunpack.c.l.b16 %v2166
    %v2358 = vunpack.c.h.b16 %v2166
    %v2359 = vpack.c.b16 %v2235, %v2231
    %v2360 = vpack.c.b16 %v2236, %v2232
    %v2361 = vpack.c.b16 %v2237, %v2233
    %v2362 = vpack.c.b16 %v2238, %v2234
    %v2363 = vpack.c.b16 %v2243, %v2239
    %v2364 = vpack.c.b16 %v2244, %v2240
    %v2365 = vpack.c.b16 %v2245, %v2241
    %v2366 = vpack.c.b16 %v2246, %v2242
    %v2367 = vpack.c.b16 %v2251, %v2247
    %v2368 = vpack.c.b16 %v2252, %v2248
    %v2369 = vpack.c.b16 %v2253, %v2249
    %v2370 = vpack.c.b16 %v2254, %v2250
    %v2371 = vpack.c.b16 %v2259, %v2255
    %v2372 = vpack.c.b16 %v2260, %v2256
    %v2373 = vpack.c.b16 %v2261, %v2257
    %v2374 = vpack.c.b16 %v2262, %v2258
    %v2375 = vpack.c.b16 %v2267, %v2263
    %v2376 = vpack.c.b16 %v2268, %v2264
    %v2377 = vpack.c.b16 %v2269, %v2265
    %v2378 = vpack.c.b16 %v2270, %v2266
    %v2379 = vpack.c.b16 %v2275, %v2271
    %v2380 = vpack.c.b16 %v2276, %v2272
    %v2381 = vpack.c.b16 %v2277, %v2273
    %v2382 = vpack.c.b16 %v2278, %v2274
    %v2383 = vpack.c.b16 %v2283, %v2279
    %v2384 = vpack.c.b16 %v2284, %v2280
    %v2385 = vpack.c.b16 %v2285, %v2281
    %v2386 = vpack.c.b16 %v2286, %v2282
    %v2387 = vpack.c.b16 %v2291, %v2287
    %v2388 = vpack.c.b16 %v2292, %v2288
    %v2389 = vpack.c.b16 %v2293, %v2289
    %v2390 = vpack.c.b16 %v2294, %v2290
    %v2391 = vpack.c.b16 %v2299, %v2295
    %v2392 = vpack.c.b16 %v2300, %v2296
    %v2393 = vpack.c.b16 %v2301, %v2297
    %v2394 = vpack.c.b16 %v2302, %v2298
    %v2395 = vpack.c.b16 %v2307, %v2303
    %v2396 = vpack.c.b16 %v2308, %v2304
    %v2397 = vpack.c.b16 %v2309, %v2305
    %v2398 = vpack.c.b16 %v2310, %v2306
    %v2399 = vpack.c.b16 %v2315, %v2311
    %v2400 = vpack.c.b16 %v2316, %v2312
    %v2401 = vpack.c.b16 %v2317, %v2313
    %v2402 = vpack.c.b16 %v2318, %v2314
    %v2403 = vpack.c.b16 %v2323, %v2319
    %v2404 = vpack.c.b16 %v2324, %v2320
    %v2405 = vpack.c.b16 %v2325, %v2321
    %v2406 = vpack.c.b16 %v2326, %v2322
    %v2407 = vpack.c.b16 %v2331, %v2327
    %v2408 = vpack.c.b16 %v2332, %v2328
    %v2409 = vpack.c.b16 %v2333, %v2329
    %v2410 = vpack.c.b16 %v2334, %v2330
    %v2411 = vpack.c.b16 %v2339, %v2335
    %v2412 = vpack.c.b16 %v2340, %v2336
    %v2413 = vpack.c.b16 %v2341, %v2337
    %v2414 = vpack.c.b16 %v2342, %v2338
    %v2415 = vpack.c.b16 %v2347, %v2343
    %v2416 = vpack.c.b16 %v2348, %v2344
    %v2417 = vpack.c.b16 %v2349, %v2345
    %v2418 = vpack.c.b16 %v2350, %v2346
    %v2419 = vpack.c.b16 %v2355, %v2351
    %v2420 = vpack.c.b16 %v2356, %v2352
    %v2421 = vpack.c.b16 %v2357, %v2353
    %v2422 = vpack.c.b16 %v2358, %v2354
    %2487 = vmatprep.subr.bf16.mxu0 %v2388
    %2488 = vmatpush1.bf16.msra.mxu0 %v2387
    %2489 = vmatprep.subr.bf16.mxu0 %v2384
    %2490 = vmatpush1.bf16.msra.mxu0 %v2383
    %2491 = vmatprep.subr.bf16.mxu0 %v2380
    %2492 = vmatpush1.bf16.msra.mxu0 %v2379
    %2493 = vmatprep.subr.bf16.mxu0 %v2376
    %2494 = vmatpush1.bf16.msra.mxu0 %v2375
    %2495 = vmatprep.subr.bf16.mxu0 %v2372
    %2496 = vmatpush1.bf16.msra.mxu0 %v2371
    %2497 = vmatprep.subr.bf16.mxu0 %v2368
    %2498 = vmatpush1.bf16.msra.mxu0 %v2367
    %2499 = vmatprep.subr.bf16.mxu0 %v2364
    %2500 = vmatpush1.bf16.msra.mxu0 %v2363
    %2501 = vmatprep.subr.bf16.mxu0 %v2360
    %2502 = vmatpush1.bf16.msra.mxu0 %v2359
    %2503 = vmatprep.subr.bf16.mxu0 %v2420
    %2504 = vmatpush2.bf16.msra.mxu0 %v2419
    %2505 = vmatprep.subr.bf16.mxu0 %v2416
    %2506 = vmatpush2.bf16.msra.mxu0 %v2415
    %2507 = vmatprep.subr.bf16.mxu0 %v2412
    %2508 = vmatpush2.bf16.msra.mxu0 %v2411
    %2509 = vmatprep.subr.bf16.mxu0 %v2408
    %2510 = vmatpush2.bf16.msra.mxu0 %v2407
    %2511 = vmatprep.subr.bf16.mxu0 %v2404
    %2512 = vmatpush2.bf16.msra.mxu0 %v2403
    %2513 = vmatprep.subr.bf16.mxu0 %v2400
    %2514 = vmatpush2.bf16.msra.mxu0 %v2399
    %2515 = vmatprep.subr.bf16.mxu0 %v2396
    %2516 = vmatpush2.bf16.msra.mxu0 %v2395
    %2517 = vmatprep.subr.bf16.mxu0 %v2392
    %2518 = vmatpush2.bf16.msra.mxu0 %v2391
    %2519 = vmatprep.mubr.bf16.mxu0 %v2102
    %2520 = vmatmul.mubr.bf16.gmra.mxu0 %v2101
    %v2521 = vpop.f32.mrf.mxu0
    %v2522 = vadd.f32 0.0, %v2521
    %v2523 = vpop.f32.mrf.mxu0
    %v2524 = vadd.f32 0.0, %v2523
    %v2525 = vpop.f32.mrf.mxu0
    %v2526 = vpop.f32.mrf.mxu0
    %2527 = vdwg.mxu0
    %2528 = vmatprep.subr.bf16.mxu0 %v2390
    %2529 = vmatpush1.bf16.msra.mxu0 %v2389
    %2530 = vmatprep.subr.bf16.mxu0 %v2386
    %2531 = vmatpush1.bf16.msra.mxu0 %v2385
    %2532 = vmatprep.subr.bf16.mxu0 %v2382
    %2533 = vmatpush1.bf16.msra.mxu0 %v2381
    %2534 = vmatprep.subr.bf16.mxu0 %v2378
    %2535 = vmatpush1.bf16.msra.mxu0 %v2377
    %2536 = vmatprep.subr.bf16.mxu0 %v2374
    %2537 = vmatpush1.bf16.msra.mxu0 %v2373
    %2538 = vmatprep.subr.bf16.mxu0 %v2370
    %2539 = vmatpush1.bf16.msra.mxu0 %v2369
    %2540 = vmatprep.subr.bf16.mxu0 %v2366
    %2541 = vmatpush1.bf16.msra.mxu0 %v2365
    %2542 = vmatprep.subr.bf16.mxu0 %v2362
    %2543 = vmatpush1.bf16.msra.mxu0 %v2361
    %2544 = vmatprep.subr.bf16.mxu0 %v2422
    %2545 = vmatpush2.bf16.msra.mxu0 %v2421
    %2546 = vmatprep.subr.bf16.mxu0 %v2418
    %2547 = vmatpush2.bf16.msra.mxu0 %v2417
    %2548 = vmatprep.subr.bf16.mxu0 %v2414
    %2549 = vmatpush2.bf16.msra.mxu0 %v2413
    %2550 = vmatprep.subr.bf16.mxu0 %v2410
    %2551 = vmatpush2.bf16.msra.mxu0 %v2409
    %2552 = vmatprep.subr.bf16.mxu0 %v2406
    %2553 = vmatpush2.bf16.msra.mxu0 %v2405
    %2554 = vmatprep.subr.bf16.mxu0 %v2402
    %2555 = vmatpush2.bf16.msra.mxu0 %v2401
    %2556 = vmatprep.subr.bf16.mxu0 %v2398
    %2557 = vmatpush2.bf16.msra.mxu0 %v2397
    %2558 = vmatprep.subr.bf16.mxu0 %v2394
    %2559 = vmatpush2.bf16.msra.mxu0 %v2393
    %2560 = vmatprep.mubr.bf16.mxu0 %v2102
    %2561 = vmatmul.mubr.bf16.gmra.mxu0 %v2101
    %v2562 = vpop.f32.mrf.mxu0
    %v2563 = vadd.f32 0.0, %v2562
    %v2564 = vpop.f32.mrf.mxu0
    %v2565 = vadd.f32 0.0, %v2564
    %v2566 = vpop.f32.mrf.mxu0
    %v2567 = vpop.f32.mrf.mxu0
    %2568 = vdwg.mxu0
    %v2633 = vunpack.c.l.b16 %v1189
    %v2634 = vunpack.c.h.b16 %v1189
    %v2635 = vunpack.c.l.b16 %v1190
    %v2636 = vunpack.c.h.b16 %v1190
    %v2637 = vunpack.c.l.b16 %v1191
    %v2638 = vunpack.c.h.b16 %v1191
    %v2639 = vunpack.c.l.b16 %v1192
    %v2640 = vunpack.c.h.b16 %v1192
    %v2641 = vunpack.c.l.b16 %v1193
    %v2642 = vunpack.c.h.b16 %v1193
    %v2643 = vunpack.c.l.b16 %v1194
    %v2644 = vunpack.c.h.b16 %v1194
    %v2645 = vunpack.c.l.b16 %v1195
    %v2646 = vunpack.c.h.b16 %v1195
    %v2647 = vunpack.c.l.b16 %v1196
    %v2648 = vunpack.c.h.b16 %v1196
    %v2649 = vunpack.c.l.b16 %v1197
    %v2650 = vunpack.c.h.b16 %v1197
    %v2651 = vunpack.c.l.b16 %v1198
    %v2652 = vunpack.c.h.b16 %v1198
    %v2653 = vunpack.c.l.b16 %v1199
    %v2654 = vunpack.c.h.b16 %v1199
    %v2655 = vunpack.c.l.b16 %v1200
    %v2656 = vunpack.c.h.b16 %v1200
    %v2657 = vunpack.c.l.b16 %v1201
    %v2658 = vunpack.c.h.b16 %v1201
    %v2659 = vunpack.c.l.b16 %v1202
    %v2660 = vunpack.c.h.b16 %v1202
    %v2661 = vunpack.c.l.b16 %v1203
    %v2662 = vunpack.c.h.b16 %v1203
    %v2663 = vunpack.c.l.b16 %v1204
    %v2664 = vunpack.c.h.b16 %v1204
    %v2665 = vunpack.c.l.b16 %v1205
    %v2666 = vunpack.c.h.b16 %v1205
    %v2667 = vunpack.c.l.b16 %v1206
    %v2668 = vunpack.c.h.b16 %v1206
    %v2669 = vunpack.c.l.b16 %v1207
    %v2670 = vunpack.c.h.b16 %v1207
    %v2671 = vunpack.c.l.b16 %v1208
    %v2672 = vunpack.c.h.b16 %v1208
    %v2673 = vunpack.c.l.b16 %v1209
    %v2674 = vunpack.c.h.b16 %v1209
    %v2675 = vunpack.c.l.b16 %v1210
    %v2676 = vunpack.c.h.b16 %v1210
    %v2677 = vunpack.c.l.b16 %v1211
    %v2678 = vunpack.c.h.b16 %v1211
    %v2679 = vunpack.c.l.b16 %v1212
    %v2680 = vunpack.c.h.b16 %v1212
    %v2681 = vunpack.c.l.b16 %v1213
    %v2682 = vunpack.c.h.b16 %v1213
    %v2683 = vunpack.c.l.b16 %v1214
    %v2684 = vunpack.c.h.b16 %v1214
    %v2685 = vunpack.c.l.b16 %v1215
    %v2686 = vunpack.c.h.b16 %v1215
    %v2687 = vunpack.c.l.b16 %v1216
    %v2688 = vunpack.c.h.b16 %v1216
    %v2689 = vunpack.c.l.b16 %v1217
    %v2690 = vunpack.c.h.b16 %v1217
    %v2691 = vunpack.c.l.b16 %v1218
    %v2692 = vunpack.c.h.b16 %v1218
    %v2693 = vunpack.c.l.b16 %v1219
    %v2694 = vunpack.c.h.b16 %v1219
    %v2695 = vunpack.c.l.b16 %v1220
    %v2696 = vunpack.c.h.b16 %v1220
    %v2697 = vunpack.c.l.b16 %v1221
    %v2698 = vunpack.c.h.b16 %v1221
    %v2699 = vunpack.c.l.b16 %v1222
    %v2700 = vunpack.c.h.b16 %v1222
    %v2701 = vunpack.c.l.b16 %v1223
    %v2702 = vunpack.c.h.b16 %v1223
    %v2703 = vunpack.c.l.b16 %v1224
    %v2704 = vunpack.c.h.b16 %v1224
    %v2705 = vunpack.c.l.b16 %v1225
    %v2706 = vunpack.c.h.b16 %v1225
    %v2707 = vunpack.c.l.b16 %v1226
    %v2708 = vunpack.c.h.b16 %v1226
    %v2709 = vunpack.c.l.b16 %v1227
    %v2710 = vunpack.c.h.b16 %v1227
    %v2711 = vunpack.c.l.b16 %v1228
    %v2712 = vunpack.c.h.b16 %v1228
    %v2713 = vunpack.c.l.b16 %v1229
    %v2714 = vunpack.c.h.b16 %v1229
    %v2715 = vunpack.c.l.b16 %v1230
    %v2716 = vunpack.c.h.b16 %v1230
    %v2717 = vunpack.c.l.b16 %v1231
    %v2718 = vunpack.c.h.b16 %v1231
    %v2719 = vunpack.c.l.b16 %v1232
    %v2720 = vunpack.c.h.b16 %v1232
    %v2721 = vunpack.c.l.b16 %v1233
    %v2722 = vunpack.c.h.b16 %v1233
    %v2723 = vunpack.c.l.b16 %v1234
    %v2724 = vunpack.c.h.b16 %v1234
    %v2725 = vunpack.c.l.b16 %v1235
    %v2726 = vunpack.c.h.b16 %v1235
    %v2727 = vunpack.c.l.b16 %v1236
    %v2728 = vunpack.c.h.b16 %v1236
    %v2729 = vunpack.c.l.b16 %v1237
    %v2730 = vunpack.c.h.b16 %v1237
    %v2731 = vunpack.c.l.b16 %v1238
    %v2732 = vunpack.c.h.b16 %v1238
    %v2733 = vunpack.c.l.b16 %v1239
    %v2734 = vunpack.c.h.b16 %v1239
    %v2735 = vunpack.c.l.b16 %v1240
    %v2736 = vunpack.c.h.b16 %v1240
    %v2737 = vunpack.c.l.b16 %v1241
    %v2738 = vunpack.c.h.b16 %v1241
    %v2739 = vunpack.c.l.b16 %v1242
    %v2740 = vunpack.c.h.b16 %v1242
    %v2741 = vunpack.c.l.b16 %v1243
    %v2742 = vunpack.c.h.b16 %v1243
    %v2743 = vunpack.c.l.b16 %v1244
    %v2744 = vunpack.c.h.b16 %v1244
    %v2745 = vunpack.c.l.b16 %v1245
    %v2746 = vunpack.c.h.b16 %v1245
    %v2747 = vunpack.c.l.b16 %v1246
    %v2748 = vunpack.c.h.b16 %v1246
    %v2749 = vunpack.c.l.b16 %v1247
    %v2750 = vunpack.c.h.b16 %v1247
    %v2751 = vunpack.c.l.b16 %v1248
    %v2752 = vunpack.c.h.b16 %v1248
    %v2753 = vunpack.c.l.b16 %v1249
    %v2754 = vunpack.c.h.b16 %v1249
    %v2755 = vunpack.c.l.b16 %v1250
    %v2756 = vunpack.c.h.b16 %v1250
    %v2757 = vunpack.c.l.b16 %v1251
    %v2758 = vunpack.c.h.b16 %v1251
    %v2759 = vunpack.c.l.b16 %v1252
    %v2760 = vunpack.c.h.b16 %v1252
    %v2761 = vpack.c.b16 %v2637, %v2633
    %v2762 = vpack.c.b16 %v2638, %v2634
    %v2763 = vpack.c.b16 %v2639, %v2635
    %v2764 = vpack.c.b16 %v2640, %v2636
    %v2765 = vpack.c.b16 %v2645, %v2641
    %v2766 = vpack.c.b16 %v2646, %v2642
    %v2767 = vpack.c.b16 %v2647, %v2643
    %v2768 = vpack.c.b16 %v2648, %v2644
    %v2769 = vpack.c.b16 %v2653, %v2649
    %v2770 = vpack.c.b16 %v2654, %v2650
    %v2771 = vpack.c.b16 %v2655, %v2651
    %v2772 = vpack.c.b16 %v2656, %v2652
    %v2773 = vpack.c.b16 %v2661, %v2657
    %v2774 = vpack.c.b16 %v2662, %v2658
    %v2775 = vpack.c.b16 %v2663, %v2659
    %v2776 = vpack.c.b16 %v2664, %v2660
    %v2777 = vpack.c.b16 %v2669, %v2665
    %v2778 = vpack.c.b16 %v2670, %v2666
    %v2779 = vpack.c.b16 %v2671, %v2667
    %v2780 = vpack.c.b16 %v2672, %v2668
    %v2781 = vpack.c.b16 %v2677, %v2673
    %v2782 = vpack.c.b16 %v2678, %v2674
    %v2783 = vpack.c.b16 %v2679, %v2675
    %v2784 = vpack.c.b16 %v2680, %v2676
    %v2785 = vpack.c.b16 %v2685, %v2681
    %v2786 = vpack.c.b16 %v2686, %v2682
    %v2787 = vpack.c.b16 %v2687, %v2683
    %v2788 = vpack.c.b16 %v2688, %v2684
    %v2789 = vpack.c.b16 %v2693, %v2689
    %v2790 = vpack.c.b16 %v2694, %v2690
    %v2791 = vpack.c.b16 %v2695, %v2691
    %v2792 = vpack.c.b16 %v2696, %v2692
    %v2793 = vpack.c.b16 %v2701, %v2697
    %v2794 = vpack.c.b16 %v2702, %v2698
    %v2795 = vpack.c.b16 %v2703, %v2699
    %v2796 = vpack.c.b16 %v2704, %v2700
    %v2797 = vpack.c.b16 %v2709, %v2705
    %v2798 = vpack.c.b16 %v2710, %v2706
    %v2799 = vpack.c.b16 %v2711, %v2707
    %v2800 = vpack.c.b16 %v2712, %v2708
    %v2801 = vpack.c.b16 %v2717, %v2713
    %v2802 = vpack.c.b16 %v2718, %v2714
    %v2803 = vpack.c.b16 %v2719, %v2715
    %v2804 = vpack.c.b16 %v2720, %v2716
    %v2805 = vpack.c.b16 %v2725, %v2721
    %v2806 = vpack.c.b16 %v2726, %v2722
    %v2807 = vpack.c.b16 %v2727, %v2723
    %v2808 = vpack.c.b16 %v2728, %v2724
    %v2809 = vpack.c.b16 %v2733, %v2729
    %v2810 = vpack.c.b16 %v2734, %v2730
    %v2811 = vpack.c.b16 %v2735, %v2731
    %v2812 = vpack.c.b16 %v2736, %v2732
    %v2813 = vpack.c.b16 %v2741, %v2737
    %v2814 = vpack.c.b16 %v2742, %v2738
    %v2815 = vpack.c.b16 %v2743, %v2739
    %v2816 = vpack.c.b16 %v2744, %v2740
    %v2817 = vpack.c.b16 %v2749, %v2745
    %v2818 = vpack.c.b16 %v2750, %v2746
    %v2819 = vpack.c.b16 %v2751, %v2747
    %v2820 = vpack.c.b16 %v2752, %v2748
    %v2821 = vpack.c.b16 %v2757, %v2753
    %v2822 = vpack.c.b16 %v2758, %v2754
    %v2823 = vpack.c.b16 %v2759, %v2755
    %v2824 = vpack.c.b16 %v2760, %v2756
    %2889 = vmatprep.subr.bf16.mxu0 %v2790
    %2890 = vmatpush1.bf16.msra.mxu0 %v2789
    %2891 = vmatprep.subr.bf16.mxu0 %v2786
    %2892 = vmatpush1.bf16.msra.mxu0 %v2785
    %2893 = vmatprep.subr.bf16.mxu0 %v2782
    %2894 = vmatpush1.bf16.msra.mxu0 %v2781
    %2895 = vmatprep.subr.bf16.mxu0 %v2778
    %2896 = vmatpush1.bf16.msra.mxu0 %v2777
    %2897 = vmatprep.subr.bf16.mxu0 %v2774
    %2898 = vmatpush1.bf16.msra.mxu0 %v2773
    %2899 = vmatprep.subr.bf16.mxu0 %v2770
    %2900 = vmatpush1.bf16.msra.mxu0 %v2769
    %2901 = vmatprep.subr.bf16.mxu0 %v2766
    %2902 = vmatpush1.bf16.msra.mxu0 %v2765
    %2903 = vmatprep.subr.bf16.mxu0 %v2762
    %2904 = vmatpush1.bf16.msra.mxu0 %v2761
    %2905 = vmatprep.subr.bf16.mxu0 %v2822
    %2906 = vmatpush2.bf16.msra.mxu0 %v2821
    %2907 = vmatprep.subr.bf16.mxu0 %v2818
    %2908 = vmatpush2.bf16.msra.mxu0 %v2817
    %2909 = vmatprep.subr.bf16.mxu0 %v2814
    %2910 = vmatpush2.bf16.msra.mxu0 %v2813
    %2911 = vmatprep.subr.bf16.mxu0 %v2810
    %2912 = vmatpush2.bf16.msra.mxu0 %v2809
    %2913 = vmatprep.subr.bf16.mxu0 %v2806
    %2914 = vmatpush2.bf16.msra.mxu0 %v2805
    %2915 = vmatprep.subr.bf16.mxu0 %v2802
    %2916 = vmatpush2.bf16.msra.mxu0 %v2801
    %2917 = vmatprep.subr.bf16.mxu0 %v2798
    %2918 = vmatpush2.bf16.msra.mxu0 %v2797
    %2919 = vmatprep.subr.bf16.mxu0 %v2794
    %2920 = vmatpush2.bf16.msra.mxu0 %v2793
    %2921 = vmatprep.mubr.bf16.mxu0 %v1188
    %2922 = vmatmul.mubr.bf16.gmra.mxu0 %v1187
    %v2923 = vpop.f32.mrf.mxu0
    %v2924 = vadd.f32 %v2522, %v2923
    %v2925 = vpop.f32.mrf.mxu0
    %v2926 = vadd.f32 %v2524, %v2925
    %v2927 = vpop.f32.mrf.mxu0
    %v2928 = vpop.f32.mrf.mxu0
    %2929 = vdwg.mxu0
    %2930 = vmatprep.subr.bf16.mxu0 %v2792
    %2931 = vmatpush1.bf16.msra.mxu0 %v2791
    %2932 = vmatprep.subr.bf16.mxu0 %v2788
    %2933 = vmatpush1.bf16.msra.mxu0 %v2787
    %2934 = vmatprep.subr.bf16.mxu0 %v2784
    %2935 = vmatpush1.bf16.msra.mxu0 %v2783
    %2936 = vmatprep.subr.bf16.mxu0 %v2780
    %2937 = vmatpush1.bf16.msra.mxu0 %v2779
    %2938 = vmatprep.subr.bf16.mxu0 %v2776
    %2939 = vmatpush1.bf16.msra.mxu0 %v2775
    %2940 = vmatprep.subr.bf16.mxu0 %v2772
    %2941 = vmatpush1.bf16.msra.mxu0 %v2771
    %2942 = vmatprep.subr.bf16.mxu0 %v2768
    %2943 = vmatpush1.bf16.msra.mxu0 %v2767
    %2944 = vmatprep.subr.bf16.mxu0 %v2764
    %2945 = vmatpush1.bf16.msra.mxu0 %v2763
    %2946 = vmatprep.subr.bf16.mxu0 %v2824
    %2947 = vmatpush2.bf16.msra.mxu0 %v2823
    %2948 = vmatprep.subr.bf16.mxu0 %v2820
    %2949 = vmatpush2.bf16.msra.mxu0 %v2819
    %2950 = vmatprep.subr.bf16.mxu0 %v2816
    %2951 = vmatpush2.bf16.msra.mxu0 %v2815
    %2952 = vmatprep.subr.bf16.mxu0 %v2812
    %2953 = vmatpush2.bf16.msra.mxu0 %v2811
    %2954 = vmatprep.subr.bf16.mxu0 %v2808
    %2955 = vmatpush2.bf16.msra.mxu0 %v2807
    %2956 = vmatprep.subr.bf16.mxu0 %v2804
    %2957 = vmatpush2.bf16.msra.mxu0 %v2803
    %2958 = vmatprep.subr.bf16.mxu0 %v2800
    %2959 = vmatpush2.bf16.msra.mxu0 %v2799
    %2960 = vmatprep.subr.bf16.mxu0 %v2796
    %2961 = vmatpush2.bf16.msra.mxu0 %v2795
    %2962 = vmatprep.mubr.bf16.mxu0 %v1188
    %2963 = vmatmul.mubr.bf16.gmra.mxu0 %v1187
    %v2964 = vpop.f32.mrf.mxu0
    %v2965 = vadd.f32 %v2563, %v2964
    %v2966 = vpop.f32.mrf.mxu0
    %v2967 = vadd.f32 %v2565, %v2966
    %v2968 = vpop.f32.mrf.mxu0
    %v2969 = vpop.f32.mrf.mxu0
    %2970 = vdwg.mxu0
    %v2971 = vld [vmem:[%s4 + $0x500] sm:$0xff]
    %v2972 = vld [vmem:[%s4 + $0x508] sm:$0xff]
    %v2973 = vld [vmem:[%s4 + $0x510] sm:$0xff]
    %v2974 = vld [vmem:[%s4 + $0x518] sm:$0xff]
    %v2975 = vld [vmem:[%s4 + $0x520] sm:$0xff]
    %v2976 = vld [vmem:[%s4 + $0x528] sm:$0xff]
    %v2977 = vld [vmem:[%s4 + $0x530] sm:$0xff]
    %v2978 = vld [vmem:[%s4 + $0x538] sm:$0xff]
    %v2979 = vld [vmem:[%s4 + $0x540] sm:$0xff]
    %v2980 = vld [vmem:[%s4 + $0x548] sm:$0xff]
    %v2981 = vld [vmem:[%s4 + $0x550] sm:$0xff]
    %v2982 = vld [vmem:[%s4 + $0x558] sm:$0xff]
    %v2983 = vld [vmem:[%s4 + $0x560] sm:$0xff]
    %v2984 = vld [vmem:[%s4 + $0x568] sm:$0xff]
    %v2985 = vld [vmem:[%s4 + $0x570] sm:$0xff]
    %v2986 = vld [vmem:[%s4 + $0x578] sm:$0xff]
    %v2987 = vld [vmem:[%s4 + $0x580] sm:$0xff]
    %v2988 = vld [vmem:[%s4 + $0x588] sm:$0xff]
    %v2989 = vld [vmem:[%s4 + $0x590] sm:$0xff]
    %v2990 = vld [vmem:[%s4 + $0x598] sm:$0xff]
    %v2991 = vld [vmem:[%s4 + $0x5a0] sm:$0xff]
    %v2992 = vld [vmem:[%s4 + $0x5a8] sm:$0xff]
    %v2993 = vld [vmem:[%s4 + $0x5b0] sm:$0xff]
    %v2994 = vld [vmem:[%s4 + $0x5b8] sm:$0xff]
    %v2995 = vld [vmem:[%s4 + $0x5c0] sm:$0xff]
    %v2996 = vld [vmem:[%s4 + $0x5c8] sm:$0xff]
    %v2997 = vld [vmem:[%s4 + $0x5d0] sm:$0xff]
    %v2998 = vld [vmem:[%s4 + $0x5d8] sm:$0xff]
    %v2999 = vld [vmem:[%s4 + $0x5e0] sm:$0xff]
    %v3000 = vld [vmem:[%s4 + $0x5e8] sm:$0xff]
    %v3001 = vld [vmem:[%s4 + $0x5f0] sm:$0xff]
    %v3002 = vld [vmem:[%s4 + $0x5f8] sm:$0xff]
    %v3019 = vunpack.c.l.b16 %v2987
    %v3020 = vunpack.c.h.b16 %v2987
    %v3021 = vunpack.c.l.b16 %v2988
    %v3022 = vunpack.c.h.b16 %v2988
    %v3023 = vunpack.c.l.b16 %v2989
    %v3024 = vunpack.c.h.b16 %v2989
    %v3025 = vunpack.c.l.b16 %v2990
    %v3026 = vunpack.c.h.b16 %v2990
    %v3027 = vunpack.c.l.b16 %v2991
    %v3028 = vunpack.c.h.b16 %v2991
    %v3029 = vunpack.c.l.b16 %v2992
    %v3030 = vunpack.c.h.b16 %v2992
    %v3031 = vunpack.c.l.b16 %v2993
    %v3032 = vunpack.c.h.b16 %v2993
    %v3033 = vunpack.c.l.b16 %v2994
    %v3034 = vunpack.c.h.b16 %v2994
    %v3035 = vunpack.c.l.b16 %v2995
    %v3036 = vunpack.c.h.b16 %v2995
    %v3037 = vunpack.c.l.b16 %v2996
    %v3038 = vunpack.c.h.b16 %v2996
    %v3039 = vunpack.c.l.b16 %v2997
    %v3040 = vunpack.c.h.b16 %v2997
    %v3041 = vunpack.c.l.b16 %v2998
    %v3042 = vunpack.c.h.b16 %v2998
    %v3043 = vunpack.c.l.b16 %v2999
    %v3044 = vunpack.c.h.b16 %v2999
    %v3045 = vunpack.c.l.b16 %v3000
    %v3046 = vunpack.c.h.b16 %v3000
    %v3047 = vunpack.c.l.b16 %v3001
    %v3048 = vunpack.c.h.b16 %v3001
    %v3049 = vunpack.c.l.b16 %v3002
    %v3050 = vunpack.c.h.b16 %v3002
    %v3051 = vpack.c.b16 %v3021, %v3019
    %v3052 = vpack.c.b16 %v3022, %v3020
    %v3053 = vpack.c.b16 %v3025, %v3023
    %v3054 = vpack.c.b16 %v3026, %v3024
    %v3055 = vpack.c.b16 %v3029, %v3027
    %v3056 = vpack.c.b16 %v3030, %v3028
    %v3057 = vpack.c.b16 %v3033, %v3031
    %v3058 = vpack.c.b16 %v3034, %v3032
    %v3059 = vpack.c.b16 %v3037, %v3035
    %v3060 = vpack.c.b16 %v3038, %v3036
    %v3061 = vpack.c.b16 %v3041, %v3039
    %v3062 = vpack.c.b16 %v3042, %v3040
    %v3063 = vpack.c.b16 %v3045, %v3043
    %v3064 = vpack.c.b16 %v3046, %v3044
    %v3065 = vpack.c.b16 %v3049, %v3047
    %v3066 = vpack.c.b16 %v3050, %v3048
    %3083 = vmatprep.subr.bf16.mxu0 %v3066
    %3084 = vmatpush1.bf16.msra.mxu0 %v3065
    %3085 = vmatprep.subr.bf16.mxu0 %v3064
    %3086 = vmatpush1.bf16.msra.mxu0 %v3063
    %3087 = vmatprep.subr.bf16.mxu0 %v3062
    %3088 = vmatpush1.bf16.msra.mxu0 %v3061
    %3089 = vmatprep.subr.bf16.mxu0 %v3060
    %3090 = vmatpush1.bf16.msra.mxu0 %v3059
    %3091 = vmatprep.subr.bf16.mxu0 %v3058
    %3092 = vmatpush1.bf16.msra.mxu0 %v3057
    %3093 = vmatprep.subr.bf16.mxu0 %v3056
    %3094 = vmatpush1.bf16.msra.mxu0 %v3055
    %3095 = vmatprep.subr.bf16.mxu0 %v3054
    %3096 = vmatpush1.bf16.msra.mxu0 %v3053
    %3097 = vmatprep.subr.bf16.mxu0 %v3052
    %3098 = vmatpush1.bf16.msra.mxu0 %v3051
    %3099 = vmatprep.subr.bf16.mxu0 0
    %3100 = vmatpush2.bf16.msra.mxu0 0
    %3101 = vmatprep.subr.bf16.mxu0 0
    %3102 = vmatpush2.bf16.msra.mxu0 0
    %3103 = vmatprep.subr.bf16.mxu0 0
    %3104 = vmatpush2.bf16.msra.mxu0 0
    %3105 = vmatprep.subr.bf16.mxu0 0
    %3106 = vmatpush2.bf16.msra.mxu0 0
    %3107 = vmatprep.subr.bf16.mxu0 0
    %3108 = vmatpush2.bf16.msra.mxu0 0
    %3109 = vmatprep.subr.bf16.mxu0 0
    %3110 = vmatpush2.bf16.msra.mxu0 0
    %3111 = vmatprep.subr.bf16.mxu0 0
    %3112 = vmatpush2.bf16.msra.mxu0 0
    %3113 = vmatprep.subr.bf16.mxu0 0
    %3114 = vmatpush2.bf16.msra.mxu0 0
    %3115 = vmatprep.mubr.bf16.mxu0 0
    %3116 = vmatmul.mubr.bf16.gmra.mxu0 %v1028
    %v3117 = vpop.f32.mrf.mxu0
    %v3118 = vadd.f32 0.0, %v3117
    %v3119 = vpop.f32.mrf.mxu0
    %v3120 = vadd.f32 0.0, %v3119
    %v3121 = vpop.f32.mrf.mxu0
    %v3122 = vpop.f32.mrf.mxu0
    %3123 = vdwg.mxu0
    %v3140 = vunpack.c.l.b16 %v2971
    %v3141 = vunpack.c.h.b16 %v2971
    %v3142 = vunpack.c.l.b16 %v2972
    %v3143 = vunpack.c.h.b16 %v2972
    %v3144 = vunpack.c.l.b16 %v2973
    %v3145 = vunpack.c.h.b16 %v2973
    %v3146 = vunpack.c.l.b16 %v2974
    %v3147 = vunpack.c.h.b16 %v2974
    %v3148 = vunpack.c.l.b16 %v2975
    %v3149 = vunpack.c.h.b16 %v2975
    %v3150 = vunpack.c.l.b16 %v2976
    %v3151 = vunpack.c.h.b16 %v2976
    %v3152 = vunpack.c.l.b16 %v2977
    %v3153 = vunpack.c.h.b16 %v2977
    %v3154 = vunpack.c.l.b16 %v2978
    %v3155 = vunpack.c.h.b16 %v2978
    %v3156 = vunpack.c.l.b16 %v2979
    %v3157 = vunpack.c.h.b16 %v2979
    %v3158 = vunpack.c.l.b16 %v2980
    %v3159 = vunpack.c.h.b16 %v2980
    %v3160 = vunpack.c.l.b16 %v2981
    %v3161 = vunpack.c.h.b16 %v2981
    %v3162 = vunpack.c.l.b16 %v2982
    %v3163 = vunpack.c.h.b16 %v2982
    %v3164 = vunpack.c.l.b16 %v2983
    %v3165 = vunpack.c.h.b16 %v2983
    %v3166 = vunpack.c.l.b16 %v2984
    %v3167 = vunpack.c.h.b16 %v2984
    %v3168 = vunpack.c.l.b16 %v2985
    %v3169 = vunpack.c.h.b16 %v2985
    %v3170 = vunpack.c.l.b16 %v2986
    %v3171 = vunpack.c.h.b16 %v2986
    %v3172 = vpack.c.b16 %v3142, %v3140
    %v3173 = vpack.c.b16 %v3143, %v3141
    %v3174 = vpack.c.b16 %v3146, %v3144
    %v3175 = vpack.c.b16 %v3147, %v3145
    %v3176 = vpack.c.b16 %v3150, %v3148
    %v3177 = vpack.c.b16 %v3151, %v3149
    %v3178 = vpack.c.b16 %v3154, %v3152
    %v3179 = vpack.c.b16 %v3155, %v3153
    %v3180 = vpack.c.b16 %v3158, %v3156
    %v3181 = vpack.c.b16 %v3159, %v3157
    %v3182 = vpack.c.b16 %v3162, %v3160
    %v3183 = vpack.c.b16 %v3163, %v3161
    %v3184 = vpack.c.b16 %v3166, %v3164
    %v3185 = vpack.c.b16 %v3167, %v3165
    %v3186 = vpack.c.b16 %v3170, %v3168
    %v3187 = vpack.c.b16 %v3171, %v3169
    %3204 = vmatprep.subr.bf16.mxu0 %v3187
    %3205 = vmatpush1.bf16.msra.mxu0 %v3186
    %3206 = vmatprep.subr.bf16.mxu0 %v3185
    %3207 = vmatpush1.bf16.msra.mxu0 %v3184
    %3208 = vmatprep.subr.bf16.mxu0 %v3183
    %3209 = vmatpush1.bf16.msra.mxu0 %v3182
    %3210 = vmatprep.subr.bf16.mxu0 %v3181
    %3211 = vmatpush1.bf16.msra.mxu0 %v3180
    %3212 = vmatprep.subr.bf16.mxu0 %v3179
    %3213 = vmatpush1.bf16.msra.mxu0 %v3178
    %3214 = vmatprep.subr.bf16.mxu0 %v3177
    %3215 = vmatpush1.bf16.msra.mxu0 %v3176
    %3216 = vmatprep.subr.bf16.mxu0 %v3175
    %3217 = vmatpush1.bf16.msra.mxu0 %v3174
    %3218 = vmatprep.subr.bf16.mxu0 %v3173
    %3219 = vmatpush1.bf16.msra.mxu0 %v3172
    %3220 = vmatprep.subr.bf16.mxu0 0
    %3221 = vmatpush2.bf16.msra.mxu0 0
    %3222 = vmatprep.subr.bf16.mxu0 0
    %3223 = vmatpush2.bf16.msra.mxu0 0
    %3224 = vmatprep.subr.bf16.mxu0 0
    %3225 = vmatpush2.bf16.msra.mxu0 0
    %3226 = vmatprep.subr.bf16.mxu0 0
    %3227 = vmatpush2.bf16.msra.mxu0 0
    %3228 = vmatprep.subr.bf16.mxu0 0
    %3229 = vmatpush2.bf16.msra.mxu0 0
    %3230 = vmatprep.subr.bf16.mxu0 0
    %3231 = vmatpush2.bf16.msra.mxu0 0
    %3232 = vmatprep.subr.bf16.mxu0 0
    %3233 = vmatpush2.bf16.msra.mxu0 0
    %3234 = vmatprep.subr.bf16.mxu0 0
    %3235 = vmatpush2.bf16.msra.mxu0 0
    %3236 = vmatprep.mubr.bf16.mxu0 0
    %3237 = vmatmul.mubr.bf16.gmra.mxu0 %v887
    %v3238 = vpop.f32.mrf.mxu0
    %v3239 = vadd.f32 %v3118, %v3238
    %v3240 = vpop.f32.mrf.mxu0
    %v3241 = vadd.f32 %v3120, %v3240
    %v3242 = vpop.f32.mrf.mxu0
    %v3243 = vpop.f32.mrf.mxu0
    %3244 = vdwg.mxu0
    %v3245 = vld [vmem:[%s4 + $0x600] sm:$0xff]
    %v3246 = vld [vmem:[%s4 + $0x608] sm:$0xff]
    %v3247 = vld [vmem:[%s4 + $0x610] sm:$0xff]
    %v3248 = vld [vmem:[%s4 + $0x618] sm:$0xff]
    %v3249 = vld [vmem:[%s4 + $0x620] sm:$0xff]
    %v3250 = vld [vmem:[%s4 + $0x628] sm:$0xff]
    %v3251 = vld [vmem:[%s4 + $0x630] sm:$0xff]
    %v3252 = vld [vmem:[%s4 + $0x638] sm:$0xff]
    %v3253 = vld [vmem:[%s4 + $0x640] sm:$0xff]
    %v3254 = vld [vmem:[%s4 + $0x648] sm:$0xff]
    %v3255 = vld [vmem:[%s4 + $0x650] sm:$0xff]
    %v3256 = vld [vmem:[%s4 + $0x658] sm:$0xff]
    %v3257 = vld [vmem:[%s4 + $0x660] sm:$0xff]
    %v3258 = vld [vmem:[%s4 + $0x668] sm:$0xff]
    %v3259 = vld [vmem:[%s4 + $0x670] sm:$0xff]
    %v3260 = vld [vmem:[%s4 + $0x678] sm:$0xff]
    %v3277 = vunpack.c.l.b16 %v3245
    %v3278 = vunpack.c.h.b16 %v3245
    %v3279 = vunpack.c.l.b16 %v3246
    %v3280 = vunpack.c.h.b16 %v3246
    %v3281 = vunpack.c.l.b16 %v3247
    %v3282 = vunpack.c.h.b16 %v3247
    %v3283 = vunpack.c.l.b16 %v3248
    %v3284 = vunpack.c.h.b16 %v3248
    %v3285 = vunpack.c.l.b16 %v3249
    %v3286 = vunpack.c.h.b16 %v3249
    %v3287 = vunpack.c.l.b16 %v3250
    %v3288 = vunpack.c.h.b16 %v3250
    %v3289 = vunpack.c.l.b16 %v3251
    %v3290 = vunpack.c.h.b16 %v3251
    %v3291 = vunpack.c.l.b16 %v3252
    %v3292 = vunpack.c.h.b16 %v3252
    %v3293 = vunpack.c.l.b16 %v3253
    %v3294 = vunpack.c.h.b16 %v3253
    %v3295 = vunpack.c.l.b16 %v3254
    %v3296 = vunpack.c.h.b16 %v3254
    %v3297 = vunpack.c.l.b16 %v3255
    %v3298 = vunpack.c.h.b16 %v3255
    %v3299 = vunpack.c.l.b16 %v3256
    %v3300 = vunpack.c.h.b16 %v3256
    %v3301 = vunpack.c.l.b16 %v3257
    %v3302 = vunpack.c.h.b16 %v3257
    %v3303 = vunpack.c.l.b16 %v3258
    %v3304 = vunpack.c.h.b16 %v3258
    %v3305 = vunpack.c.l.b16 %v3259
    %v3306 = vunpack.c.h.b16 %v3259
    %v3307 = vunpack.c.l.b16 %v3260
    %v3308 = vunpack.c.h.b16 %v3260
    %v3309 = vpack.c.b16 %v3279, %v3277
    %v3310 = vpack.c.b16 %v3280, %v3278
    %v3311 = vpack.c.b16 %v3283, %v3281
    %v3312 = vpack.c.b16 %v3284, %v3282
    %v3313 = vpack.c.b16 %v3287, %v3285
    %v3314 = vpack.c.b16 %v3288, %v3286
    %v3315 = vpack.c.b16 %v3291, %v3289
    %v3316 = vpack.c.b16 %v3292, %v3290
    %v3317 = vpack.c.b16 %v3295, %v3293
    %v3318 = vpack.c.b16 %v3296, %v3294
    %v3319 = vpack.c.b16 %v3299, %v3297
    %v3320 = vpack.c.b16 %v3300, %v3298
    %v3321 = vpack.c.b16 %v3303, %v3301
    %v3322 = vpack.c.b16 %v3304, %v3302
    %v3323 = vpack.c.b16 %v3307, %v3305
    %v3324 = vpack.c.b16 %v3308, %v3306
    %3341 = vmatprep.subr.bf16.mxu0 %v3324
    %3342 = vmatpush1.bf16.msra.mxu0 %v3323
    %3343 = vmatprep.subr.bf16.mxu0 %v3322
    %3344 = vmatpush1.bf16.msra.mxu0 %v3321
    %3345 = vmatprep.subr.bf16.mxu0 %v3320
    %3346 = vmatpush1.bf16.msra.mxu0 %v3319
    %3347 = vmatprep.subr.bf16.mxu0 %v3318
    %3348 = vmatpush1.bf16.msra.mxu0 %v3317
    %3349 = vmatprep.subr.bf16.mxu0 %v3316
    %3350 = vmatpush1.bf16.msra.mxu0 %v3315
    %3351 = vmatprep.subr.bf16.mxu0 %v3314
    %3352 = vmatpush1.bf16.msra.mxu0 %v3313
    %3353 = vmatprep.subr.bf16.mxu0 %v3312
    %3354 = vmatpush1.bf16.msra.mxu0 %v3311
    %3355 = vmatprep.subr.bf16.mxu0 %v3310
    %3356 = vmatpush1.bf16.msra.mxu0 %v3309
    %3357 = vmatprep.subr.bf16.mxu0 0
    %3358 = vmatpush2.bf16.msra.mxu0 0
    %3359 = vmatprep.subr.bf16.mxu0 0
    %3360 = vmatpush2.bf16.msra.mxu0 0
    %3361 = vmatprep.subr.bf16.mxu0 0
    %3362 = vmatpush2.bf16.msra.mxu0 0
    %3363 = vmatprep.subr.bf16.mxu0 0
    %3364 = vmatpush2.bf16.msra.mxu0 0
    %3365 = vmatprep.subr.bf16.mxu0 0
    %3366 = vmatpush2.bf16.msra.mxu0 0
    %3367 = vmatprep.subr.bf16.mxu0 0
    %3368 = vmatpush2.bf16.msra.mxu0 0
    %3369 = vmatprep.subr.bf16.mxu0 0
    %3370 = vmatpush2.bf16.msra.mxu0 0
    %3371 = vmatprep.subr.bf16.mxu0 0
    %3372 = vmatpush2.bf16.msra.mxu0 0
    %3373 = vmatprep.mubr.bf16.mxu0 0
    %3374 = vmatmul.mubr.bf16.gmra.mxu0 %v593
    %v3375 = vpop.f32.mrf.mxu0
    %v3376 = vadd.f32 0.0, %v3375
    %v3377 = vpop.f32.mrf.mxu0
    %v3378 = vadd.f32 0.0, %v3377
    %v3379 = vpop.f32.mrf.mxu0
    %v3380 = vpop.f32.mrf.mxu0
    %3381 = vdwg.mxu0
    %v3382 = vadd.f32 %v3239, %v3376
    %v3383 = vadd.f32 %v3241, %v3378
    %v3384 = vld [vmem:[%s4 + $0x680] sm:$0xff]
    %v3385 = vld [vmem:[%s4 + $0x688] sm:$0xff]
    %v3386 = vld [vmem:[%s4 + $0x690] sm:$0xff]
    %v3387 = vld [vmem:[%s4 + $0x698] sm:$0xff]
    %v3388 = vld [vmem:[%s4 + $0x6a0] sm:$0xff]
    %v3389 = vld [vmem:[%s4 + $0x6a8] sm:$0xff]
    %v3390 = vld [vmem:[%s4 + $0x6b0] sm:$0xff]
    %v3391 = vld [vmem:[%s4 + $0x6b8] sm:$0xff]
    %v3392 = vld [vmem:[%s4 + $0x6c0] sm:$0xff]
    %v3393 = vld [vmem:[%s4 + $0x6c8] sm:$0xff]
    %v3394 = vld [vmem:[%s4 + $0x6d0] sm:$0xff]
    %v3395 = vld [vmem:[%s4 + $0x6d8] sm:$0xff]
    %v3396 = vld [vmem:[%s4 + $0x6e0] sm:$0xff]
    %v3397 = vld [vmem:[%s4 + $0x6e8] sm:$0xff]
    %v3398 = vld [vmem:[%s4 + $0x6f0] sm:$0xff]
    %v3399 = vld [vmem:[%s4 + $0x6f8] sm:$0xff]
    %v3401 = vrot.slane %v593, 1
    %v3419 = vunpack.c.l.b16 %v3384
    %v3420 = vunpack.c.h.b16 %v3384
    %v3421 = vunpack.c.l.b16 %v3385
    %v3422 = vunpack.c.h.b16 %v3385
    %v3423 = vunpack.c.l.b16 %v3386
    %v3424 = vunpack.c.h.b16 %v3386
    %v3425 = vunpack.c.l.b16 %v3387
    %v3426 = vunpack.c.h.b16 %v3387
    %v3427 = vunpack.c.l.b16 %v3388
    %v3428 = vunpack.c.h.b16 %v3388
    %v3429 = vunpack.c.l.b16 %v3389
    %v3430 = vunpack.c.h.b16 %v3389
    %v3431 = vunpack.c.l.b16 %v3390
    %v3432 = vunpack.c.h.b16 %v3390
    %v3433 = vunpack.c.l.b16 %v3391
    %v3434 = vunpack.c.h.b16 %v3391
    %v3435 = vunpack.c.l.b16 %v3392
    %v3436 = vunpack.c.h.b16 %v3392
    %v3437 = vunpack.c.l.b16 %v3393
    %v3438 = vunpack.c.h.b16 %v3393
    %v3439 = vunpack.c.l.b16 %v3394
    %v3440 = vunpack.c.h.b16 %v3394
    %v3441 = vunpack.c.l.b16 %v3395
    %v3442 = vunpack.c.h.b16 %v3395
    %v3443 = vunpack.c.l.b16 %v3396
    %v3444 = vunpack.c.h.b16 %v3396
    %v3445 = vunpack.c.l.b16 %v3397
    %v3446 = vunpack.c.h.b16 %v3397
    %v3447 = vunpack.c.l.b16 %v3398
    %v3448 = vunpack.c.h.b16 %v3398
    %v3449 = vunpack.c.l.b16 %v3399
    %v3450 = vunpack.c.h.b16 %v3399
    %v3451 = vpack.c.b16 %v3421, %v3419
    %v3452 = vpack.c.b16 %v3422, %v3420
    %v3453 = vpack.c.b16 %v3425, %v3423
    %v3454 = vpack.c.b16 %v3426, %v3424
    %v3455 = vpack.c.b16 %v3429, %v3427
    %v3456 = vpack.c.b16 %v3430, %v3428
    %v3457 = vpack.c.b16 %v3433, %v3431
    %v3458 = vpack.c.b16 %v3434, %v3432
    %v3459 = vpack.c.b16 %v3437, %v3435
    %v3460 = vpack.c.b16 %v3438, %v3436
    %v3461 = vpack.c.b16 %v3441, %v3439
    %v3462 = vpack.c.b16 %v3442, %v3440
    %v3463 = vpack.c.b16 %v3445, %v3443
    %v3464 = vpack.c.b16 %v3446, %v3444
    %v3465 = vpack.c.b16 %v3449, %v3447
    %v3466 = vpack.c.b16 %v3450, %v3448
    %3483 = vmatprep.subr.bf16.mxu0 %v3466
    %3484 = vmatpush1.bf16.msra.mxu0 %v3465
    %3485 = vmatprep.subr.bf16.mxu0 %v3464
    %3486 = vmatpush1.bf16.msra.mxu0 %v3463
    %3487 = vmatprep.subr.bf16.mxu0 %v3462
    %3488 = vmatpush1.bf16.msra.mxu0 %v3461
    %3489 = vmatprep.subr.bf16.mxu0 %v3460
    %3490 = vmatpush1.bf16.msra.mxu0 %v3459
    %3491 = vmatprep.subr.bf16.mxu0 %v3458
    %3492 = vmatpush1.bf16.msra.mxu0 %v3457
    %3493 = vmatprep.subr.bf16.mxu0 %v3456
    %3494 = vmatpush1.bf16.msra.mxu0 %v3455
    %3495 = vmatprep.subr.bf16.mxu0 %v3454
    %3496 = vmatpush1.bf16.msra.mxu0 %v3453
    %3497 = vmatprep.subr.bf16.mxu0 %v3452
    %3498 = vmatpush1.bf16.msra.mxu0 %v3451
    %3499 = vmatprep.subr.bf16.mxu0 0
    %3500 = vmatpush2.bf16.msra.mxu0 0
    %3501 = vmatprep.subr.bf16.mxu0 0
    %3502 = vmatpush2.bf16.msra.mxu0 0
    %3503 = vmatprep.subr.bf16.mxu0 0
    %3504 = vmatpush2.bf16.msra.mxu0 0
    %3505 = vmatprep.subr.bf16.mxu0 0
    %3506 = vmatpush2.bf16.msra.mxu0 0
    %3507 = vmatprep.subr.bf16.mxu0 0
    %3508 = vmatpush2.bf16.msra.mxu0 0
    %3509 = vmatprep.subr.bf16.mxu0 0
    %3510 = vmatpush2.bf16.msra.mxu0 0
    %3511 = vmatprep.subr.bf16.mxu0 0
    %3512 = vmatpush2.bf16.msra.mxu0 0
    %3513 = vmatprep.subr.bf16.mxu0 0
    %3514 = vmatpush2.bf16.msra.mxu0 0
    %3515 = vmatprep.mubr.bf16.mxu0 0
    %3516 = vmatmul.mubr.bf16.gmra.mxu0 %v3401
    %v3517 = vpop.f32.mrf.mxu0
    %v3518 = vadd.f32 0.0, %v3517
    %v3519 = vpop.f32.mrf.mxu0
    %v3520 = vadd.f32 0.0, %v3519
    %v3521 = vpop.f32.mrf.mxu0
    %v3522 = vpop.f32.mrf.mxu0
    %3523 = vdwg.mxu0
    %v3524 = vadd.f32 %v3382, %v3518
    %v3525 = vadd.f32 %v3383, %v3520
    %v3526 = vld [vmem:[%s4 + $0x700] sm:$0xff]
    %v3527 = vld [vmem:[%s4 + $0x708] sm:$0xff]
    %v3528 = vld [vmem:[%s4 + $0x710] sm:$0xff]
    %v3529 = vld [vmem:[%s4 + $0x718] sm:$0xff]
    %v3530 = vld [vmem:[%s4 + $0x720] sm:$0xff]
    %v3531 = vld [vmem:[%s4 + $0x728] sm:$0xff]
    %v3532 = vld [vmem:[%s4 + $0x730] sm:$0xff]
    %v3533 = vld [vmem:[%s4 + $0x738] sm:$0xff]
    %v3534 = vld [vmem:[%s4 + $0x740] sm:$0xff]
    %v3535 = vld [vmem:[%s4 + $0x748] sm:$0xff]
    %v3536 = vld [vmem:[%s4 + $0x750] sm:$0xff]
    %v3537 = vld [vmem:[%s4 + $0x758] sm:$0xff]
    %v3538 = vld [vmem:[%s4 + $0x760] sm:$0xff]
    %v3539 = vld [vmem:[%s4 + $0x768] sm:$0xff]
    %v3540 = vld [vmem:[%s4 + $0x770] sm:$0xff]
    %v3541 = vld [vmem:[%s4 + $0x778] sm:$0xff]
    %v3542 = vrot.slane %v593, 4
    %v3560 = vunpack.c.l.b16 %v3526
    %v3561 = vunpack.c.h.b16 %v3526
    %v3562 = vunpack.c.l.b16 %v3527
    %v3563 = vunpack.c.h.b16 %v3527
    %v3564 = vunpack.c.l.b16 %v3528
    %v3565 = vunpack.c.h.b16 %v3528
    %v3566 = vunpack.c.l.b16 %v3529
    %v3567 = vunpack.c.h.b16 %v3529
    %v3568 = vunpack.c.l.b16 %v3530
    %v3569 = vunpack.c.h.b16 %v3530
    %v3570 = vunpack.c.l.b16 %v3531
    %v3571 = vunpack.c.h.b16 %v3531
    %v3572 = vunpack.c.l.b16 %v3532
    %v3573 = vunpack.c.h.b16 %v3532
    %v3574 = vunpack.c.l.b16 %v3533
    %v3575 = vunpack.c.h.b16 %v3533
    %v3576 = vunpack.c.l.b16 %v3534
    %v3577 = vunpack.c.h.b16 %v3534
    %v3578 = vunpack.c.l.b16 %v3535
    %v3579 = vunpack.c.h.b16 %v3535
    %v3580 = vunpack.c.l.b16 %v3536
    %v3581 = vunpack.c.h.b16 %v3536
    %v3582 = vunpack.c.l.b16 %v3537
    %v3583 = vunpack.c.h.b16 %v3537
    %v3584 = vunpack.c.l.b16 %v3538
    %v3585 = vunpack.c.h.b16 %v3538
    %v3586 = vunpack.c.l.b16 %v3539
    %v3587 = vunpack.c.h.b16 %v3539
    %v3588 = vunpack.c.l.b16 %v3540
    %v3589 = vunpack.c.h.b16 %v3540
    %v3590 = vunpack.c.l.b16 %v3541
    %v3591 = vunpack.c.h.b16 %v3541
    %v3592 = vpack.c.b16 %v3562, %v3560
    %v3593 = vpack.c.b16 %v3563, %v3561
    %v3594 = vpack.c.b16 %v3566, %v3564
    %v3595 = vpack.c.b16 %v3567, %v3565
    %v3596 = vpack.c.b16 %v3570, %v3568
    %v3597 = vpack.c.b16 %v3571, %v3569
    %v3598 = vpack.c.b16 %v3574, %v3572
    %v3599 = vpack.c.b16 %v3575, %v3573
    %v3600 = vpack.c.b16 %v3578, %v3576
    %v3601 = vpack.c.b16 %v3579, %v3577
    %v3602 = vpack.c.b16 %v3582, %v3580
    %v3603 = vpack.c.b16 %v3583, %v3581
    %v3604 = vpack.c.b16 %v3586, %v3584
    %v3605 = vpack.c.b16 %v3587, %v3585
    %v3606 = vpack.c.b16 %v3590, %v3588
    %v3607 = vpack.c.b16 %v3591, %v3589
    %3624 = vmatprep.subr.bf16.mxu0 %v3607
    %3625 = vmatpush1.bf16.msra.mxu0 %v3606
    %3626 = vmatprep.subr.bf16.mxu0 %v3605
    %3627 = vmatpush1.bf16.msra.mxu0 %v3604
    %3628 = vmatprep.subr.bf16.mxu0 %v3603
    %3629 = vmatpush1.bf16.msra.mxu0 %v3602
    %3630 = vmatprep.subr.bf16.mxu0 %v3601
    %3631 = vmatpush1.bf16.msra.mxu0 %v3600
    %3632 = vmatprep.subr.bf16.mxu0 %v3599
    %3633 = vmatpush1.bf16.msra.mxu0 %v3598
    %3634 = vmatprep.subr.bf16.mxu0 %v3597
    %3635 = vmatpush1.bf16.msra.mxu0 %v3596
    %3636 = vmatprep.subr.bf16.mxu0 %v3595
    %3637 = vmatpush1.bf16.msra.mxu0 %v3594
    %3638 = vmatprep.subr.bf16.mxu0 %v3593
    %3639 = vmatpush1.bf16.msra.mxu0 %v3592
    %3640 = vmatprep.subr.bf16.mxu0 0
    %3641 = vmatpush2.bf16.msra.mxu0 0
    %3642 = vmatprep.subr.bf16.mxu0 0
    %3643 = vmatpush2.bf16.msra.mxu0 0
    %3644 = vmatprep.subr.bf16.mxu0 0
    %3645 = vmatpush2.bf16.msra.mxu0 0
    %3646 = vmatprep.subr.bf16.mxu0 0
    %3647 = vmatpush2.bf16.msra.mxu0 0
    %3648 = vmatprep.subr.bf16.mxu0 0
    %3649 = vmatpush2.bf16.msra.mxu0 0
    %3650 = vmatprep.subr.bf16.mxu0 0
    %3651 = vmatpush2.bf16.msra.mxu0 0
    %3652 = vmatprep.subr.bf16.mxu0 0
    %3653 = vmatpush2.bf16.msra.mxu0 0
    %3654 = vmatprep.subr.bf16.mxu0 0
    %3655 = vmatpush2.bf16.msra.mxu0 0
    %3656 = vmatprep.mubr.bf16.mxu0 0
    %3657 = vmatmul.mubr.bf16.gmra.mxu0 %v3542
    %v3658 = vpop.f32.mrf.mxu0
    %v3659 = vadd.f32 0.0, %v3658
    %v3660 = vpop.f32.mrf.mxu0
    %v3661 = vadd.f32 0.0, %v3660
    %v3662 = vpop.f32.mrf.mxu0
    %v3663 = vpop.f32.mrf.mxu0
    %3664 = vdwg.mxu0
    %v3665 = vadd.f32 %v3524, %v3659
    %v3666 = vadd.f32 %v3525, %v3661
    %v3667 = vld [vmem:[%s4 + $0x780] sm:$0xff]
    %v3668 = vld [vmem:[%s4 + $0x788] sm:$0xff]
    %v3669 = vld [vmem:[%s4 + $0x790] sm:$0xff]
    %v3670 = vld [vmem:[%s4 + $0x798] sm:$0xff]
    %v3671 = vld [vmem:[%s4 + $0x7a0] sm:$0xff]
    %v3672 = vld [vmem:[%s4 + $0x7a8] sm:$0xff]
    %v3673 = vld [vmem:[%s4 + $0x7b0] sm:$0xff]
    %v3674 = vld [vmem:[%s4 + $0x7b8] sm:$0xff]
    %v3675 = vld [vmem:[%s4 + $0x7c0] sm:$0xff]
    %v3676 = vld [vmem:[%s4 + $0x7c8] sm:$0xff]
    %v3677 = vld [vmem:[%s4 + $0x7d0] sm:$0xff]
    %v3678 = vld [vmem:[%s4 + $0x7d8] sm:$0xff]
    %v3679 = vld [vmem:[%s4 + $0x7e0] sm:$0xff]
    %v3680 = vld [vmem:[%s4 + $0x7e8] sm:$0xff]
    %v3681 = vld [vmem:[%s4 + $0x7f0] sm:$0xff]
    %v3682 = vld [vmem:[%s4 + $0x7f8] sm:$0xff]
    %v3683 = vrot.slane %v593, 5
    %v3701 = vunpack.c.l.b16 %v3667
    %v3702 = vunpack.c.h.b16 %v3667
    %v3703 = vunpack.c.l.b16 %v3668
    %v3704 = vunpack.c.h.b16 %v3668
    %v3705 = vunpack.c.l.b16 %v3669
    %v3706 = vunpack.c.h.b16 %v3669
    %v3707 = vunpack.c.l.b16 %v3670
    %v3708 = vunpack.c.h.b16 %v3670
    %v3709 = vunpack.c.l.b16 %v3671
    %v3710 = vunpack.c.h.b16 %v3671
    %v3711 = vunpack.c.l.b16 %v3672
    %v3712 = vunpack.c.h.b16 %v3672
    %v3713 = vunpack.c.l.b16 %v3673
    %v3714 = vunpack.c.h.b16 %v3673
    %v3715 = vunpack.c.l.b16 %v3674
    %v3716 = vunpack.c.h.b16 %v3674
    %v3717 = vunpack.c.l.b16 %v3675
    %v3718 = vunpack.c.h.b16 %v3675
    %v3719 = vunpack.c.l.b16 %v3676
    %v3720 = vunpack.c.h.b16 %v3676
    %v3721 = vunpack.c.l.b16 %v3677
    %v3722 = vunpack.c.h.b16 %v3677
    %v3723 = vunpack.c.l.b16 %v3678
    %v3724 = vunpack.c.h.b16 %v3678
    %v3725 = vunpack.c.l.b16 %v3679
    %v3726 = vunpack.c.h.b16 %v3679
    %v3727 = vunpack.c.l.b16 %v3680
    %v3728 = vunpack.c.h.b16 %v3680
    %v3729 = vunpack.c.l.b16 %v3681
    %v3730 = vunpack.c.h.b16 %v3681
    %v3731 = vunpack.c.l.b16 %v3682
    %v3732 = vunpack.c.h.b16 %v3682
    %v3733 = vpack.c.b16 %v3703, %v3701
    %v3734 = vpack.c.b16 %v3704, %v3702
    %v3735 = vpack.c.b16 %v3707, %v3705
    %v3736 = vpack.c.b16 %v3708, %v3706
    %v3737 = vpack.c.b16 %v3711, %v3709
    %v3738 = vpack.c.b16 %v3712, %v3710
    %v3739 = vpack.c.b16 %v3715, %v3713
    %v3740 = vpack.c.b16 %v3716, %v3714
    %v3741 = vpack.c.b16 %v3719, %v3717
    %v3742 = vpack.c.b16 %v3720, %v3718
    %v3743 = vpack.c.b16 %v3723, %v3721
    %v3744 = vpack.c.b16 %v3724, %v3722
    %v3745 = vpack.c.b16 %v3727, %v3725
    %v3746 = vpack.c.b16 %v3728, %v3726
    %v3747 = vpack.c.b16 %v3731, %v3729
    %v3748 = vpack.c.b16 %v3732, %v3730
    %3765 = vmatprep.subr.bf16.mxu0 %v3748
    %3766 = vmatpush1.bf16.msra.mxu0 %v3747
    %3767 = vmatprep.subr.bf16.mxu0 %v3746
    %3768 = vmatpush1.bf16.msra.mxu0 %v3745
    %3769 = vmatprep.subr.bf16.mxu0 %v3744
    %3770 = vmatpush1.bf16.msra.mxu0 %v3743
    %3771 = vmatprep.subr.bf16.mxu0 %v3742
    %3772 = vmatpush1.bf16.msra.mxu0 %v3741
    %3773 = vmatprep.subr.bf16.mxu0 %v3740
    %3774 = vmatpush1.bf16.msra.mxu0 %v3739
    %3775 = vmatprep.subr.bf16.mxu0 %v3738
    %3776 = vmatpush1.bf16.msra.mxu0 %v3737
    %3777 = vmatprep.subr.bf16.mxu0 %v3736
    %3778 = vmatpush1.bf16.msra.mxu0 %v3735
    %3779 = vmatprep.subr.bf16.mxu0 %v3734
    %3780 = vmatpush1.bf16.msra.mxu0 %v3733
    %3781 = vmatprep.subr.bf16.mxu0 0
    %3782 = vmatpush2.bf16.msra.mxu0 0
    %3783 = vmatprep.subr.bf16.mxu0 0
    %3784 = vmatpush2.bf16.msra.mxu0 0
    %3785 = vmatprep.subr.bf16.mxu0 0
    %3786 = vmatpush2.bf16.msra.mxu0 0
    %3787 = vmatprep.subr.bf16.mxu0 0
    %3788 = vmatpush2.bf16.msra.mxu0 0
    %3789 = vmatprep.subr.bf16.mxu0 0
    %3790 = vmatpush2.bf16.msra.mxu0 0
    %3791 = vmatprep.subr.bf16.mxu0 0
    %3792 = vmatpush2.bf16.msra.mxu0 0
    %3793 = vmatprep.subr.bf16.mxu0 0
    %3794 = vmatpush2.bf16.msra.mxu0 0
    %3795 = vmatprep.subr.bf16.mxu0 0
    %3796 = vmatpush2.bf16.msra.mxu0 0
    %3797 = vmatprep.mubr.bf16.mxu0 0
    %3798 = vmatmul.mubr.bf16.gmra.mxu0 %v3683
    %v3799 = vpop.f32.mrf.mxu0
    %v3800 = vadd.f32 0.0, %v3799
    %v3801 = vpop.f32.mrf.mxu0
    %v3802 = vadd.f32 0.0, %v3801
    %v3803 = vpop.f32.mrf.mxu0
    %v3804 = vpop.f32.mrf.mxu0
    %3805 = vdwg.mxu0
    %v3806 = vadd.f32 %v3665, %v3800
    %v3807 = vadd.f32 %v3666, %v3802
    %v3808 = vadd.f32 %v3806, %v1158
    %v3809 = vadd.f32 %v3807, %v1162
    %vm3810 = vcmp.gt.f32.partialorder %v3808, 0.0
    %vm3811 = vcmp.gt.f32.partialorder %v3809, 0.0
    %v3812 = vmul.f32 %v3808, 0.2
    %v3813 = vmul.f32 %v3809, 0.2
    %v3814 = vsel %vm3810, %v3808, %v3812
    %v3815 = vsel %vm3811, %v3809, %v3813
    %v3816 = vadd.f32 %v3814, %v1178
    %v3817 = vadd.f32 %v3815, %v1182
    %v3818 = vpack.c.bf16 %v3816, %v3816
    %v3819 = vpack.c.bf16 %v3817, %v3817
    %v3820 = vld [vmem:[#allocation3 + $0x400] sm:$0xff]
    %v3821 = vld [vmem:[#allocation3 + $0x408] sm:$0xff]
    %v3822 = vld [vmem:[#allocation3 + $0x410] sm:$0xff]
    %v3823 = vld [vmem:[#allocation3 + $0x418] sm:$0xff]
    %v3824 = vld [vmem:[#allocation3 + $0x420] sm:$0xff]
    %v3825 = vld [vmem:[#allocation3 + $0x428] sm:$0xff]
    %v3826 = vld [vmem:[#allocation3 + $0x430] sm:$0xff]
    %v3827 = vld [vmem:[#allocation3 + $0x438] sm:$0xff]
    %v3828 = vld [vmem:[#allocation3 + $0x440] sm:$0xff]
    %v3829 = vld [vmem:[#allocation3 + $0x448] sm:$0xff]
    %v3830 = vld [vmem:[#allocation3 + $0x450] sm:$0xff]
    %v3831 = vld [vmem:[#allocation3 + $0x458] sm:$0xff]
    %v3832 = vld [vmem:[#allocation3 + $0x460] sm:$0xff]
    %v3833 = vld [vmem:[#allocation3 + $0x468] sm:$0xff]
    %v3834 = vld [vmem:[#allocation3 + $0x470] sm:$0xff]
    %v3835 = vld [vmem:[#allocation3 + $0x478] sm:$0xff]
    %v3836 = vld [vmem:[#allocation3 + $0x480] sm:$0xff]
    %v3837 = vld [vmem:[#allocation3 + $0x488] sm:$0xff]
    %v3838 = vld [vmem:[#allocation3 + $0x490] sm:$0xff]
    %v3839 = vld [vmem:[#allocation3 + $0x498] sm:$0xff]
    %v3840 = vld [vmem:[#allocation3 + $0x4a0] sm:$0xff]
    %v3841 = vld [vmem:[#allocation3 + $0x4a8] sm:$0xff]
    %v3842 = vld [vmem:[#allocation3 + $0x4b0] sm:$0xff]
    %v3843 = vld [vmem:[#allocation3 + $0x4b8] sm:$0xff]
    %v3844 = vld [vmem:[#allocation3 + $0x4c0] sm:$0xff]
    %v3845 = vld [vmem:[#allocation3 + $0x4c8] sm:$0xff]
    %v3846 = vld [vmem:[#allocation3 + $0x4d0] sm:$0xff]
    %v3847 = vld [vmem:[#allocation3 + $0x4d8] sm:$0xff]
    %v3848 = vld [vmem:[#allocation3 + $0x4e0] sm:$0xff]
    %v3849 = vld [vmem:[#allocation3 + $0x4e8] sm:$0xff]
    %v3850 = vld [vmem:[#allocation3 + $0x4f0] sm:$0xff]
    %v3851 = vld [vmem:[#allocation3 + $0x4f8] sm:$0xff]
    %v3852 = vld [vmem:[#allocation3 + $0x500] sm:$0xff]
    %v3853 = vld [vmem:[#allocation3 + $0x508] sm:$0xff]
    %v3854 = vld [vmem:[#allocation3 + $0x510] sm:$0xff]
    %v3855 = vld [vmem:[#allocation3 + $0x518] sm:$0xff]
    %v3856 = vld [vmem:[#allocation3 + $0x520] sm:$0xff]
    %v3857 = vld [vmem:[#allocation3 + $0x528] sm:$0xff]
    %v3858 = vld [vmem:[#allocation3 + $0x530] sm:$0xff]
    %v3859 = vld [vmem:[#allocation3 + $0x538] sm:$0xff]
    %v3860 = vld [vmem:[#allocation3 + $0x540] sm:$0xff]
    %v3861 = vld [vmem:[#allocation3 + $0x548] sm:$0xff]
    %v3862 = vld [vmem:[#allocation3 + $0x550] sm:$0xff]
    %v3863 = vld [vmem:[#allocation3 + $0x558] sm:$0xff]
    %v3864 = vld [vmem:[#allocation3 + $0x560] sm:$0xff]
    %v3865 = vld [vmem:[#allocation3 + $0x568] sm:$0xff]
    %v3866 = vld [vmem:[#allocation3 + $0x570] sm:$0xff]
    %v3867 = vld [vmem:[#allocation3 + $0x578] sm:$0xff]
    %v3868 = vld [vmem:[#allocation3 + $0x580] sm:$0xff]
    %v3869 = vld [vmem:[#allocation3 + $0x588] sm:$0xff]
    %v3870 = vld [vmem:[#allocation3 + $0x590] sm:$0xff]
    %v3871 = vld [vmem:[#allocation3 + $0x598] sm:$0xff]
    %v3872 = vld [vmem:[#allocation3 + $0x5a0] sm:$0xff]
    %v3873 = vld [vmem:[#allocation3 + $0x5a8] sm:$0xff]
    %v3874 = vld [vmem:[#allocation3 + $0x5b0] sm:$0xff]
    %v3875 = vld [vmem:[#allocation3 + $0x5b8] sm:$0xff]
    %v3876 = vld [vmem:[#allocation3 + $0x5c0] sm:$0xff]
    %v3877 = vld [vmem:[#allocation3 + $0x5c8] sm:$0xff]
    %v3878 = vld [vmem:[#allocation3 + $0x5d0] sm:$0xff]
    %v3879 = vld [vmem:[#allocation3 + $0x5d8] sm:$0xff]
    %v3880 = vld [vmem:[#allocation3 + $0x5e0] sm:$0xff]
    %v3881 = vld [vmem:[#allocation3 + $0x5e8] sm:$0xff]
    %v3882 = vld [vmem:[#allocation3 + $0x5f0] sm:$0xff]
    %v3883 = vld [vmem:[#allocation3 + $0x5f8] sm:$0xff]
    %v3948 = vunpack.c.l.b16 %v3820
    %v3949 = vunpack.c.h.b16 %v3820
    %v3950 = vunpack.c.l.b16 %v3821
    %v3951 = vunpack.c.h.b16 %v3821
    %v3952 = vunpack.c.l.b16 %v3822
    %v3953 = vunpack.c.h.b16 %v3822
    %v3954 = vunpack.c.l.b16 %v3823
    %v3955 = vunpack.c.h.b16 %v3823
    %v3956 = vunpack.c.l.b16 %v3824
    %v3957 = vunpack.c.h.b16 %v3824
    %v3958 = vunpack.c.l.b16 %v3825
    %v3959 = vunpack.c.h.b16 %v3825
    %v3960 = vunpack.c.l.b16 %v3826
    %v3961 = vunpack.c.h.b16 %v3826
    %v3962 = vunpack.c.l.b16 %v3827
    %v3963 = vunpack.c.h.b16 %v3827
    %v3964 = vunpack.c.l.b16 %v3828
    %v3965 = vunpack.c.h.b16 %v3828
    %v3966 = vunpack.c.l.b16 %v3829
    %v3967 = vunpack.c.h.b16 %v3829
    %v3968 = vunpack.c.l.b16 %v3830
    %v3969 = vunpack.c.h.b16 %v3830
    %v3970 = vunpack.c.l.b16 %v3831
    %v3971 = vunpack.c.h.b16 %v3831
    %v3972 = vunpack.c.l.b16 %v3832
    %v3973 = vunpack.c.h.b16 %v3832
    %v3974 = vunpack.c.l.b16 %v3833
    %v3975 = vunpack.c.h.b16 %v3833
    %v3976 = vunpack.c.l.b16 %v3834
    %v3977 = vunpack.c.h.b16 %v3834
    %v3978 = vunpack.c.l.b16 %v3835
    %v3979 = vunpack.c.h.b16 %v3835
    %v3980 = vunpack.c.l.b16 %v3836
    %v3981 = vunpack.c.h.b16 %v3836
    %v3982 = vunpack.c.l.b16 %v3837
    %v3983 = vunpack.c.h.b16 %v3837
    %v3984 = vunpack.c.l.b16 %v3838
    %v3985 = vunpack.c.h.b16 %v3838
    %v3986 = vunpack.c.l.b16 %v3839
    %v3987 = vunpack.c.h.b16 %v3839
    %v3988 = vunpack.c.l.b16 %v3840
    %v3989 = vunpack.c.h.b16 %v3840
    %v3990 = vunpack.c.l.b16 %v3841
    %v3991 = vunpack.c.h.b16 %v3841
    %v3992 = vunpack.c.l.b16 %v3842
    %v3993 = vunpack.c.h.b16 %v3842
    %v3994 = vunpack.c.l.b16 %v3843
    %v3995 = vunpack.c.h.b16 %v3843
    %v3996 = vunpack.c.l.b16 %v3844
    %v3997 = vunpack.c.h.b16 %v3844
    %v3998 = vunpack.c.l.b16 %v3845
    %v3999 = vunpack.c.h.b16 %v3845
    %v4000 = vunpack.c.l.b16 %v3846
    %v4001 = vunpack.c.h.b16 %v3846
    %v4002 = vunpack.c.l.b16 %v3847
    %v4003 = vunpack.c.h.b16 %v3847
    %v4004 = vunpack.c.l.b16 %v3848
    %v4005 = vunpack.c.h.b16 %v3848
    %v4006 = vunpack.c.l.b16 %v3849
    %v4007 = vunpack.c.h.b16 %v3849
    %v4008 = vunpack.c.l.b16 %v3850
    %v4009 = vunpack.c.h.b16 %v3850
    %v4010 = vunpack.c.l.b16 %v3851
    %v4011 = vunpack.c.h.b16 %v3851
    %v4012 = vunpack.c.l.b16 %v3852
    %v4013 = vunpack.c.h.b16 %v3852
    %v4014 = vunpack.c.l.b16 %v3853
    %v4015 = vunpack.c.h.b16 %v3853
    %v4016 = vunpack.c.l.b16 %v3854
    %v4017 = vunpack.c.h.b16 %v3854
    %v4018 = vunpack.c.l.b16 %v3855
    %v4019 = vunpack.c.h.b16 %v3855
    %v4020 = vunpack.c.l.b16 %v3856
    %v4021 = vunpack.c.h.b16 %v3856
    %v4022 = vunpack.c.l.b16 %v3857
    %v4023 = vunpack.c.h.b16 %v3857
    %v4024 = vunpack.c.l.b16 %v3858
    %v4025 = vunpack.c.h.b16 %v3858
    %v4026 = vunpack.c.l.b16 %v3859
    %v4027 = vunpack.c.h.b16 %v3859
    %v4028 = vunpack.c.l.b16 %v3860
    %v4029 = vunpack.c.h.b16 %v3860
    %v4030 = vunpack.c.l.b16 %v3861
    %v4031 = vunpack.c.h.b16 %v3861
    %v4032 = vunpack.c.l.b16 %v3862
    %v4033 = vunpack.c.h.b16 %v3862
    %v4034 = vunpack.c.l.b16 %v3863
    %v4035 = vunpack.c.h.b16 %v3863
    %v4036 = vunpack.c.l.b16 %v3864
    %v4037 = vunpack.c.h.b16 %v3864
    %v4038 = vunpack.c.l.b16 %v3865
    %v4039 = vunpack.c.h.b16 %v3865
    %v4040 = vunpack.c.l.b16 %v3866
    %v4041 = vunpack.c.h.b16 %v3866
    %v4042 = vunpack.c.l.b16 %v3867
    %v4043 = vunpack.c.h.b16 %v3867
    %v4044 = vunpack.c.l.b16 %v3868
    %v4045 = vunpack.c.h.b16 %v3868
    %v4046 = vunpack.c.l.b16 %v3869
    %v4047 = vunpack.c.h.b16 %v3869
    %v4048 = vunpack.c.l.b16 %v3870
    %v4049 = vunpack.c.h.b16 %v3870
    %v4050 = vunpack.c.l.b16 %v3871
    %v4051 = vunpack.c.h.b16 %v3871
    %v4052 = vunpack.c.l.b16 %v3872
    %v4053 = vunpack.c.h.b16 %v3872
    %v4054 = vunpack.c.l.b16 %v3873
    %v4055 = vunpack.c.h.b16 %v3873
    %v4056 = vunpack.c.l.b16 %v3874
    %v4057 = vunpack.c.h.b16 %v3874
    %v4058 = vunpack.c.l.b16 %v3875
    %v4059 = vunpack.c.h.b16 %v3875
    %v4060 = vunpack.c.l.b16 %v3876
    %v4061 = vunpack.c.h.b16 %v3876
    %v4062 = vunpack.c.l.b16 %v3877
    %v4063 = vunpack.c.h.b16 %v3877
    %v4064 = vunpack.c.l.b16 %v3878
    %v4065 = vunpack.c.h.b16 %v3878
    %v4066 = vunpack.c.l.b16 %v3879
    %v4067 = vunpack.c.h.b16 %v3879
    %v4068 = vunpack.c.l.b16 %v3880
    %v4069 = vunpack.c.h.b16 %v3880
    %v4070 = vunpack.c.l.b16 %v3881
    %v4071 = vunpack.c.h.b16 %v3881
    %v4072 = vunpack.c.l.b16 %v3882
    %v4073 = vunpack.c.h.b16 %v3882
    %v4074 = vunpack.c.l.b16 %v3883
    %v4075 = vunpack.c.h.b16 %v3883
    %v4076 = vpack.c.b16 %v3952, %v3948
    %v4077 = vpack.c.b16 %v3953, %v3949
    %v4078 = vpack.c.b16 %v3954, %v3950
    %v4079 = vpack.c.b16 %v3955, %v3951
    %v4080 = vpack.c.b16 %v3960, %v3956
    %v4081 = vpack.c.b16 %v3961, %v3957
    %v4082 = vpack.c.b16 %v3962, %v3958
    %v4083 = vpack.c.b16 %v3963, %v3959
    %v4084 = vpack.c.b16 %v3968, %v3964
    %v4085 = vpack.c.b16 %v3969, %v3965
    %v4086 = vpack.c.b16 %v3970, %v3966
    %v4087 = vpack.c.b16 %v3971, %v3967
    %v4088 = vpack.c.b16 %v3976, %v3972
    %v4089 = vpack.c.b16 %v3977, %v3973
    %v4090 = vpack.c.b16 %v3978, %v3974
    %v4091 = vpack.c.b16 %v3979, %v3975
    %v4092 = vpack.c.b16 %v3984, %v3980
    %v4093 = vpack.c.b16 %v3985, %v3981
    %v4094 = vpack.c.b16 %v3986, %v3982
    %v4095 = vpack.c.b16 %v3987, %v3983
    %v4096 = vpack.c.b16 %v3992, %v3988
    %v4097 = vpack.c.b16 %v3993, %v3989
    %v4098 = vpack.c.b16 %v3994, %v3990
    %v4099 = vpack.c.b16 %v3995, %v3991
    %v4100 = vpack.c.b16 %v4000, %v3996
    %v4101 = vpack.c.b16 %v4001, %v3997
    %v4102 = vpack.c.b16 %v4002, %v3998
    %v4103 = vpack.c.b16 %v4003, %v3999
    %v4104 = vpack.c.b16 %v4008, %v4004
    %v4105 = vpack.c.b16 %v4009, %v4005
    %v4106 = vpack.c.b16 %v4010, %v4006
    %v4107 = vpack.c.b16 %v4011, %v4007
    %v4108 = vpack.c.b16 %v4016, %v4012
    %v4109 = vpack.c.b16 %v4017, %v4013
    %v4110 = vpack.c.b16 %v4018, %v4014
    %v4111 = vpack.c.b16 %v4019, %v4015
    %v4112 = vpack.c.b16 %v4024, %v4020
    %v4113 = vpack.c.b16 %v4025, %v4021
    %v4114 = vpack.c.b16 %v4026, %v4022
    %v4115 = vpack.c.b16 %v4027, %v4023
    %v4116 = vpack.c.b16 %v4032, %v4028
    %v4117 = vpack.c.b16 %v4033, %v4029
    %v4118 = vpack.c.b16 %v4034, %v4030
    %v4119 = vpack.c.b16 %v4035, %v4031
    %v4120 = vpack.c.b16 %v4040, %v4036
    %v4121 = vpack.c.b16 %v4041, %v4037
    %v4122 = vpack.c.b16 %v4042, %v4038
    %v4123 = vpack.c.b16 %v4043, %v4039
    %v4124 = vpack.c.b16 %v4048, %v4044
    %v4125 = vpack.c.b16 %v4049, %v4045
    %v4126 = vpack.c.b16 %v4050, %v4046
    %v4127 = vpack.c.b16 %v4051, %v4047
    %v4128 = vpack.c.b16 %v4056, %v4052
    %v4129 = vpack.c.b16 %v4057, %v4053
    %v4130 = vpack.c.b16 %v4058, %v4054
    %v4131 = vpack.c.b16 %v4059, %v4055
    %v4132 = vpack.c.b16 %v4064, %v4060
    %v4133 = vpack.c.b16 %v4065, %v4061
    %v4134 = vpack.c.b16 %v4066, %v4062
    %v4135 = vpack.c.b16 %v4067, %v4063
    %v4136 = vpack.c.b16 %v4072, %v4068
    %v4137 = vpack.c.b16 %v4073, %v4069
    %v4138 = vpack.c.b16 %v4074, %v4070
    %v4139 = vpack.c.b16 %v4075, %v4071
    %4204 = vmatprep.subr.bf16.mxu0 %v4105
    %4205 = vmatpush1.bf16.msra.mxu0 %v4104
    %4206 = vmatprep.subr.bf16.mxu0 %v4101
    %4207 = vmatpush1.bf16.msra.mxu0 %v4100
    %4208 = vmatprep.subr.bf16.mxu0 %v4097
    %4209 = vmatpush1.bf16.msra.mxu0 %v4096
    %4210 = vmatprep.subr.bf16.mxu0 %v4093
    %4211 = vmatpush1.bf16.msra.mxu0 %v4092
    %4212 = vmatprep.subr.bf16.mxu0 %v4089
    %4213 = vmatpush1.bf16.msra.mxu0 %v4088
    %4214 = vmatprep.subr.bf16.mxu0 %v4085
    %4215 = vmatpush1.bf16.msra.mxu0 %v4084
    %4216 = vmatprep.subr.bf16.mxu0 %v4081
    %4217 = vmatpush1.bf16.msra.mxu0 %v4080
    %4218 = vmatprep.subr.bf16.mxu0 %v4077
    %4219 = vmatpush1.bf16.msra.mxu0 %v4076
    %4220 = vmatprep.subr.bf16.mxu0 %v4137
    %4221 = vmatpush2.bf16.msra.mxu0 %v4136
    %4222 = vmatprep.subr.bf16.mxu0 %v4133
    %4223 = vmatpush2.bf16.msra.mxu0 %v4132
    %4224 = vmatprep.subr.bf16.mxu0 %v4129
    %4225 = vmatpush2.bf16.msra.mxu0 %v4128
    %4226 = vmatprep.subr.bf16.mxu0 %v4125
    %4227 = vmatpush2.bf16.msra.mxu0 %v4124
    %4228 = vmatprep.subr.bf16.mxu0 %v4121
    %4229 = vmatpush2.bf16.msra.mxu0 %v4120
    %4230 = vmatprep.subr.bf16.mxu0 %v4117
    %4231 = vmatpush2.bf16.msra.mxu0 %v4116
    %4232 = vmatprep.subr.bf16.mxu0 %v4113
    %4233 = vmatpush2.bf16.msra.mxu0 %v4112
    %4234 = vmatprep.subr.bf16.mxu0 %v4109
    %4235 = vmatpush2.bf16.msra.mxu0 %v4108
    %4236 = vmatprep.mubr.bf16.mxu0 %v3819
    %4237 = vmatmul.mubr.bf16.gmra.mxu0 %v3818
    %v4238 = vpop.f32.mrf.mxu0
    %v4239 = vadd.f32 0.0, %v4238
    %v4240 = vpop.f32.mrf.mxu0
    %v4241 = vadd.f32 0.0, %v4240
    %v4242 = vpop.f32.mrf.mxu0
    %v4243 = vpop.f32.mrf.mxu0
    %4244 = vdwg.mxu0
    %4245 = vmatprep.subr.bf16.mxu0 %v4107
    %4246 = vmatpush1.bf16.msra.mxu0 %v4106
    %4247 = vmatprep.subr.bf16.mxu0 %v4103
    %4248 = vmatpush1.bf16.msra.mxu0 %v4102
    %4249 = vmatprep.subr.bf16.mxu0 %v4099
    %4250 = vmatpush1.bf16.msra.mxu0 %v4098
    %4251 = vmatprep.subr.bf16.mxu0 %v4095
    %4252 = vmatpush1.bf16.msra.mxu0 %v4094
    %4253 = vmatprep.subr.bf16.mxu0 %v4091
    %4254 = vmatpush1.bf16.msra.mxu0 %v4090
    %4255 = vmatprep.subr.bf16.mxu0 %v4087
    %4256 = vmatpush1.bf16.msra.mxu0 %v4086
    %4257 = vmatprep.subr.bf16.mxu0 %v4083
    %4258 = vmatpush1.bf16.msra.mxu0 %v4082
    %4259 = vmatprep.subr.bf16.mxu0 %v4079
    %4260 = vmatpush1.bf16.msra.mxu0 %v4078
    %4261 = vmatprep.subr.bf16.mxu0 %v4139
    %4262 = vmatpush2.bf16.msra.mxu0 %v4138
    %4263 = vmatprep.subr.bf16.mxu0 %v4135
    %4264 = vmatpush2.bf16.msra.mxu0 %v4134
    %4265 = vmatprep.subr.bf16.mxu0 %v4131
    %4266 = vmatpush2.bf16.msra.mxu0 %v4130
    %4267 = vmatprep.subr.bf16.mxu0 %v4127
    %4268 = vmatpush2.bf16.msra.mxu0 %v4126
    %4269 = vmatprep.subr.bf16.mxu0 %v4123
    %4270 = vmatpush2.bf16.msra.mxu0 %v4122
    %4271 = vmatprep.subr.bf16.mxu0 %v4119
    %4272 = vmatpush2.bf16.msra.mxu0 %v4118
    %4273 = vmatprep.subr.bf16.mxu0 %v4115
    %4274 = vmatpush2.bf16.msra.mxu0 %v4114
    %4275 = vmatprep.subr.bf16.mxu0 %v4111
    %4276 = vmatpush2.bf16.msra.mxu0 %v4110
    %4277 = vmatprep.mubr.bf16.mxu0 %v3819
    %4278 = vmatmul.mubr.bf16.gmra.mxu0 %v3818
    %v4279 = vpop.f32.mrf.mxu0
    %v4280 = vadd.f32 0.0, %v4279
    %v4281 = vpop.f32.mrf.mxu0
    %v4282 = vadd.f32 0.0, %v4281
    %v4283 = vpop.f32.mrf.mxu0
    %v4284 = vpop.f32.mrf.mxu0
    %4285 = vdwg.mxu0
    %v4286 = vadd.f32 %v2924, %v4239
    %v4287 = vadd.f32 %v2926, %v4241
    %v4288 = vadd.f32 %v2965, %v4280
    %v4289 = vadd.f32 %v2967, %v4282
    %v4290 = vld [vmem:[%s4 + $0x800] sm:$0xff]
    %v4291 = vld [vmem:[%s4 + $0x808] sm:$0xff]
    %v4292 = vld [vmem:[%s4 + $0x810] sm:$0xff]
    %v4293 = vld [vmem:[%s4 + $0x818] sm:$0xff]
    %v4294 = vld [vmem:[%s4 + $0x820] sm:$0xff]
    %v4295 = vld [vmem:[%s4 + $0x828] sm:$0xff]
    %v4296 = vld [vmem:[%s4 + $0x830] sm:$0xff]
    %v4297 = vld [vmem:[%s4 + $0x838] sm:$0xff]
    %v4298 = vld [vmem:[%s4 + $0x840] sm:$0xff]
    %v4299 = vld [vmem:[%s4 + $0x848] sm:$0xff]
    %v4300 = vld [vmem:[%s4 + $0x850] sm:$0xff]
    %v4301 = vld [vmem:[%s4 + $0x858] sm:$0xff]
    %v4302 = vld [vmem:[%s4 + $0x860] sm:$0xff]
    %v4303 = vld [vmem:[%s4 + $0x868] sm:$0xff]
    %v4304 = vld [vmem:[%s4 + $0x870] sm:$0xff]
    %v4305 = vld [vmem:[%s4 + $0x878] sm:$0xff]
    %v4306 = vld [vmem:[%s4 + $0x880] sm:$0xff]
    %v4307 = vld [vmem:[%s4 + $0x888] sm:$0xff]
    %v4308 = vld [vmem:[%s4 + $0x890] sm:$0xff]
    %v4309 = vld [vmem:[%s4 + $0x898] sm:$0xff]
    %v4310 = vld [vmem:[%s4 + $0x8a0] sm:$0xff]
    %v4311 = vld [vmem:[%s4 + $0x8a8] sm:$0xff]
    %v4312 = vld [vmem:[%s4 + $0x8b0] sm:$0xff]
    %v4313 = vld [vmem:[%s4 + $0x8b8] sm:$0xff]
    %v4314 = vld [vmem:[%s4 + $0x8c0] sm:$0xff]
    %v4315 = vld [vmem:[%s4 + $0x8c8] sm:$0xff]
    %v4316 = vld [vmem:[%s4 + $0x8d0] sm:$0xff]
    %v4317 = vld [vmem:[%s4 + $0x8d8] sm:$0xff]
    %v4318 = vld [vmem:[%s4 + $0x8e0] sm:$0xff]
    %v4319 = vld [vmem:[%s4 + $0x8e8] sm:$0xff]
    %v4320 = vld [vmem:[%s4 + $0x8f0] sm:$0xff]
    %v4321 = vld [vmem:[%s4 + $0x8f8] sm:$0xff]
    %v4338 = vunpack.c.l.b16 %v4306
    %v4339 = vunpack.c.h.b16 %v4306
    %v4340 = vunpack.c.l.b16 %v4307
    %v4341 = vunpack.c.h.b16 %v4307
    %v4342 = vunpack.c.l.b16 %v4308
    %v4343 = vunpack.c.h.b16 %v4308
    %v4344 = vunpack.c.l.b16 %v4309
    %v4345 = vunpack.c.h.b16 %v4309
    %v4346 = vunpack.c.l.b16 %v4310
    %v4347 = vunpack.c.h.b16 %v4310
    %v4348 = vunpack.c.l.b16 %v4311
    %v4349 = vunpack.c.h.b16 %v4311
    %v4350 = vunpack.c.l.b16 %v4312
    %v4351 = vunpack.c.h.b16 %v4312
    %v4352 = vunpack.c.l.b16 %v4313
    %v4353 = vunpack.c.h.b16 %v4313
    %v4354 = vunpack.c.l.b16 %v4314
    %v4355 = vunpack.c.h.b16 %v4314
    %v4356 = vunpack.c.l.b16 %v4315
    %v4357 = vunpack.c.h.b16 %v4315
    %v4358 = vunpack.c.l.b16 %v4316
    %v4359 = vunpack.c.h.b16 %v4316
    %v4360 = vunpack.c.l.b16 %v4317
    %v4361 = vunpack.c.h.b16 %v4317
    %v4362 = vunpack.c.l.b16 %v4318
    %v4363 = vunpack.c.h.b16 %v4318
    %v4364 = vunpack.c.l.b16 %v4319
    %v4365 = vunpack.c.h.b16 %v4319
    %v4366 = vunpack.c.l.b16 %v4320
    %v4367 = vunpack.c.h.b16 %v4320
    %v4368 = vunpack.c.l.b16 %v4321
    %v4369 = vunpack.c.h.b16 %v4321
    %v4370 = vpack.c.b16 %v4340, %v4338
    %v4371 = vpack.c.b16 %v4341, %v4339
    %v4372 = vpack.c.b16 %v4344, %v4342
    %v4373 = vpack.c.b16 %v4345, %v4343
    %v4374 = vpack.c.b16 %v4348, %v4346
    %v4375 = vpack.c.b16 %v4349, %v4347
    %v4376 = vpack.c.b16 %v4352, %v4350
    %v4377 = vpack.c.b16 %v4353, %v4351
    %v4378 = vpack.c.b16 %v4356, %v4354
    %v4379 = vpack.c.b16 %v4357, %v4355
    %v4380 = vpack.c.b16 %v4360, %v4358
    %v4381 = vpack.c.b16 %v4361, %v4359
    %v4382 = vpack.c.b16 %v4364, %v4362
    %v4383 = vpack.c.b16 %v4365, %v4363
    %v4384 = vpack.c.b16 %v4368, %v4366
    %v4385 = vpack.c.b16 %v4369, %v4367
    %4402 = vmatprep.subr.bf16.mxu0 %v4385
    %4403 = vmatpush1.bf16.msra.mxu0 %v4384
    %4404 = vmatprep.subr.bf16.mxu0 %v4383
    %4405 = vmatpush1.bf16.msra.mxu0 %v4382
    %4406 = vmatprep.subr.bf16.mxu0 %v4381
    %4407 = vmatpush1.bf16.msra.mxu0 %v4380
    %4408 = vmatprep.subr.bf16.mxu0 %v4379
    %4409 = vmatpush1.bf16.msra.mxu0 %v4378
    %4410 = vmatprep.subr.bf16.mxu0 %v4377
    %4411 = vmatpush1.bf16.msra.mxu0 %v4376
    %4412 = vmatprep.subr.bf16.mxu0 %v4375
    %4413 = vmatpush1.bf16.msra.mxu0 %v4374
    %4414 = vmatprep.subr.bf16.mxu0 %v4373
    %4415 = vmatpush1.bf16.msra.mxu0 %v4372
    %4416 = vmatprep.subr.bf16.mxu0 %v4371
    %4417 = vmatpush1.bf16.msra.mxu0 %v4370
    %4418 = vmatprep.subr.bf16.mxu0 0
    %4419 = vmatpush2.bf16.msra.mxu0 0
    %4420 = vmatprep.subr.bf16.mxu0 0
    %4421 = vmatpush2.bf16.msra.mxu0 0
    %4422 = vmatprep.subr.bf16.mxu0 0
    %4423 = vmatpush2.bf16.msra.mxu0 0
    %4424 = vmatprep.subr.bf16.mxu0 0
    %4425 = vmatpush2.bf16.msra.mxu0 0
    %4426 = vmatprep.subr.bf16.mxu0 0
    %4427 = vmatpush2.bf16.msra.mxu0 0
    %4428 = vmatprep.subr.bf16.mxu0 0
    %4429 = vmatpush2.bf16.msra.mxu0 0
    %4430 = vmatprep.subr.bf16.mxu0 0
    %4431 = vmatpush2.bf16.msra.mxu0 0
    %4432 = vmatprep.subr.bf16.mxu0 0
    %4433 = vmatpush2.bf16.msra.mxu0 0
    %4434 = vmatprep.mubr.bf16.mxu0 0
    %4435 = vmatmul.mubr.bf16.gmra.mxu0 %v1825
    %v4436 = vpop.f32.mrf.mxu0
    %v4437 = vadd.f32 0.0, %v4436
    %v4438 = vpop.f32.mrf.mxu0
    %v4439 = vadd.f32 0.0, %v4438
    %v4440 = vpop.f32.mrf.mxu0
    %v4441 = vpop.f32.mrf.mxu0
    %4442 = vdwg.mxu0
    %v4459 = vunpack.c.l.b16 %v4290
    %v4460 = vunpack.c.h.b16 %v4290
    %v4461 = vunpack.c.l.b16 %v4291
    %v4462 = vunpack.c.h.b16 %v4291
    %v4463 = vunpack.c.l.b16 %v4292
    %v4464 = vunpack.c.h.b16 %v4292
    %v4465 = vunpack.c.l.b16 %v4293
    %v4466 = vunpack.c.h.b16 %v4293
    %v4467 = vunpack.c.l.b16 %v4294
    %v4468 = vunpack.c.h.b16 %v4294
    %v4469 = vunpack.c.l.b16 %v4295
    %v4470 = vunpack.c.h.b16 %v4295
    %v4471 = vunpack.c.l.b16 %v4296
    %v4472 = vunpack.c.h.b16 %v4296
    %v4473 = vunpack.c.l.b16 %v4297
    %v4474 = vunpack.c.h.b16 %v4297
    %v4475 = vunpack.c.l.b16 %v4298
    %v4476 = vunpack.c.h.b16 %v4298
    %v4477 = vunpack.c.l.b16 %v4299
    %v4478 = vunpack.c.h.b16 %v4299
    %v4479 = vunpack.c.l.b16 %v4300
    %v4480 = vunpack.c.h.b16 %v4300
    %v4481 = vunpack.c.l.b16 %v4301
    %v4482 = vunpack.c.h.b16 %v4301
    %v4483 = vunpack.c.l.b16 %v4302
    %v4484 = vunpack.c.h.b16 %v4302
    %v4485 = vunpack.c.l.b16 %v4303
    %v4486 = vunpack.c.h.b16 %v4303
    %v4487 = vunpack.c.l.b16 %v4304
    %v4488 = vunpack.c.h.b16 %v4304
    %v4489 = vunpack.c.l.b16 %v4305
    %v4490 = vunpack.c.h.b16 %v4305
    %v4491 = vpack.c.b16 %v4461, %v4459
    %v4492 = vpack.c.b16 %v4462, %v4460
    %v4493 = vpack.c.b16 %v4465, %v4463
    %v4494 = vpack.c.b16 %v4466, %v4464
    %v4495 = vpack.c.b16 %v4469, %v4467
    %v4496 = vpack.c.b16 %v4470, %v4468
    %v4497 = vpack.c.b16 %v4473, %v4471
    %v4498 = vpack.c.b16 %v4474, %v4472
    %v4499 = vpack.c.b16 %v4477, %v4475
    %v4500 = vpack.c.b16 %v4478, %v4476
    %v4501 = vpack.c.b16 %v4481, %v4479
    %v4502 = vpack.c.b16 %v4482, %v4480
    %v4503 = vpack.c.b16 %v4485, %v4483
    %v4504 = vpack.c.b16 %v4486, %v4484
    %v4505 = vpack.c.b16 %v4489, %v4487
    %v4506 = vpack.c.b16 %v4490, %v4488
    %4523 = vmatprep.subr.bf16.mxu0 %v4506
    %4524 = vmatpush1.bf16.msra.mxu0 %v4505
    %4525 = vmatprep.subr.bf16.mxu0 %v4504
    %4526 = vmatpush1.bf16.msra.mxu0 %v4503
    %4527 = vmatprep.subr.bf16.mxu0 %v4502
    %4528 = vmatpush1.bf16.msra.mxu0 %v4501
    %4529 = vmatprep.subr.bf16.mxu0 %v4500
    %4530 = vmatpush1.bf16.msra.mxu0 %v4499
    %4531 = vmatprep.subr.bf16.mxu0 %v4498
    %4532 = vmatpush1.bf16.msra.mxu0 %v4497
    %4533 = vmatprep.subr.bf16.mxu0 %v4496
    %4534 = vmatpush1.bf16.msra.mxu0 %v4495
    %4535 = vmatprep.subr.bf16.mxu0 %v4494
    %4536 = vmatpush1.bf16.msra.mxu0 %v4493
    %4537 = vmatprep.subr.bf16.mxu0 %v4492
    %4538 = vmatpush1.bf16.msra.mxu0 %v4491
    %4539 = vmatprep.subr.bf16.mxu0 0
    %4540 = vmatpush2.bf16.msra.mxu0 0
    %4541 = vmatprep.subr.bf16.mxu0 0
    %4542 = vmatpush2.bf16.msra.mxu0 0
    %4543 = vmatprep.subr.bf16.mxu0 0
    %4544 = vmatpush2.bf16.msra.mxu0 0
    %4545 = vmatprep.subr.bf16.mxu0 0
    %4546 = vmatpush2.bf16.msra.mxu0 0
    %4547 = vmatprep.subr.bf16.mxu0 0
    %4548 = vmatpush2.bf16.msra.mxu0 0
    %4549 = vmatprep.subr.bf16.mxu0 0
    %4550 = vmatpush2.bf16.msra.mxu0 0
    %4551 = vmatprep.subr.bf16.mxu0 0
    %4552 = vmatpush2.bf16.msra.mxu0 0
    %4553 = vmatprep.subr.bf16.mxu0 0
    %4554 = vmatpush2.bf16.msra.mxu0 0
    %4555 = vmatprep.mubr.bf16.mxu0 0
    %4556 = vmatmul.mubr.bf16.gmra.mxu0 %v1028
    %v4557 = vpop.f32.mrf.mxu0
    %v4558 = vadd.f32 %v4437, %v4557
    %v4559 = vpop.f32.mrf.mxu0
    %v4560 = vadd.f32 %v4439, %v4559
    %v4561 = vpop.f32.mrf.mxu0
    %v4562 = vpop.f32.mrf.mxu0
    %4563 = vdwg.mxu0
    %v4564 = vld [vmem:[%s4 + $0x900] sm:$0xff]
    %v4565 = vld [vmem:[%s4 + $0x908] sm:$0xff]
    %v4566 = vld [vmem:[%s4 + $0x910] sm:$0xff]
    %v4567 = vld [vmem:[%s4 + $0x918] sm:$0xff]
    %v4568 = vld [vmem:[%s4 + $0x920] sm:$0xff]
    %v4569 = vld [vmem:[%s4 + $0x928] sm:$0xff]
    %v4570 = vld [vmem:[%s4 + $0x930] sm:$0xff]
    %v4571 = vld [vmem:[%s4 + $0x938] sm:$0xff]
    %v4572 = vld [vmem:[%s4 + $0x940] sm:$0xff]
    %v4573 = vld [vmem:[%s4 + $0x948] sm:$0xff]
    %v4574 = vld [vmem:[%s4 + $0x950] sm:$0xff]
    %v4575 = vld [vmem:[%s4 + $0x958] sm:$0xff]
    %v4576 = vld [vmem:[%s4 + $0x960] sm:$0xff]
    %v4577 = vld [vmem:[%s4 + $0x968] sm:$0xff]
    %v4578 = vld [vmem:[%s4 + $0x970] sm:$0xff]
    %v4579 = vld [vmem:[%s4 + $0x978] sm:$0xff]
    %v4596 = vunpack.c.l.b16 %v4564
    %v4597 = vunpack.c.h.b16 %v4564
    %v4598 = vunpack.c.l.b16 %v4565
    %v4599 = vunpack.c.h.b16 %v4565
    %v4600 = vunpack.c.l.b16 %v4566
    %v4601 = vunpack.c.h.b16 %v4566
    %v4602 = vunpack.c.l.b16 %v4567
    %v4603 = vunpack.c.h.b16 %v4567
    %v4604 = vunpack.c.l.b16 %v4568
    %v4605 = vunpack.c.h.b16 %v4568
    %v4606 = vunpack.c.l.b16 %v4569
    %v4607 = vunpack.c.h.b16 %v4569
    %v4608 = vunpack.c.l.b16 %v4570
    %v4609 = vunpack.c.h.b16 %v4570
    %v4610 = vunpack.c.l.b16 %v4571
    %v4611 = vunpack.c.h.b16 %v4571
    %v4612 = vunpack.c.l.b16 %v4572
    %v4613 = vunpack.c.h.b16 %v4572
    %v4614 = vunpack.c.l.b16 %v4573
    %v4615 = vunpack.c.h.b16 %v4573
    %v4616 = vunpack.c.l.b16 %v4574
    %v4617 = vunpack.c.h.b16 %v4574
    %v4618 = vunpack.c.l.b16 %v4575
    %v4619 = vunpack.c.h.b16 %v4575
    %v4620 = vunpack.c.l.b16 %v4576
    %v4621 = vunpack.c.h.b16 %v4576
    %v4622 = vunpack.c.l.b16 %v4577
    %v4623 = vunpack.c.h.b16 %v4577
    %v4624 = vunpack.c.l.b16 %v4578
    %v4625 = vunpack.c.h.b16 %v4578
    %v4626 = vunpack.c.l.b16 %v4579
    %v4627 = vunpack.c.h.b16 %v4579
    %v4628 = vpack.c.b16 %v4598, %v4596
    %v4629 = vpack.c.b16 %v4599, %v4597
    %v4630 = vpack.c.b16 %v4602, %v4600
    %v4631 = vpack.c.b16 %v4603, %v4601
    %v4632 = vpack.c.b16 %v4606, %v4604
    %v4633 = vpack.c.b16 %v4607, %v4605
    %v4634 = vpack.c.b16 %v4610, %v4608
    %v4635 = vpack.c.b16 %v4611, %v4609
    %v4636 = vpack.c.b16 %v4614, %v4612
    %v4637 = vpack.c.b16 %v4615, %v4613
    %v4638 = vpack.c.b16 %v4618, %v4616
    %v4639 = vpack.c.b16 %v4619, %v4617
    %v4640 = vpack.c.b16 %v4622, %v4620
    %v4641 = vpack.c.b16 %v4623, %v4621
    %v4642 = vpack.c.b16 %v4626, %v4624
    %v4643 = vpack.c.b16 %v4627, %v4625
    %4660 = vmatprep.subr.bf16.mxu0 %v4643
    %4661 = vmatpush1.bf16.msra.mxu0 %v4642
    %4662 = vmatprep.subr.bf16.mxu0 %v4641
    %4663 = vmatpush1.bf16.msra.mxu0 %v4640
    %4664 = vmatprep.subr.bf16.mxu0 %v4639
    %4665 = vmatpush1.bf16.msra.mxu0 %v4638
    %4666 = vmatprep.subr.bf16.mxu0 %v4637
    %4667 = vmatpush1.bf16.msra.mxu0 %v4636
    %4668 = vmatprep.subr.bf16.mxu0 %v4635
    %4669 = vmatpush1.bf16.msra.mxu0 %v4634
    %4670 = vmatprep.subr.bf16.mxu0 %v4633
    %4671 = vmatpush1.bf16.msra.mxu0 %v4632
    %4672 = vmatprep.subr.bf16.mxu0 %v4631
    %4673 = vmatpush1.bf16.msra.mxu0 %v4630
    %4674 = vmatprep.subr.bf16.mxu0 %v4629
    %4675 = vmatpush1.bf16.msra.mxu0 %v4628
    %4676 = vmatprep.subr.bf16.mxu0 0
    %4677 = vmatpush2.bf16.msra.mxu0 0
    %4678 = vmatprep.subr.bf16.mxu0 0
    %4679 = vmatpush2.bf16.msra.mxu0 0
    %4680 = vmatprep.subr.bf16.mxu0 0
    %4681 = vmatpush2.bf16.msra.mxu0 0
    %4682 = vmatprep.subr.bf16.mxu0 0
    %4683 = vmatpush2.bf16.msra.mxu0 0
    %4684 = vmatprep.subr.bf16.mxu0 0
    %4685 = vmatpush2.bf16.msra.mxu0 0
    %4686 = vmatprep.subr.bf16.mxu0 0
    %4687 = vmatpush2.bf16.msra.mxu0 0
    %4688 = vmatprep.subr.bf16.mxu0 0
    %4689 = vmatpush2.bf16.msra.mxu0 0
    %4690 = vmatprep.subr.bf16.mxu0 0
    %4691 = vmatpush2.bf16.msra.mxu0 0
    %4692 = vmatprep.mubr.bf16.mxu0 0
    %4693 = vmatmul.mubr.bf16.gmra.mxu0 %v1966
    %v4694 = vpop.f32.mrf.mxu0
    %v4695 = vadd.f32 0.0, %v4694
    %v4696 = vpop.f32.mrf.mxu0
    %v4697 = vadd.f32 0.0, %v4696
    %v4698 = vpop.f32.mrf.mxu0
    %v4699 = vpop.f32.mrf.mxu0
    %4700 = vdwg.mxu0
    %v4701 = vadd.f32 %v4558, %v4695
    %v4702 = vadd.f32 %v4560, %v4697
    %v4703 = vld [vmem:[%s4 + $0x980] sm:$0xff]
    %v4704 = vld [vmem:[%s4 + $0x988] sm:$0xff]
    %v4705 = vld [vmem:[%s4 + $0x990] sm:$0xff]
    %v4706 = vld [vmem:[%s4 + $0x998] sm:$0xff]
    %v4707 = vld [vmem:[%s4 + $0x9a0] sm:$0xff]
    %v4708 = vld [vmem:[%s4 + $0x9a8] sm:$0xff]
    %v4709 = vld [vmem:[%s4 + $0x9b0] sm:$0xff]
    %v4710 = vld [vmem:[%s4 + $0x9b8] sm:$0xff]
    %v4711 = vld [vmem:[%s4 + $0x9c0] sm:$0xff]
    %v4712 = vld [vmem:[%s4 + $0x9c8] sm:$0xff]
    %v4713 = vld [vmem:[%s4 + $0x9d0] sm:$0xff]
    %v4714 = vld [vmem:[%s4 + $0x9d8] sm:$0xff]
    %v4715 = vld [vmem:[%s4 + $0x9e0] sm:$0xff]
    %v4716 = vld [vmem:[%s4 + $0x9e8] sm:$0xff]
    %v4717 = vld [vmem:[%s4 + $0x9f0] sm:$0xff]
    %v4718 = vld [vmem:[%s4 + $0x9f8] sm:$0xff]
    %v4735 = vunpack.c.l.b16 %v4703
    %v4736 = vunpack.c.h.b16 %v4703
    %v4737 = vunpack.c.l.b16 %v4704
    %v4738 = vunpack.c.h.b16 %v4704
    %v4739 = vunpack.c.l.b16 %v4705
    %v4740 = vunpack.c.h.b16 %v4705
    %v4741 = vunpack.c.l.b16 %v4706
    %v4742 = vunpack.c.h.b16 %v4706
    %v4743 = vunpack.c.l.b16 %v4707
    %v4744 = vunpack.c.h.b16 %v4707
    %v4745 = vunpack.c.l.b16 %v4708
    %v4746 = vunpack.c.h.b16 %v4708
    %v4747 = vunpack.c.l.b16 %v4709
    %v4748 = vunpack.c.h.b16 %v4709
    %v4749 = vunpack.c.l.b16 %v4710
    %v4750 = vunpack.c.h.b16 %v4710
    %v4751 = vunpack.c.l.b16 %v4711
    %v4752 = vunpack.c.h.b16 %v4711
    %v4753 = vunpack.c.l.b16 %v4712
    %v4754 = vunpack.c.h.b16 %v4712
    %v4755 = vunpack.c.l.b16 %v4713
    %v4756 = vunpack.c.h.b16 %v4713
    %v4757 = vunpack.c.l.b16 %v4714
    %v4758 = vunpack.c.h.b16 %v4714
    %v4759 = vunpack.c.l.b16 %v4715
    %v4760 = vunpack.c.h.b16 %v4715
    %v4761 = vunpack.c.l.b16 %v4716
    %v4762 = vunpack.c.h.b16 %v4716
    %v4763 = vunpack.c.l.b16 %v4717
    %v4764 = vunpack.c.h.b16 %v4717
    %v4765 = vunpack.c.l.b16 %v4718
    %v4766 = vunpack.c.h.b16 %v4718
    %v4767 = vpack.c.b16 %v4737, %v4735
    %v4768 = vpack.c.b16 %v4738, %v4736
    %v4769 = vpack.c.b16 %v4741, %v4739
    %v4770 = vpack.c.b16 %v4742, %v4740
    %v4771 = vpack.c.b16 %v4745, %v4743
    %v4772 = vpack.c.b16 %v4746, %v4744
    %v4773 = vpack.c.b16 %v4749, %v4747
    %v4774 = vpack.c.b16 %v4750, %v4748
    %v4775 = vpack.c.b16 %v4753, %v4751
    %v4776 = vpack.c.b16 %v4754, %v4752
    %v4777 = vpack.c.b16 %v4757, %v4755
    %v4778 = vpack.c.b16 %v4758, %v4756
    %v4779 = vpack.c.b16 %v4761, %v4759
    %v4780 = vpack.c.b16 %v4762, %v4760
    %v4781 = vpack.c.b16 %v4765, %v4763
    %v4782 = vpack.c.b16 %v4766, %v4764
    %4799 = vmatprep.subr.bf16.mxu0 %v4782
    %4800 = vmatpush1.bf16.msra.mxu0 %v4781
    %4801 = vmatprep.subr.bf16.mxu0 %v4780
    %4802 = vmatpush1.bf16.msra.mxu0 %v4779
    %4803 = vmatprep.subr.bf16.mxu0 %v4778
    %4804 = vmatpush1.bf16.msra.mxu0 %v4777
    %4805 = vmatprep.subr.bf16.mxu0 %v4776
    %4806 = vmatpush1.bf16.msra.mxu0 %v4775
    %4807 = vmatprep.subr.bf16.mxu0 %v4774
    %4808 = vmatpush1.bf16.msra.mxu0 %v4773
    %4809 = vmatprep.subr.bf16.mxu0 %v4772
    %4810 = vmatpush1.bf16.msra.mxu0 %v4771
    %4811 = vmatprep.subr.bf16.mxu0 %v4770
    %4812 = vmatpush1.bf16.msra.mxu0 %v4769
    %4813 = vmatprep.subr.bf16.mxu0 %v4768
    %4814 = vmatpush1.bf16.msra.mxu0 %v4767
    %4815 = vmatprep.subr.bf16.mxu0 0
    %4816 = vmatpush2.bf16.msra.mxu0 0
    %4817 = vmatprep.subr.bf16.mxu0 0
    %4818 = vmatpush2.bf16.msra.mxu0 0
    %4819 = vmatprep.subr.bf16.mxu0 0
    %4820 = vmatpush2.bf16.msra.mxu0 0
    %4821 = vmatprep.subr.bf16.mxu0 0
    %4822 = vmatpush2.bf16.msra.mxu0 0
    %4823 = vmatprep.subr.bf16.mxu0 0
    %4824 = vmatpush2.bf16.msra.mxu0 0
    %4825 = vmatprep.subr.bf16.mxu0 0
    %4826 = vmatpush2.bf16.msra.mxu0 0
    %4827 = vmatprep.subr.bf16.mxu0 0
    %4828 = vmatpush2.bf16.msra.mxu0 0
    %4829 = vmatprep.subr.bf16.mxu0 0
    %4830 = vmatpush2.bf16.msra.mxu0 0
    %4831 = vmatprep.mubr.bf16.mxu0 0
    %4832 = vmatmul.mubr.bf16.gmra.mxu0 %v3401
    %v4833 = vpop.f32.mrf.mxu0
    %v4834 = vadd.f32 0.0, %v4833
    %v4835 = vpop.f32.mrf.mxu0
    %v4836 = vadd.f32 0.0, %v4835
    %v4837 = vpop.f32.mrf.mxu0
    %v4838 = vpop.f32.mrf.mxu0
    %4839 = vdwg.mxu0
    %v4840 = vadd.f32 %v4701, %v4834
    %v4841 = vadd.f32 %v4702, %v4836
    %v4842 = vld [vmem:[%s4 + $0xa00] sm:$0xff]
    %v4843 = vld [vmem:[%s4 + $0xa08] sm:$0xff]
    %v4844 = vld [vmem:[%s4 + $0xa10] sm:$0xff]
    %v4845 = vld [vmem:[%s4 + $0xa18] sm:$0xff]
    %v4846 = vld [vmem:[%s4 + $0xa20] sm:$0xff]
    %v4847 = vld [vmem:[%s4 + $0xa28] sm:$0xff]
    %v4848 = vld [vmem:[%s4 + $0xa30] sm:$0xff]
    %v4849 = vld [vmem:[%s4 + $0xa38] sm:$0xff]
    %v4850 = vld [vmem:[%s4 + $0xa40] sm:$0xff]
    %v4851 = vld [vmem:[%s4 + $0xa48] sm:$0xff]
    %v4852 = vld [vmem:[%s4 + $0xa50] sm:$0xff]
    %v4853 = vld [vmem:[%s4 + $0xa58] sm:$0xff]
    %v4854 = vld [vmem:[%s4 + $0xa60] sm:$0xff]
    %v4855 = vld [vmem:[%s4 + $0xa68] sm:$0xff]
    %v4856 = vld [vmem:[%s4 + $0xa70] sm:$0xff]
    %v4857 = vld [vmem:[%s4 + $0xa78] sm:$0xff]
    %v4858 = vrot.slane %v593, 2
    %v4876 = vunpack.c.l.b16 %v4842
    %v4877 = vunpack.c.h.b16 %v4842
    %v4878 = vunpack.c.l.b16 %v4843
    %v4879 = vunpack.c.h.b16 %v4843
    %v4880 = vunpack.c.l.b16 %v4844
    %v4881 = vunpack.c.h.b16 %v4844
    %v4882 = vunpack.c.l.b16 %v4845
    %v4883 = vunpack.c.h.b16 %v4845
    %v4884 = vunpack.c.l.b16 %v4846
    %v4885 = vunpack.c.h.b16 %v4846
    %v4886 = vunpack.c.l.b16 %v4847
    %v4887 = vunpack.c.h.b16 %v4847
    %v4888 = vunpack.c.l.b16 %v4848
    %v4889 = vunpack.c.h.b16 %v4848
    %v4890 = vunpack.c.l.b16 %v4849
    %v4891 = vunpack.c.h.b16 %v4849
    %v4892 = vunpack.c.l.b16 %v4850
    %v4893 = vunpack.c.h.b16 %v4850
    %v4894 = vunpack.c.l.b16 %v4851
    %v4895 = vunpack.c.h.b16 %v4851
    %v4896 = vunpack.c.l.b16 %v4852
    %v4897 = vunpack.c.h.b16 %v4852
    %v4898 = vunpack.c.l.b16 %v4853
    %v4899 = vunpack.c.h.b16 %v4853
    %v4900 = vunpack.c.l.b16 %v4854
    %v4901 = vunpack.c.h.b16 %v4854
    %v4902 = vunpack.c.l.b16 %v4855
    %v4903 = vunpack.c.h.b16 %v4855
    %v4904 = vunpack.c.l.b16 %v4856
    %v4905 = vunpack.c.h.b16 %v4856
    %v4906 = vunpack.c.l.b16 %v4857
    %v4907 = vunpack.c.h.b16 %v4857
    %v4908 = vpack.c.b16 %v4878, %v4876
    %v4909 = vpack.c.b16 %v4879, %v4877
    %v4910 = vpack.c.b16 %v4882, %v4880
    %v4911 = vpack.c.b16 %v4883, %v4881
    %v4912 = vpack.c.b16 %v4886, %v4884
    %v4913 = vpack.c.b16 %v4887, %v4885
    %v4914 = vpack.c.b16 %v4890, %v4888
    %v4915 = vpack.c.b16 %v4891, %v4889
    %v4916 = vpack.c.b16 %v4894, %v4892
    %v4917 = vpack.c.b16 %v4895, %v4893
    %v4918 = vpack.c.b16 %v4898, %v4896
    %v4919 = vpack.c.b16 %v4899, %v4897
    %v4920 = vpack.c.b16 %v4902, %v4900
    %v4921 = vpack.c.b16 %v4903, %v4901
    %v4922 = vpack.c.b16 %v4906, %v4904
    %v4923 = vpack.c.b16 %v4907, %v4905
    %4940 = vmatprep.subr.bf16.mxu0 %v4923
    %4941 = vmatpush1.bf16.msra.mxu0 %v4922
    %4942 = vmatprep.subr.bf16.mxu0 %v4921
    %4943 = vmatpush1.bf16.msra.mxu0 %v4920
    %4944 = vmatprep.subr.bf16.mxu0 %v4919
    %4945 = vmatpush1.bf16.msra.mxu0 %v4918
    %4946 = vmatprep.subr.bf16.mxu0 %v4917
    %4947 = vmatpush1.bf16.msra.mxu0 %v4916
    %4948 = vmatprep.subr.bf16.mxu0 %v4915
    %4949 = vmatpush1.bf16.msra.mxu0 %v4914
    %4950 = vmatprep.subr.bf16.mxu0 %v4913
    %4951 = vmatpush1.bf16.msra.mxu0 %v4912
    %4952 = vmatprep.subr.bf16.mxu0 %v4911
    %4953 = vmatpush1.bf16.msra.mxu0 %v4910
    %4954 = vmatprep.subr.bf16.mxu0 %v4909
    %4955 = vmatpush1.bf16.msra.mxu0 %v4908
    %4956 = vmatprep.subr.bf16.mxu0 0
    %4957 = vmatpush2.bf16.msra.mxu0 0
    %4958 = vmatprep.subr.bf16.mxu0 0
    %4959 = vmatpush2.bf16.msra.mxu0 0
    %4960 = vmatprep.subr.bf16.mxu0 0
    %4961 = vmatpush2.bf16.msra.mxu0 0
    %4962 = vmatprep.subr.bf16.mxu0 0
    %4963 = vmatpush2.bf16.msra.mxu0 0
    %4964 = vmatprep.subr.bf16.mxu0 0
    %4965 = vmatpush2.bf16.msra.mxu0 0
    %4966 = vmatprep.subr.bf16.mxu0 0
    %4967 = vmatpush2.bf16.msra.mxu0 0
    %4968 = vmatprep.subr.bf16.mxu0 0
    %4969 = vmatpush2.bf16.msra.mxu0 0
    %4970 = vmatprep.subr.bf16.mxu0 0
    %4971 = vmatpush2.bf16.msra.mxu0 0
    %4972 = vmatprep.mubr.bf16.mxu0 0
    %4973 = vmatmul.mubr.bf16.gmra.mxu0 %v4858
    %v4974 = vpop.f32.mrf.mxu0
    %v4975 = vadd.f32 0.0, %v4974
    %v4976 = vpop.f32.mrf.mxu0
    %v4977 = vadd.f32 0.0, %v4976
    %v4978 = vpop.f32.mrf.mxu0
    %v4979 = vpop.f32.mrf.mxu0
    %4980 = vdwg.mxu0
    %v4981 = vadd.f32 %v4840, %v4975
    %v4982 = vadd.f32 %v4841, %v4977
    %v4983 = vld [vmem:[%s4 + $0xa80] sm:$0xff]
    %v4984 = vld [vmem:[%s4 + $0xa88] sm:$0xff]
    %v4985 = vld [vmem:[%s4 + $0xa90] sm:$0xff]
    %v4986 = vld [vmem:[%s4 + $0xa98] sm:$0xff]
    %v4987 = vld [vmem:[%s4 + $0xaa0] sm:$0xff]
    %v4988 = vld [vmem:[%s4 + $0xaa8] sm:$0xff]
    %v4989 = vld [vmem:[%s4 + $0xab0] sm:$0xff]
    %v4990 = vld [vmem:[%s4 + $0xab8] sm:$0xff]
    %v4991 = vld [vmem:[%s4 + $0xac0] sm:$0xff]
    %v4992 = vld [vmem:[%s4 + $0xac8] sm:$0xff]
    %v4993 = vld [vmem:[%s4 + $0xad0] sm:$0xff]
    %v4994 = vld [vmem:[%s4 + $0xad8] sm:$0xff]
    %v4995 = vld [vmem:[%s4 + $0xae0] sm:$0xff]
    %v4996 = vld [vmem:[%s4 + $0xae8] sm:$0xff]
    %v4997 = vld [vmem:[%s4 + $0xaf0] sm:$0xff]
    %v4998 = vld [vmem:[%s4 + $0xaf8] sm:$0xff]
    %v4999 = vrot.slane %v593, 3
    %v5017 = vunpack.c.l.b16 %v4983
    %v5018 = vunpack.c.h.b16 %v4983
    %v5019 = vunpack.c.l.b16 %v4984
    %v5020 = vunpack.c.h.b16 %v4984
    %v5021 = vunpack.c.l.b16 %v4985
    %v5022 = vunpack.c.h.b16 %v4985
    %v5023 = vunpack.c.l.b16 %v4986
    %v5024 = vunpack.c.h.b16 %v4986
    %v5025 = vunpack.c.l.b16 %v4987
    %v5026 = vunpack.c.h.b16 %v4987
    %v5027 = vunpack.c.l.b16 %v4988
    %v5028 = vunpack.c.h.b16 %v4988
    %v5029 = vunpack.c.l.b16 %v4989
    %v5030 = vunpack.c.h.b16 %v4989
    %v5031 = vunpack.c.l.b16 %v4990
    %v5032 = vunpack.c.h.b16 %v4990
    %v5033 = vunpack.c.l.b16 %v4991
    %v5034 = vunpack.c.h.b16 %v4991
    %v5035 = vunpack.c.l.b16 %v4992
    %v5036 = vunpack.c.h.b16 %v4992
    %v5037 = vunpack.c.l.b16 %v4993
    %v5038 = vunpack.c.h.b16 %v4993
    %v5039 = vunpack.c.l.b16 %v4994
    %v5040 = vunpack.c.h.b16 %v4994
    %v5041 = vunpack.c.l.b16 %v4995
    %v5042 = vunpack.c.h.b16 %v4995
    %v5043 = vunpack.c.l.b16 %v4996
    %v5044 = vunpack.c.h.b16 %v4996
    %v5045 = vunpack.c.l.b16 %v4997
    %v5046 = vunpack.c.h.b16 %v4997
    %v5047 = vunpack.c.l.b16 %v4998
    %v5048 = vunpack.c.h.b16 %v4998
    %v5049 = vpack.c.b16 %v5019, %v5017
    %v5050 = vpack.c.b16 %v5020, %v5018
    %v5051 = vpack.c.b16 %v5023, %v5021
    %v5052 = vpack.c.b16 %v5024, %v5022
    %v5053 = vpack.c.b16 %v5027, %v5025
    %v5054 = vpack.c.b16 %v5028, %v5026
    %v5055 = vpack.c.b16 %v5031, %v5029
    %v5056 = vpack.c.b16 %v5032, %v5030
    %v5057 = vpack.c.b16 %v5035, %v5033
    %v5058 = vpack.c.b16 %v5036, %v5034
    %v5059 = vpack.c.b16 %v5039, %v5037
    %v5060 = vpack.c.b16 %v5040, %v5038
    %v5061 = vpack.c.b16 %v5043, %v5041
    %v5062 = vpack.c.b16 %v5044, %v5042
    %v5063 = vpack.c.b16 %v5047, %v5045
    %v5064 = vpack.c.b16 %v5048, %v5046
    %5081 = vmatprep.subr.bf16.mxu0 %v5064
    %5082 = vmatpush1.bf16.msra.mxu0 %v5063
    %5083 = vmatprep.subr.bf16.mxu0 %v5062
    %5084 = vmatpush1.bf16.msra.mxu0 %v5061
    %5085 = vmatprep.subr.bf16.mxu0 %v5060
    %5086 = vmatpush1.bf16.msra.mxu0 %v5059
    %5087 = vmatprep.subr.bf16.mxu0 %v5058
    %5088 = vmatpush1.bf16.msra.mxu0 %v5057
    %5089 = vmatprep.subr.bf16.mxu0 %v5056
    %5090 = vmatpush1.bf16.msra.mxu0 %v5055
    %5091 = vmatprep.subr.bf16.mxu0 %v5054
    %5092 = vmatpush1.bf16.msra.mxu0 %v5053
    %5093 = vmatprep.subr.bf16.mxu0 %v5052
    %5094 = vmatpush1.bf16.msra.mxu0 %v5051
    %5095 = vmatprep.subr.bf16.mxu0 %v5050
    %5096 = vmatpush1.bf16.msra.mxu0 %v5049
    %5097 = vmatprep.subr.bf16.mxu0 0
    %5098 = vmatpush2.bf16.msra.mxu0 0
    %5099 = vmatprep.subr.bf16.mxu0 0
    %5100 = vmatpush2.bf16.msra.mxu0 0
    %5101 = vmatprep.subr.bf16.mxu0 0
    %5102 = vmatpush2.bf16.msra.mxu0 0
    %5103 = vmatprep.subr.bf16.mxu0 0
    %5104 = vmatpush2.bf16.msra.mxu0 0
    %5105 = vmatprep.subr.bf16.mxu0 0
    %5106 = vmatpush2.bf16.msra.mxu0 0
    %5107 = vmatprep.subr.bf16.mxu0 0
    %5108 = vmatpush2.bf16.msra.mxu0 0
    %5109 = vmatprep.subr.bf16.mxu0 0
    %5110 = vmatpush2.bf16.msra.mxu0 0
    %5111 = vmatprep.subr.bf16.mxu0 0
    %5112 = vmatpush2.bf16.msra.mxu0 0
    %5113 = vmatprep.mubr.bf16.mxu0 0
    %5114 = vmatmul.mubr.bf16.gmra.mxu0 %v4999
    %v5115 = vpop.f32.mrf.mxu0
    %v5116 = vadd.f32 0.0, %v5115
    %v5117 = vpop.f32.mrf.mxu0
    %v5118 = vadd.f32 0.0, %v5117
    %v5119 = vpop.f32.mrf.mxu0
    %v5120 = vpop.f32.mrf.mxu0
    %5121 = vdwg.mxu0
    %v5122 = vadd.f32 %v4981, %v5116
    %v5123 = vadd.f32 %v4982, %v5118
    %v5124 = vld [vmem:[%s4 + $0xb00] sm:$0xff]
    %v5125 = vld [vmem:[%s4 + $0xb08] sm:$0xff]
    %v5126 = vld [vmem:[%s4 + $0xb10] sm:$0xff]
    %v5127 = vld [vmem:[%s4 + $0xb18] sm:$0xff]
    %v5128 = vld [vmem:[%s4 + $0xb20] sm:$0xff]
    %v5129 = vld [vmem:[%s4 + $0xb28] sm:$0xff]
    %v5130 = vld [vmem:[%s4 + $0xb30] sm:$0xff]
    %v5131 = vld [vmem:[%s4 + $0xb38] sm:$0xff]
    %v5132 = vld [vmem:[%s4 + $0xb40] sm:$0xff]
    %v5133 = vld [vmem:[%s4 + $0xb48] sm:$0xff]
    %v5134 = vld [vmem:[%s4 + $0xb50] sm:$0xff]
    %v5135 = vld [vmem:[%s4 + $0xb58] sm:$0xff]
    %v5136 = vld [vmem:[%s4 + $0xb60] sm:$0xff]
    %v5137 = vld [vmem:[%s4 + $0xb68] sm:$0xff]
    %v5138 = vld [vmem:[%s4 + $0xb70] sm:$0xff]
    %v5139 = vld [vmem:[%s4 + $0xb78] sm:$0xff]
    %v5156 = vunpack.c.l.b16 %v5124
    %v5157 = vunpack.c.h.b16 %v5124
    %v5158 = vunpack.c.l.b16 %v5125
    %v5159 = vunpack.c.h.b16 %v5125
    %v5160 = vunpack.c.l.b16 %v5126
    %v5161 = vunpack.c.h.b16 %v5126
    %v5162 = vunpack.c.l.b16 %v5127
    %v5163 = vunpack.c.h.b16 %v5127
    %v5164 = vunpack.c.l.b16 %v5128
    %v5165 = vunpack.c.h.b16 %v5128
    %v5166 = vunpack.c.l.b16 %v5129
    %v5167 = vunpack.c.h.b16 %v5129
    %v5168 = vunpack.c.l.b16 %v5130
    %v5169 = vunpack.c.h.b16 %v5130
    %v5170 = vunpack.c.l.b16 %v5131
    %v5171 = vunpack.c.h.b16 %v5131
    %v5172 = vunpack.c.l.b16 %v5132
    %v5173 = vunpack.c.h.b16 %v5132
    %v5174 = vunpack.c.l.b16 %v5133
    %v5175 = vunpack.c.h.b16 %v5133
    %v5176 = vunpack.c.l.b16 %v5134
    %v5177 = vunpack.c.h.b16 %v5134
    %v5178 = vunpack.c.l.b16 %v5135
    %v5179 = vunpack.c.h.b16 %v5135
    %v5180 = vunpack.c.l.b16 %v5136
    %v5181 = vunpack.c.h.b16 %v5136
    %v5182 = vunpack.c.l.b16 %v5137
    %v5183 = vunpack.c.h.b16 %v5137
    %v5184 = vunpack.c.l.b16 %v5138
    %v5185 = vunpack.c.h.b16 %v5138
    %v5186 = vunpack.c.l.b16 %v5139
    %v5187 = vunpack.c.h.b16 %v5139
    %v5188 = vpack.c.b16 %v5158, %v5156
    %v5189 = vpack.c.b16 %v5159, %v5157
    %v5190 = vpack.c.b16 %v5162, %v5160
    %v5191 = vpack.c.b16 %v5163, %v5161
    %v5192 = vpack.c.b16 %v5166, %v5164
    %v5193 = vpack.c.b16 %v5167, %v5165
    %v5194 = vpack.c.b16 %v5170, %v5168
    %v5195 = vpack.c.b16 %v5171, %v5169
    %v5196 = vpack.c.b16 %v5174, %v5172
    %v5197 = vpack.c.b16 %v5175, %v5173
    %v5198 = vpack.c.b16 %v5178, %v5176
    %v5199 = vpack.c.b16 %v5179, %v5177
    %v5200 = vpack.c.b16 %v5182, %v5180
    %v5201 = vpack.c.b16 %v5183, %v5181
    %v5202 = vpack.c.b16 %v5186, %v5184
    %v5203 = vpack.c.b16 %v5187, %v5185
    %5220 = vmatprep.subr.bf16.mxu0 %v5203
    %5221 = vmatpush1.bf16.msra.mxu0 %v5202
    %5222 = vmatprep.subr.bf16.mxu0 %v5201
    %5223 = vmatpush1.bf16.msra.mxu0 %v5200
    %5224 = vmatprep.subr.bf16.mxu0 %v5199
    %5225 = vmatpush1.bf16.msra.mxu0 %v5198
    %5226 = vmatprep.subr.bf16.mxu0 %v5197
    %5227 = vmatpush1.bf16.msra.mxu0 %v5196
    %5228 = vmatprep.subr.bf16.mxu0 %v5195
    %5229 = vmatpush1.bf16.msra.mxu0 %v5194
    %5230 = vmatprep.subr.bf16.mxu0 %v5193
    %5231 = vmatpush1.bf16.msra.mxu0 %v5192
    %5232 = vmatprep.subr.bf16.mxu0 %v5191
    %5233 = vmatpush1.bf16.msra.mxu0 %v5190
    %5234 = vmatprep.subr.bf16.mxu0 %v5189
    %5235 = vmatpush1.bf16.msra.mxu0 %v5188
    %5236 = vmatprep.subr.bf16.mxu0 0
    %5237 = vmatpush2.bf16.msra.mxu0 0
    %5238 = vmatprep.subr.bf16.mxu0 0
    %5239 = vmatpush2.bf16.msra.mxu0 0
    %5240 = vmatprep.subr.bf16.mxu0 0
    %5241 = vmatpush2.bf16.msra.mxu0 0
    %5242 = vmatprep.subr.bf16.mxu0 0
    %5243 = vmatpush2.bf16.msra.mxu0 0
    %5244 = vmatprep.subr.bf16.mxu0 0
    %5245 = vmatpush2.bf16.msra.mxu0 0
    %5246 = vmatprep.subr.bf16.mxu0 0
    %5247 = vmatpush2.bf16.msra.mxu0 0
    %5248 = vmatprep.subr.bf16.mxu0 0
    %5249 = vmatpush2.bf16.msra.mxu0 0
    %5250 = vmatprep.subr.bf16.mxu0 0
    %5251 = vmatpush2.bf16.msra.mxu0 0
    %5252 = vmatprep.mubr.bf16.mxu0 0
    %5253 = vmatmul.mubr.bf16.gmra.mxu0 %v3683
    %v5254 = vpop.f32.mrf.mxu0
    %v5255 = vadd.f32 0.0, %v5254
    %v5256 = vpop.f32.mrf.mxu0
    %v5257 = vadd.f32 0.0, %v5256
    %v5258 = vpop.f32.mrf.mxu0
    %v5259 = vpop.f32.mrf.mxu0
    %5260 = vdwg.mxu0
    %v5261 = vadd.f32 %v5122, %v5255
    %v5262 = vadd.f32 %v5123, %v5257
    %v5263 = vld [vmem:[%s4 + $0xb80] sm:$0xff]
    %v5264 = vld [vmem:[%s4 + $0xb88] sm:$0xff]
    %v5265 = vld [vmem:[%s4 + $0xb90] sm:$0xff]
    %v5266 = vld [vmem:[%s4 + $0xb98] sm:$0xff]
    %v5267 = vld [vmem:[%s4 + $0xba0] sm:$0xff]
    %v5268 = vld [vmem:[%s4 + $0xba8] sm:$0xff]
    %v5269 = vld [vmem:[%s4 + $0xbb0] sm:$0xff]
    %v5270 = vld [vmem:[%s4 + $0xbb8] sm:$0xff]
    %v5271 = vld [vmem:[%s4 + $0xbc0] sm:$0xff]
    %v5272 = vld [vmem:[%s4 + $0xbc8] sm:$0xff]
    %v5273 = vld [vmem:[%s4 + $0xbd0] sm:$0xff]
    %v5274 = vld [vmem:[%s4 + $0xbd8] sm:$0xff]
    %v5275 = vld [vmem:[%s4 + $0xbe0] sm:$0xff]
    %v5276 = vld [vmem:[%s4 + $0xbe8] sm:$0xff]
    %v5277 = vld [vmem:[%s4 + $0xbf0] sm:$0xff]
    %v5278 = vld [vmem:[%s4 + $0xbf8] sm:$0xff]
    %v5279 = vrot.slane %v593, 6
    %v5297 = vunpack.c.l.b16 %v5263
    %v5298 = vunpack.c.h.b16 %v5263
    %v5299 = vunpack.c.l.b16 %v5264
    %v5300 = vunpack.c.h.b16 %v5264
    %v5301 = vunpack.c.l.b16 %v5265
    %v5302 = vunpack.c.h.b16 %v5265
    %v5303 = vunpack.c.l.b16 %v5266
    %v5304 = vunpack.c.h.b16 %v5266
    %v5305 = vunpack.c.l.b16 %v5267
    %v5306 = vunpack.c.h.b16 %v5267
    %v5307 = vunpack.c.l.b16 %v5268
    %v5308 = vunpack.c.h.b16 %v5268
    %v5309 = vunpack.c.l.b16 %v5269
    %v5310 = vunpack.c.h.b16 %v5269
    %v5311 = vunpack.c.l.b16 %v5270
    %v5312 = vunpack.c.h.b16 %v5270
    %v5313 = vunpack.c.l.b16 %v5271
    %v5314 = vunpack.c.h.b16 %v5271
    %v5315 = vunpack.c.l.b16 %v5272
    %v5316 = vunpack.c.h.b16 %v5272
    %v5317 = vunpack.c.l.b16 %v5273
    %v5318 = vunpack.c.h.b16 %v5273
    %v5319 = vunpack.c.l.b16 %v5274
    %v5320 = vunpack.c.h.b16 %v5274
    %v5321 = vunpack.c.l.b16 %v5275
    %v5322 = vunpack.c.h.b16 %v5275
    %v5323 = vunpack.c.l.b16 %v5276
    %v5324 = vunpack.c.h.b16 %v5276
    %v5325 = vunpack.c.l.b16 %v5277
    %v5326 = vunpack.c.h.b16 %v5277
    %v5327 = vunpack.c.l.b16 %v5278
    %v5328 = vunpack.c.h.b16 %v5278
    %v5329 = vpack.c.b16 %v5299, %v5297
    %v5330 = vpack.c.b16 %v5300, %v5298
    %v5331 = vpack.c.b16 %v5303, %v5301
    %v5332 = vpack.c.b16 %v5304, %v5302
    %v5333 = vpack.c.b16 %v5307, %v5305
    %v5334 = vpack.c.b16 %v5308, %v5306
    %v5335 = vpack.c.b16 %v5311, %v5309
    %v5336 = vpack.c.b16 %v5312, %v5310
    %v5337 = vpack.c.b16 %v5315, %v5313
    %v5338 = vpack.c.b16 %v5316, %v5314
    %v5339 = vpack.c.b16 %v5319, %v5317
    %v5340 = vpack.c.b16 %v5320, %v5318
    %v5341 = vpack.c.b16 %v5323, %v5321
    %v5342 = vpack.c.b16 %v5324, %v5322
    %v5343 = vpack.c.b16 %v5327, %v5325
    %v5344 = vpack.c.b16 %v5328, %v5326
    %5361 = vmatprep.subr.bf16.mxu0 %v5344
    %5362 = vmatpush1.bf16.msra.mxu0 %v5343
    %5363 = vmatprep.subr.bf16.mxu0 %v5342
    %5364 = vmatpush1.bf16.msra.mxu0 %v5341
    %5365 = vmatprep.subr.bf16.mxu0 %v5340
    %5366 = vmatpush1.bf16.msra.mxu0 %v5339
    %5367 = vmatprep.subr.bf16.mxu0 %v5338
    %5368 = vmatpush1.bf16.msra.mxu0 %v5337
    %5369 = vmatprep.subr.bf16.mxu0 %v5336
    %5370 = vmatpush1.bf16.msra.mxu0 %v5335
    %5371 = vmatprep.subr.bf16.mxu0 %v5334
    %5372 = vmatpush1.bf16.msra.mxu0 %v5333
    %5373 = vmatprep.subr.bf16.mxu0 %v5332
    %5374 = vmatpush1.bf16.msra.mxu0 %v5331
    %5375 = vmatprep.subr.bf16.mxu0 %v5330
    %5376 = vmatpush1.bf16.msra.mxu0 %v5329
    %5377 = vmatprep.subr.bf16.mxu0 0
    %5378 = vmatpush2.bf16.msra.mxu0 0
    %5379 = vmatprep.subr.bf16.mxu0 0
    %5380 = vmatpush2.bf16.msra.mxu0 0
    %5381 = vmatprep.subr.bf16.mxu0 0
    %5382 = vmatpush2.bf16.msra.mxu0 0
    %5383 = vmatprep.subr.bf16.mxu0 0
    %5384 = vmatpush2.bf16.msra.mxu0 0
    %5385 = vmatprep.subr.bf16.mxu0 0
    %5386 = vmatpush2.bf16.msra.mxu0 0
    %5387 = vmatprep.subr.bf16.mxu0 0
    %5388 = vmatpush2.bf16.msra.mxu0 0
    %5389 = vmatprep.subr.bf16.mxu0 0
    %5390 = vmatpush2.bf16.msra.mxu0 0
    %5391 = vmatprep.subr.bf16.mxu0 0
    %5392 = vmatpush2.bf16.msra.mxu0 0
    %5393 = vmatprep.mubr.bf16.mxu0 0
    %5394 = vmatmul.mubr.bf16.gmra.mxu0 %v5279
    %v5395 = vpop.f32.mrf.mxu0
    %v5396 = vadd.f32 0.0, %v5395
    %v5397 = vpop.f32.mrf.mxu0
    %v5398 = vadd.f32 0.0, %v5397
    %v5399 = vpop.f32.mrf.mxu0
    %v5400 = vpop.f32.mrf.mxu0
    %5401 = vdwg.mxu0
    %v5402 = vadd.f32 %v5261, %v5396
    %v5403 = vadd.f32 %v5262, %v5398
    %v5404 = vld [vmem:[%s4 + $0xc00] sm:$0xff]
    %v5405 = vld [vmem:[%s4 + $0xc08] sm:$0xff]
    %v5406 = vld [vmem:[%s4 + $0xc10] sm:$0xff]
    %v5407 = vld [vmem:[%s4 + $0xc18] sm:$0xff]
    %v5408 = vld [vmem:[%s4 + $0xc20] sm:$0xff]
    %v5409 = vld [vmem:[%s4 + $0xc28] sm:$0xff]
    %v5410 = vld [vmem:[%s4 + $0xc30] sm:$0xff]
    %v5411 = vld [vmem:[%s4 + $0xc38] sm:$0xff]
    %v5412 = vld [vmem:[%s4 + $0xc40] sm:$0xff]
    %v5413 = vld [vmem:[%s4 + $0xc48] sm:$0xff]
    %v5414 = vld [vmem:[%s4 + $0xc50] sm:$0xff]
    %v5415 = vld [vmem:[%s4 + $0xc58] sm:$0xff]
    %v5416 = vld [vmem:[%s4 + $0xc60] sm:$0xff]
    %v5417 = vld [vmem:[%s4 + $0xc68] sm:$0xff]
    %v5418 = vld [vmem:[%s4 + $0xc70] sm:$0xff]
    %v5419 = vld [vmem:[%s4 + $0xc78] sm:$0xff]
    %v5420 = vrot.slane %v593, 7
    %v5438 = vunpack.c.l.b16 %v5404
    %v5439 = vunpack.c.h.b16 %v5404
    %v5440 = vunpack.c.l.b16 %v5405
    %v5441 = vunpack.c.h.b16 %v5405
    %v5442 = vunpack.c.l.b16 %v5406
    %v5443 = vunpack.c.h.b16 %v5406
    %v5444 = vunpack.c.l.b16 %v5407
    %v5445 = vunpack.c.h.b16 %v5407
    %v5446 = vunpack.c.l.b16 %v5408
    %v5447 = vunpack.c.h.b16 %v5408
    %v5448 = vunpack.c.l.b16 %v5409
    %v5449 = vunpack.c.h.b16 %v5409
    %v5450 = vunpack.c.l.b16 %v5410
    %v5451 = vunpack.c.h.b16 %v5410
    %v5452 = vunpack.c.l.b16 %v5411
    %v5453 = vunpack.c.h.b16 %v5411
    %v5454 = vunpack.c.l.b16 %v5412
    %v5455 = vunpack.c.h.b16 %v5412
    %v5456 = vunpack.c.l.b16 %v5413
    %v5457 = vunpack.c.h.b16 %v5413
    %v5458 = vunpack.c.l.b16 %v5414
    %v5459 = vunpack.c.h.b16 %v5414
    %v5460 = vunpack.c.l.b16 %v5415
    %v5461 = vunpack.c.h.b16 %v5415
    %v5462 = vunpack.c.l.b16 %v5416
    %v5463 = vunpack.c.h.b16 %v5416
    %v5464 = vunpack.c.l.b16 %v5417
    %v5465 = vunpack.c.h.b16 %v5417
    %v5466 = vunpack.c.l.b16 %v5418
    %v5467 = vunpack.c.h.b16 %v5418
    %v5468 = vunpack.c.l.b16 %v5419
    %v5469 = vunpack.c.h.b16 %v5419
    %v5470 = vpack.c.b16 %v5440, %v5438
    %v5471 = vpack.c.b16 %v5441, %v5439
    %v5472 = vpack.c.b16 %v5444, %v5442
    %v5473 = vpack.c.b16 %v5445, %v5443
    %v5474 = vpack.c.b16 %v5448, %v5446
    %v5475 = vpack.c.b16 %v5449, %v5447
    %v5476 = vpack.c.b16 %v5452, %v5450
    %v5477 = vpack.c.b16 %v5453, %v5451
    %v5478 = vpack.c.b16 %v5456, %v5454
    %v5479 = vpack.c.b16 %v5457, %v5455
    %v5480 = vpack.c.b16 %v5460, %v5458
    %v5481 = vpack.c.b16 %v5461, %v5459
    %v5482 = vpack.c.b16 %v5464, %v5462
    %v5483 = vpack.c.b16 %v5465, %v5463
    %v5484 = vpack.c.b16 %v5468, %v5466
    %v5485 = vpack.c.b16 %v5469, %v5467
    %5502 = vmatprep.subr.bf16.mxu0 %v5485
    %5503 = vmatpush1.bf16.msra.mxu0 %v5484
    %5504 = vmatprep.subr.bf16.mxu0 %v5483
    %5505 = vmatpush1.bf16.msra.mxu0 %v5482
    %5506 = vmatprep.subr.bf16.mxu0 %v5481
    %5507 = vmatpush1.bf16.msra.mxu0 %v5480
    %5508 = vmatprep.subr.bf16.mxu0 %v5479
    %5509 = vmatpush1.bf16.msra.mxu0 %v5478
    %5510 = vmatprep.subr.bf16.mxu0 %v5477
    %5511 = vmatpush1.bf16.msra.mxu0 %v5476
    %5512 = vmatprep.subr.bf16.mxu0 %v5475
    %5513 = vmatpush1.bf16.msra.mxu0 %v5474
    %5514 = vmatprep.subr.bf16.mxu0 %v5473
    %5515 = vmatpush1.bf16.msra.mxu0 %v5472
    %5516 = vmatprep.subr.bf16.mxu0 %v5471
    %5517 = vmatpush1.bf16.msra.mxu0 %v5470
    %5518 = vmatprep.subr.bf16.mxu0 0
    %5519 = vmatpush2.bf16.msra.mxu0 0
    %5520 = vmatprep.subr.bf16.mxu0 0
    %5521 = vmatpush2.bf16.msra.mxu0 0
    %5522 = vmatprep.subr.bf16.mxu0 0
    %5523 = vmatpush2.bf16.msra.mxu0 0
    %5524 = vmatprep.subr.bf16.mxu0 0
    %5525 = vmatpush2.bf16.msra.mxu0 0
    %5526 = vmatprep.subr.bf16.mxu0 0
    %5527 = vmatpush2.bf16.msra.mxu0 0
    %5528 = vmatprep.subr.bf16.mxu0 0
    %5529 = vmatpush2.bf16.msra.mxu0 0
    %5530 = vmatprep.subr.bf16.mxu0 0
    %5531 = vmatpush2.bf16.msra.mxu0 0
    %5532 = vmatprep.subr.bf16.mxu0 0
    %5533 = vmatpush2.bf16.msra.mxu0 0
    %5534 = vmatprep.mubr.bf16.mxu0 0
    %5535 = vmatmul.mubr.bf16.gmra.mxu0 %v5420
    %v5536 = vpop.f32.mrf.mxu0
    %v5537 = vadd.f32 0.0, %v5536
    %v5538 = vpop.f32.mrf.mxu0
    %v5539 = vadd.f32 0.0, %v5538
    %v5540 = vpop.f32.mrf.mxu0
    %v5541 = vpop.f32.mrf.mxu0
    %5542 = vdwg.mxu0
    %v5543 = vadd.f32 %v5402, %v5537
    %v5544 = vadd.f32 %v5403, %v5539
    %v5545 = vadd.f32 %v5543, %v1158
    %v5546 = vadd.f32 %v5544, %v1162
    %vm5547 = vcmp.gt.f32.partialorder %v5545, 0.0
    %vm5548 = vcmp.gt.f32.partialorder %v5546, 0.0
    %v5549 = vmul.f32 %v5545, 0.2
    %v5550 = vmul.f32 %v5546, 0.2
    %v5551 = vsel %vm5547, %v5545, %v5549
    %v5552 = vsel %vm5548, %v5546, %v5550
    %v5553 = vadd.f32 %v5551, %v1178
    %v5554 = vadd.f32 %v5552, %v1182
    %v5555 = vpack.c.bf16 %v5553, %v5553
    %v5556 = vpack.c.bf16 %v5554, %v5554
    %v5557 = vld [vmem:[#allocation3 + $0x600] sm:$0xff]
    %v5558 = vld [vmem:[#allocation3 + $0x608] sm:$0xff]
    %v5559 = vld [vmem:[#allocation3 + $0x610] sm:$0xff]
    %v5560 = vld [vmem:[#allocation3 + $0x618] sm:$0xff]
    %v5561 = vld [vmem:[#allocation3 + $0x620] sm:$0xff]
    %v5562 = vld [vmem:[#allocation3 + $0x628] sm:$0xff]
    %v5563 = vld [vmem:[#allocation3 + $0x630] sm:$0xff]
    %v5564 = vld [vmem:[#allocation3 + $0x638] sm:$0xff]
    %v5565 = vld [vmem:[#allocation3 + $0x640] sm:$0xff]
    %v5566 = vld [vmem:[#allocation3 + $0x648] sm:$0xff]
    %v5567 = vld [vmem:[#allocation3 + $0x650] sm:$0xff]
    %v5568 = vld [vmem:[#allocation3 + $0x658] sm:$0xff]
    %v5569 = vld [vmem:[#allocation3 + $0x660] sm:$0xff]
    %v5570 = vld [vmem:[#allocation3 + $0x668] sm:$0xff]
    %v5571 = vld [vmem:[#allocation3 + $0x670] sm:$0xff]
    %v5572 = vld [vmem:[#allocation3 + $0x678] sm:$0xff]
    %v5573 = vld [vmem:[#allocation3 + $0x680] sm:$0xff]
    %v5574 = vld [vmem:[#allocation3 + $0x688] sm:$0xff]
    %v5575 = vld [vmem:[#allocation3 + $0x690] sm:$0xff]
    %v5576 = vld [vmem:[#allocation3 + $0x698] sm:$0xff]
    %v5577 = vld [vmem:[#allocation3 + $0x6a0] sm:$0xff]
    %v5578 = vld [vmem:[#allocation3 + $0x6a8] sm:$0xff]
    %v5579 = vld [vmem:[#allocation3 + $0x6b0] sm:$0xff]
    %v5580 = vld [vmem:[#allocation3 + $0x6b8] sm:$0xff]
    %v5581 = vld [vmem:[#allocation3 + $0x6c0] sm:$0xff]
    %v5582 = vld [vmem:[#allocation3 + $0x6c8] sm:$0xff]
    %v5583 = vld [vmem:[#allocation3 + $0x6d0] sm:$0xff]
    %v5584 = vld [vmem:[#allocation3 + $0x6d8] sm:$0xff]
    %v5585 = vld [vmem:[#allocation3 + $0x6e0] sm:$0xff]
    %v5586 = vld [vmem:[#allocation3 + $0x6e8] sm:$0xff]
    %v5587 = vld [vmem:[#allocation3 + $0x6f0] sm:$0xff]
    %v5588 = vld [vmem:[#allocation3 + $0x6f8] sm:$0xff]
    %v5589 = vld [vmem:[#allocation3 + $0x700] sm:$0xff]
    %v5590 = vld [vmem:[#allocation3 + $0x708] sm:$0xff]
    %v5591 = vld [vmem:[#allocation3 + $0x710] sm:$0xff]
    %v5592 = vld [vmem:[#allocation3 + $0x718] sm:$0xff]
    %v5593 = vld [vmem:[#allocation3 + $0x720] sm:$0xff]
    %v5594 = vld [vmem:[#allocation3 + $0x728] sm:$0xff]
    %v5595 = vld [vmem:[#allocation3 + $0x730] sm:$0xff]
    %v5596 = vld [vmem:[#allocation3 + $0x738] sm:$0xff]
    %v5597 = vld [vmem:[#allocation3 + $0x740] sm:$0xff]
    %v5598 = vld [vmem:[#allocation3 + $0x748] sm:$0xff]
    %v5599 = vld [vmem:[#allocation3 + $0x750] sm:$0xff]
    %v5600 = vld [vmem:[#allocation3 + $0x758] sm:$0xff]
    %v5601 = vld [vmem:[#allocation3 + $0x760] sm:$0xff]
    %v5602 = vld [vmem:[#allocation3 + $0x768] sm:$0xff]
    %v5603 = vld [vmem:[#allocation3 + $0x770] sm:$0xff]
    %v5604 = vld [vmem:[#allocation3 + $0x778] sm:$0xff]
    %v5605 = vld [vmem:[#allocation3 + $0x780] sm:$0xff]
    %v5606 = vld [vmem:[#allocation3 + $0x788] sm:$0xff]
    %v5607 = vld [vmem:[#allocation3 + $0x790] sm:$0xff]
    %v5608 = vld [vmem:[#allocation3 + $0x798] sm:$0xff]
    %v5609 = vld [vmem:[#allocation3 + $0x7a0] sm:$0xff]
    %v5610 = vld [vmem:[#allocation3 + $0x7a8] sm:$0xff]
    %v5611 = vld [vmem:[#allocation3 + $0x7b0] sm:$0xff]
    %v5612 = vld [vmem:[#allocation3 + $0x7b8] sm:$0xff]
    %v5613 = vld [vmem:[#allocation3 + $0x7c0] sm:$0xff]
    %v5614 = vld [vmem:[#allocation3 + $0x7c8] sm:$0xff]
    %v5615 = vld [vmem:[#allocation3 + $0x7d0] sm:$0xff]
    %v5616 = vld [vmem:[#allocation3 + $0x7d8] sm:$0xff]
    %v5617 = vld [vmem:[#allocation3 + $0x7e0] sm:$0xff]
    %v5618 = vld [vmem:[#allocation3 + $0x7e8] sm:$0xff]
    %v5619 = vld [vmem:[#allocation3 + $0x7f0] sm:$0xff]
    %v5620 = vld [vmem:[#allocation3 + $0x7f8] sm:$0xff]
    %v5685 = vunpack.c.l.b16 %v5557
    %v5686 = vunpack.c.h.b16 %v5557
    %v5687 = vunpack.c.l.b16 %v5558
    %v5688 = vunpack.c.h.b16 %v5558
    %v5689 = vunpack.c.l.b16 %v5559
    %v5690 = vunpack.c.h.b16 %v5559
    %v5691 = vunpack.c.l.b16 %v5560
    %v5692 = vunpack.c.h.b16 %v5560
    %v5693 = vunpack.c.l.b16 %v5561
    %v5694 = vunpack.c.h.b16 %v5561
    %v5695 = vunpack.c.l.b16 %v5562
    %v5696 = vunpack.c.h.b16 %v5562
    %v5697 = vunpack.c.l.b16 %v5563
    %v5698 = vunpack.c.h.b16 %v5563
    %v5699 = vunpack.c.l.b16 %v5564
    %v5700 = vunpack.c.h.b16 %v5564
    %v5701 = vunpack.c.l.b16 %v5565
    %v5702 = vunpack.c.h.b16 %v5565
    %v5703 = vunpack.c.l.b16 %v5566
    %v5704 = vunpack.c.h.b16 %v5566
    %v5705 = vunpack.c.l.b16 %v5567
    %v5706 = vunpack.c.h.b16 %v5567
    %v5707 = vunpack.c.l.b16 %v5568
    %v5708 = vunpack.c.h.b16 %v5568
    %v5709 = vunpack.c.l.b16 %v5569
    %v5710 = vunpack.c.h.b16 %v5569
    %v5711 = vunpack.c.l.b16 %v5570
    %v5712 = vunpack.c.h.b16 %v5570
    %v5713 = vunpack.c.l.b16 %v5571
    %v5714 = vunpack.c.h.b16 %v5571
    %v5715 = vunpack.c.l.b16 %v5572
    %v5716 = vunpack.c.h.b16 %v5572
    %v5717 = vunpack.c.l.b16 %v5573
    %v5718 = vunpack.c.h.b16 %v5573
    %v5719 = vunpack.c.l.b16 %v5574
    %v5720 = vunpack.c.h.b16 %v5574
    %v5721 = vunpack.c.l.b16 %v5575
    %v5722 = vunpack.c.h.b16 %v5575
    %v5723 = vunpack.c.l.b16 %v5576
    %v5724 = vunpack.c.h.b16 %v5576
    %v5725 = vunpack.c.l.b16 %v5577
    %v5726 = vunpack.c.h.b16 %v5577
    %v5727 = vunpack.c.l.b16 %v5578
    %v5728 = vunpack.c.h.b16 %v5578
    %v5729 = vunpack.c.l.b16 %v5579
    %v5730 = vunpack.c.h.b16 %v5579
    %v5731 = vunpack.c.l.b16 %v5580
    %v5732 = vunpack.c.h.b16 %v5580
    %v5733 = vunpack.c.l.b16 %v5581
    %v5734 = vunpack.c.h.b16 %v5581
    %v5735 = vunpack.c.l.b16 %v5582
    %v5736 = vunpack.c.h.b16 %v5582
    %v5737 = vunpack.c.l.b16 %v5583
    %v5738 = vunpack.c.h.b16 %v5583
    %v5739 = vunpack.c.l.b16 %v5584
    %v5740 = vunpack.c.h.b16 %v5584
    %v5741 = vunpack.c.l.b16 %v5585
    %v5742 = vunpack.c.h.b16 %v5585
    %v5743 = vunpack.c.l.b16 %v5586
    %v5744 = vunpack.c.h.b16 %v5586
    %v5745 = vunpack.c.l.b16 %v5587
    %v5746 = vunpack.c.h.b16 %v5587
    %v5747 = vunpack.c.l.b16 %v5588
    %v5748 = vunpack.c.h.b16 %v5588
    %v5749 = vunpack.c.l.b16 %v5589
    %v5750 = vunpack.c.h.b16 %v5589
    %v5751 = vunpack.c.l.b16 %v5590
    %v5752 = vunpack.c.h.b16 %v5590
    %v5753 = vunpack.c.l.b16 %v5591
    %v5754 = vunpack.c.h.b16 %v5591
    %v5755 = vunpack.c.l.b16 %v5592
    %v5756 = vunpack.c.h.b16 %v5592
    %v5757 = vunpack.c.l.b16 %v5593
    %v5758 = vunpack.c.h.b16 %v5593
    %v5759 = vunpack.c.l.b16 %v5594
    %v5760 = vunpack.c.h.b16 %v5594
    %v5761 = vunpack.c.l.b16 %v5595
    %v5762 = vunpack.c.h.b16 %v5595
    %v5763 = vunpack.c.l.b16 %v5596
    %v5764 = vunpack.c.h.b16 %v5596
    %v5765 = vunpack.c.l.b16 %v5597
    %v5766 = vunpack.c.h.b16 %v5597
    %v5767 = vunpack.c.l.b16 %v5598
    %v5768 = vunpack.c.h.b16 %v5598
    %v5769 = vunpack.c.l.b16 %v5599
    %v5770 = vunpack.c.h.b16 %v5599
    %v5771 = vunpack.c.l.b16 %v5600
    %v5772 = vunpack.c.h.b16 %v5600
    %v5773 = vunpack.c.l.b16 %v5601
    %v5774 = vunpack.c.h.b16 %v5601
    %v5775 = vunpack.c.l.b16 %v5602
    %v5776 = vunpack.c.h.b16 %v5602
    %v5777 = vunpack.c.l.b16 %v5603
    %v5778 = vunpack.c.h.b16 %v5603
    %v5779 = vunpack.c.l.b16 %v5604
    %v5780 = vunpack.c.h.b16 %v5604
    %v5781 = vunpack.c.l.b16 %v5605
    %v5782 = vunpack.c.h.b16 %v5605
    %v5783 = vunpack.c.l.b16 %v5606
    %v5784 = vunpack.c.h.b16 %v5606
    %v5785 = vunpack.c.l.b16 %v5607
    %v5786 = vunpack.c.h.b16 %v5607
    %v5787 = vunpack.c.l.b16 %v5608
    %v5788 = vunpack.c.h.b16 %v5608
    %v5789 = vunpack.c.l.b16 %v5609
    %v5790 = vunpack.c.h.b16 %v5609
    %v5791 = vunpack.c.l.b16 %v5610
    %v5792 = vunpack.c.h.b16 %v5610
    %v5793 = vunpack.c.l.b16 %v5611
    %v5794 = vunpack.c.h.b16 %v5611
    %v5795 = vunpack.c.l.b16 %v5612
    %v5796 = vunpack.c.h.b16 %v5612
    %v5797 = vunpack.c.l.b16 %v5613
    %v5798 = vunpack.c.h.b16 %v5613
    %v5799 = vunpack.c.l.b16 %v5614
    %v5800 = vunpack.c.h.b16 %v5614
    %v5801 = vunpack.c.l.b16 %v5615
    %v5802 = vunpack.c.h.b16 %v5615
    %v5803 = vunpack.c.l.b16 %v5616
    %v5804 = vunpack.c.h.b16 %v5616
    %v5805 = vunpack.c.l.b16 %v5617
    %v5806 = vunpack.c.h.b16 %v5617
    %v5807 = vunpack.c.l.b16 %v5618
    %v5808 = vunpack.c.h.b16 %v5618
    %v5809 = vunpack.c.l.b16 %v5619
    %v5810 = vunpack.c.h.b16 %v5619
    %v5811 = vunpack.c.l.b16 %v5620
    %v5812 = vunpack.c.h.b16 %v5620
    %v5813 = vpack.c.b16 %v5689, %v5685
    %v5814 = vpack.c.b16 %v5690, %v5686
    %v5815 = vpack.c.b16 %v5691, %v5687
    %v5816 = vpack.c.b16 %v5692, %v5688
    %v5817 = vpack.c.b16 %v5697, %v5693
    %v5818 = vpack.c.b16 %v5698, %v5694
    %v5819 = vpack.c.b16 %v5699, %v5695
    %v5820 = vpack.c.b16 %v5700, %v5696
    %v5821 = vpack.c.b16 %v5705, %v5701
    %v5822 = vpack.c.b16 %v5706, %v5702
    %v5823 = vpack.c.b16 %v5707, %v5703
    %v5824 = vpack.c.b16 %v5708, %v5704
    %v5825 = vpack.c.b16 %v5713, %v5709
    %v5826 = vpack.c.b16 %v5714, %v5710
    %v5827 = vpack.c.b16 %v5715, %v5711
    %v5828 = vpack.c.b16 %v5716, %v5712
    %v5829 = vpack.c.b16 %v5721, %v5717
    %v5830 = vpack.c.b16 %v5722, %v5718
    %v5831 = vpack.c.b16 %v5723, %v5719
    %v5832 = vpack.c.b16 %v5724, %v5720
    %v5833 = vpack.c.b16 %v5729, %v5725
    %v5834 = vpack.c.b16 %v5730, %v5726
    %v5835 = vpack.c.b16 %v5731, %v5727
    %v5836 = vpack.c.b16 %v5732, %v5728
    %v5837 = vpack.c.b16 %v5737, %v5733
    %v5838 = vpack.c.b16 %v5738, %v5734
    %v5839 = vpack.c.b16 %v5739, %v5735
    %v5840 = vpack.c.b16 %v5740, %v5736
    %v5841 = vpack.c.b16 %v5745, %v5741
    %v5842 = vpack.c.b16 %v5746, %v5742
    %v5843 = vpack.c.b16 %v5747, %v5743
    %v5844 = vpack.c.b16 %v5748, %v5744
    %v5845 = vpack.c.b16 %v5753, %v5749
    %v5846 = vpack.c.b16 %v5754, %v5750
    %v5847 = vpack.c.b16 %v5755, %v5751
    %v5848 = vpack.c.b16 %v5756, %v5752
    %v5849 = vpack.c.b16 %v5761, %v5757
    %v5850 = vpack.c.b16 %v5762, %v5758
    %v5851 = vpack.c.b16 %v5763, %v5759
    %v5852 = vpack.c.b16 %v5764, %v5760
    %v5853 = vpack.c.b16 %v5769, %v5765
    %v5854 = vpack.c.b16 %v5770, %v5766
    %v5855 = vpack.c.b16 %v5771, %v5767
    %v5856 = vpack.c.b16 %v5772, %v5768
    %v5857 = vpack.c.b16 %v5777, %v5773
    %v5858 = vpack.c.b16 %v5778, %v5774
    %v5859 = vpack.c.b16 %v5779, %v5775
    %v5860 = vpack.c.b16 %v5780, %v5776
    %v5861 = vpack.c.b16 %v5785, %v5781
    %v5862 = vpack.c.b16 %v5786, %v5782
    %v5863 = vpack.c.b16 %v5787, %v5783
    %v5864 = vpack.c.b16 %v5788, %v5784
    %v5865 = vpack.c.b16 %v5793, %v5789
    %v5866 = vpack.c.b16 %v5794, %v5790
    %v5867 = vpack.c.b16 %v5795, %v5791
    %v5868 = vpack.c.b16 %v5796, %v5792
    %v5869 = vpack.c.b16 %v5801, %v5797
    %v5870 = vpack.c.b16 %v5802, %v5798
    %v5871 = vpack.c.b16 %v5803, %v5799
    %v5872 = vpack.c.b16 %v5804, %v5800
    %v5873 = vpack.c.b16 %v5809, %v5805
    %v5874 = vpack.c.b16 %v5810, %v5806
    %v5875 = vpack.c.b16 %v5811, %v5807
    %v5876 = vpack.c.b16 %v5812, %v5808
    %5941 = vmatprep.subr.bf16.mxu0 %v5842
    %5942 = vmatpush1.bf16.msra.mxu0 %v5841
    %5943 = vmatprep.subr.bf16.mxu0 %v5838
    %5944 = vmatpush1.bf16.msra.mxu0 %v5837
    %5945 = vmatprep.subr.bf16.mxu0 %v5834
    %5946 = vmatpush1.bf16.msra.mxu0 %v5833
    %5947 = vmatprep.subr.bf16.mxu0 %v5830
    %5948 = vmatpush1.bf16.msra.mxu0 %v5829
    %5949 = vmatprep.subr.bf16.mxu0 %v5826
    %5950 = vmatpush1.bf16.msra.mxu0 %v5825
    %5951 = vmatprep.subr.bf16.mxu0 %v5822
    %5952 = vmatpush1.bf16.msra.mxu0 %v5821
    %5953 = vmatprep.subr.bf16.mxu0 %v5818
    %5954 = vmatpush1.bf16.msra.mxu0 %v5817
    %5955 = vmatprep.subr.bf16.mxu0 %v5814
    %5956 = vmatpush1.bf16.msra.mxu0 %v5813
    %5957 = vmatprep.subr.bf16.mxu0 %v5874
    %5958 = vmatpush2.bf16.msra.mxu0 %v5873
    %5959 = vmatprep.subr.bf16.mxu0 %v5870
    %5960 = vmatpush2.bf16.msra.mxu0 %v5869
    %5961 = vmatprep.subr.bf16.mxu0 %v5866
    %5962 = vmatpush2.bf16.msra.mxu0 %v5865
    %5963 = vmatprep.subr.bf16.mxu0 %v5862
    %5964 = vmatpush2.bf16.msra.mxu0 %v5861
    %5965 = vmatprep.subr.bf16.mxu0 %v5858
    %5966 = vmatpush2.bf16.msra.mxu0 %v5857
    %5967 = vmatprep.subr.bf16.mxu0 %v5854
    %5968 = vmatpush2.bf16.msra.mxu0 %v5853
    %5969 = vmatprep.subr.bf16.mxu0 %v5850
    %5970 = vmatpush2.bf16.msra.mxu0 %v5849
    %5971 = vmatprep.subr.bf16.mxu0 %v5846
    %5972 = vmatpush2.bf16.msra.mxu0 %v5845
    %5973 = vmatprep.mubr.bf16.mxu0 %v5556
    %5974 = vmatmul.mubr.bf16.gmra.mxu0 %v5555
    %v5975 = vpop.f32.mrf.mxu0
    %v5976 = vadd.f32 0.0, %v5975
    %v5977 = vpop.f32.mrf.mxu0
    %v5978 = vadd.f32 0.0, %v5977
    %v5979 = vpop.f32.mrf.mxu0
    %v5980 = vpop.f32.mrf.mxu0
    %5981 = vdwg.mxu0
    %5982 = vmatprep.subr.bf16.mxu0 %v5844
    %5983 = vmatpush1.bf16.msra.mxu0 %v5843
    %5984 = vmatprep.subr.bf16.mxu0 %v5840
    %5985 = vmatpush1.bf16.msra.mxu0 %v5839
    %5986 = vmatprep.subr.bf16.mxu0 %v5836
    %5987 = vmatpush1.bf16.msra.mxu0 %v5835
    %5988 = vmatprep.subr.bf16.mxu0 %v5832
    %5989 = vmatpush1.bf16.msra.mxu0 %v5831
    %5990 = vmatprep.subr.bf16.mxu0 %v5828
    %5991 = vmatpush1.bf16.msra.mxu0 %v5827
    %5992 = vmatprep.subr.bf16.mxu0 %v5824
    %5993 = vmatpush1.bf16.msra.mxu0 %v5823
    %5994 = vmatprep.subr.bf16.mxu0 %v5820
    %5995 = vmatpush1.bf16.msra.mxu0 %v5819
    %5996 = vmatprep.subr.bf16.mxu0 %v5816
    %5997 = vmatpush1.bf16.msra.mxu0 %v5815
    %5998 = vmatprep.subr.bf16.mxu0 %v5876
    %5999 = vmatpush2.bf16.msra.mxu0 %v5875
    %6000 = vmatprep.subr.bf16.mxu0 %v5872
    %6001 = vmatpush2.bf16.msra.mxu0 %v5871
    %6002 = vmatprep.subr.bf16.mxu0 %v5868
    %6003 = vmatpush2.bf16.msra.mxu0 %v5867
    %6004 = vmatprep.subr.bf16.mxu0 %v5864
    %6005 = vmatpush2.bf16.msra.mxu0 %v5863
    %6006 = vmatprep.subr.bf16.mxu0 %v5860
    %6007 = vmatpush2.bf16.msra.mxu0 %v5859
    %6008 = vmatprep.subr.bf16.mxu0 %v5856
    %6009 = vmatpush2.bf16.msra.mxu0 %v5855
    %6010 = vmatprep.subr.bf16.mxu0 %v5852
    %6011 = vmatpush2.bf16.msra.mxu0 %v5851
    %6012 = vmatprep.subr.bf16.mxu0 %v5848
    %6013 = vmatpush2.bf16.msra.mxu0 %v5847
    %6014 = vmatprep.mubr.bf16.mxu0 %v5556
    %6015 = vmatmul.mubr.bf16.gmra.mxu0 %v5555
    %v6016 = vpop.f32.mrf.mxu0
    %v6017 = vadd.f32 0.0, %v6016
    %v6018 = vpop.f32.mrf.mxu0
    %v6019 = vadd.f32 0.0, %v6018
    %v6020 = vpop.f32.mrf.mxu0
    %v6021 = vpop.f32.mrf.mxu0
    %6022 = vdwg.mxu0
    %v6023 = vadd.f32 %v4286, %v5976
    %v6024 = vadd.f32 %v4287, %v5978
    %v6025 = vadd.f32 %v4288, %v6017
    %v6026 = vadd.f32 %v4289, %v6019
    %v6027 = vld [vmem:[%s8] sm:$0xf]
    %v6029 = vlaneseq
    %v6030 = vshrl.u32 %v6029, 7
    %v6031 = vsub.s32 0, %v6030
    %v6032 = vrot.slane %v6027, %v6031
    %v6033 = vlaneseq
    %v6034 = vshrl.u32 %v6033, 7
    %v6035 = vsub.s32 1, %v6034
    %v6036 = vrot.slane %v6027, %v6035
    %v6037 = vlaneseq
    %v6038 = vshrl.u32 %v6037, 7
    %v6039 = vsub.s32 2, %v6038
    %v6040 = vrot.slane %v6027, %v6039
    %v6041 = vlaneseq
    %v6042 = vshrl.u32 %v6041, 7
    %v6043 = vsub.s32 3, %v6042
    %v6044 = vrot.slane %v6027, %v6043
    %v6049 = vadd.f32 %v6023, %v6032
    %v6050 = vadd.f32 %v6024, %v6036
    %v6051 = vadd.f32 %v6025, %v6040
    %v6052 = vadd.f32 %v6026, %v6044
    %vm6053 = vcmp.gt.f32.partialorder %v6049, 0.0
    %vm6054 = vcmp.gt.f32.partialorder %v6050, 0.0
    %vm6055 = vcmp.gt.f32.partialorder %v6051, 0.0
    %vm6056 = vcmp.gt.f32.partialorder %v6052, 0.0
    %v6057 = vmul.f32 %v6049, 0.2
    %v6058 = vmul.f32 %v6050, 0.2
    %v6059 = vmul.f32 %v6051, 0.2
    %v6060 = vmul.f32 %v6052, 0.2
    %v6061 = vsel %vm6053, %v6049, %v6057
    %v6062 = vsel %vm6054, %v6050, %v6058
    %v6063 = vsel %vm6055, %v6051, %v6059
    %v6064 = vsel %vm6056, %v6052, %v6060
    %v6065 = vld [vmem:[%s9] sm:$0xf]
    %v6067 = vlaneseq
    %v6068 = vshrl.u32 %v6067, 7
    %v6069 = vsub.s32 0, %v6068
    %v6070 = vrot.slane %v6065, %v6069
    %v6071 = vlaneseq
    %v6072 = vshrl.u32 %v6071, 7
    %v6073 = vsub.s32 1, %v6072
    %v6074 = vrot.slane %v6065, %v6073
    %v6075 = vlaneseq
    %v6076 = vshrl.u32 %v6075, 7
    %v6077 = vsub.s32 2, %v6076
    %v6078 = vrot.slane %v6065, %v6077
    %v6079 = vlaneseq
    %v6080 = vshrl.u32 %v6079, 7
    %v6081 = vsub.s32 3, %v6080
    %v6082 = vrot.slane %v6065, %v6081
    %v6087 = vadd.f32 %v6061, %v6070
    %v6088 = vadd.f32 %v6062, %v6074
    %v6089 = vadd.f32 %v6063, %v6078
    %v6090 = vadd.f32 %v6064, %v6082
    %v6091 = vld [vmem:[%s10] sm:$0xf]
    %v6093 = vlaneseq
    %v6094 = vshrl.u32 %v6093, 7
    %v6095 = vsub.s32 0, %v6094
    %v6096 = vrot.slane %v6091, %v6095
    %v6097 = vlaneseq
    %v6098 = vshrl.u32 %v6097, 7
    %v6099 = vsub.s32 1, %v6098
    %v6100 = vrot.slane %v6091, %v6099
    %v6101 = vlaneseq
    %v6102 = vshrl.u32 %v6101, 7
    %v6103 = vsub.s32 2, %v6102
    %v6104 = vrot.slane %v6091, %v6103
    %v6105 = vlaneseq
    %v6106 = vshrl.u32 %v6105, 7
    %v6107 = vsub.s32 3, %v6106
    %v6108 = vrot.slane %v6091, %v6107
    %v6113 = vmul.f32 %v6087, %v6096
    %v6114 = vmul.f32 %v6088, %v6100
    %v6115 = vmul.f32 %v6089, %v6104
    %v6116 = vmul.f32 %v6090, %v6108
    %vm6117 = vcmask 1041408
    %v6118 = vsel %vm6117, %v6113, 0.0
    %v6119 = vsel %vm6117, %v6114, 0.0
    %v6120 = vadd.f32 %v6118, %v6119
    %v6121 = vsel %vm6117, %v6115, 0.0
    %v6122 = vadd.f32 %v6120, %v6121
    %v6123 = vsel %vm6117, %v6116, 0.0
    %v6124 = vadd.f32 %v6122, %v6123
    %6125 = vadd.xlane.f32.xlu0 %v6124
    %v6126 = vpop.xlane.xlu0 %6125
    %v6127 = vld [vmem:[#allocation2] sm:$0x1]
    %v6129 = vlaneseq
    %v6130 = vshrl.u32 %v6129, 7
    %v6131 = vsub.s32 0, %v6130
    %v6132 = vrot.slane %v6127, %v6131
    %v6134 = vadd.f32 %v6126, %v6132
    %v6135 = vmax.f32 %v6134, 0.0
    %v6136 = vsub.f32 %v6134, %v6135
    %v6137 = vmul.f32 %v6136, 1.442695
    %v6138 = vpow.pop %v6137
    %v6139 = vsub.f32 0.0, %v6135
    %v6140 = vmul.f32 %v6139, 1.442695
    %v6141 = vpow.pop %v6140
    %v6142 = vadd.f32 %v6138, %v6141
    %v6143 = vrcp.pop %v6142
    %v6144 = vmul.f32 %v6138, %v6143
    %6146 = vset.pattern.permute.xlu0 0
    %6147 = vperm.xlu0 %6146, %v6144
    %v6148 = vpop.permute.xlu0 %6147
    %6150 = vst [vmem:[%s12] sm:$0x3] %v6148
    // Predicated region
    $region54: #{dc_discriminator_forward.3} parent=1 // pred_check
      _
    $region55: #{dc_discriminator_forward.3} parent=1 // pred_check_branch
      %6152 = sbr.rel (0) target = $region57
    $region56: #{dc_discriminator_forward.3} parent=1 // pred_region
      _
    $region57: #{dc_discriminator_forward.3} parent=1 // pred_fallthru
      _
    // Predicated region
    $region58: #{dc_discriminator_forward.3} parent=1 // pred_check
      _
    $region59: #{dc_discriminator_forward.3} parent=1 // pred_check_branch
      %6154 = sbr.rel (0) target = $region61
    $region60: #{dc_discriminator_forward.3} parent=1 // pred_region
      _
    $region61: #{dc_discriminator_forward.3} parent=1 // pred_fallthru
      _
    %6155 = vsyncpa [#allocation4], 1

</llo_original>
